<compile_context>
chip_gen: v6e
topology: v6e:2x2x1
jax: 0.10.0
libtpu: 0.0.40
codegen_flags: <defaults>
</compile_context>

<pallas_src>
import math

import jax
import jax.numpy as jnp
from jax.experimental import pallas as pl
from jax.experimental.pallas import tpu as pltpu

# ---------------- config (small, TPU-tile friendly) ----------------
BATCH = 2
SEQ = 8
HIDDEN = 128
HEADS = 2
HEAD_DIM = HIDDEN // HEADS
INTERMEDIATE = 512
LAYERS = 2
VOCAB = 100
VOCAB_PAD = 128        # padded so the one-hot gather matmul is lane-dense
TYPE_VOCAB = 2
MAX_POS = 32
NUM_LABELS = 8
CLS_PAD = 128          # classifier output padded to a lane-dense 128 columns
LN_EPS = 1e-12

# TODO(synk): training-mode Dropout(0.3) (random mask + 1/(1-p) scale) not implemented;
#             eval-mode identity used (matches inference semantics).
# TODO(synk): HF BERT uses erf-GELU; tanh-approx GELU used here (~1e-3 numerics delta).
# TODO(synk): int8 weight quantization (v5e/v6e) / fp8 (v7x) not applied; weights stay
#             bf16 so one kernel lowers on all generations.


# ---------------- in-kernel helpers ----------------
def _gelu(x):
    c = math.sqrt(2.0 / math.pi)
    return 0.5 * x * (1.0 + jnp.tanh(c * (x + 0.044715 * x * x * x)))


def _layernorm(x, g, b):
    mu = jnp.mean(x, axis=-1, keepdims=True)
    xc = x - mu
    var = jnp.mean(xc * xc, axis=-1, keepdims=True)
    inv = jax.lax.rsqrt(var + LN_EPS)
    return (xc * inv) * g + b


def _mm(x_f32, w_bf16):
    """MXU matmul: bf16 operands, f32 accumulation."""
    return jnp.dot(x_f32.astype(jnp.bfloat16), w_bf16,
                   preferred_element_type=jnp.float32)


# ---------------- the fused forward kernel (grid over encoder layers) ----------------
def _bert_fused_kernel(
        ids_ref, tt_ref, mask_ref,                 # token ids / type ids / attn mask
        wemb_ref, temb_ref, pos_ref, misc_ref,     # embedding tables + packed vectors
        poolw_ref, clsw_ref,                       # pooler / classifier weights
        wqkv_ref, wo_ref, wi_ref, wf_ref, lvec_ref,  # per-layer weights (pipelined)
        out_ref,                                   # (B, CLS_PAD) logits (padded)
        h_ref, ctx_ref):                           # persistent VMEM scratch
    l = pl.program_id(0)
    scale = 1.0 / math.sqrt(HEAD_DIM)

    # additive attention mask, HF style: (1 - mask) * -10000, shape (B, 1, S)
    add_mask = ((1.0 - mask_ref[...].astype(jnp.float32)) * -10000.0)[:, None, :]

    # ---- step 0: embeddings (one-hot MXU gather) + embedding LayerNorm ----
    @pl.when(l == 0)
    def _():
        ids = ids_ref[...]                                            # (B*S, 1) int32
        iota = jax.lax.broadcasted_iota(jnp.int32, (BATCH * SEQ, VOCAB_PAD), 1)
        one_hot = jnp.where(ids == iota, 1.0, 0.0).astype(jnp.bfloat16)
        word = jnp.dot(one_hot, wemb_ref[...],
                       preferred_element_type=jnp.float32)            # (B*S, H)
        tt = tt_ref[...]                                              # (B*S, 1) int32
        te = temb_ref[...]                                            # (TYPE_VOCAB, H)
        type_part = jnp.where(tt == 0, te[0:1, :], te[1:2, :])        # (B*S, H)
        h0 = word + pos_ref[...] + type_part
        misc = misc_ref[...]                                          # (4, H)
        h_ref[...] = _layernorm(h0, misc[0:1, :], misc[1:2, :])

    # ---- encoder layer l ----
    x = h_ref[...]                                                    # (B*S, H) f32
    lvec = lvec_ref[...]                                              # (8, I) f32
    b_qkv = lvec[0:1, 0:3 * HIDDEN]
    b_o   = lvec[1:2, 0:HIDDEN]
    ln1_g = lvec[2:3, 0:HIDDEN]
    ln1_b = lvec[3:4, 0:HIDDEN]
    b_i   = lvec[4:5, 0:INTERMEDIATE]
    b_f   = lvec[5:6, 0:HIDDEN]
    ln2_g = lvec[6:7, 0:HIDDEN]
    ln2_b = lvec[7:8, 0:HIDDEN]

    # fused QKV projection: one MXU push with lane-dense N = 3*H = 384
    qkv = _mm(x, wqkv_ref[...]) + b_qkv                               # (B*S, 3H)

    # attention: batch dim handled by a single batched einsum per head; context is
    # written into a lane-dense (B*S, 128) VMEM scratch at static lane offsets.
    for hh in range(HEADS):
        c0, c1 = hh * HEAD_DIM, (hh + 1) * HEAD_DIM
        q_h = qkv[:, 0 * HIDDEN + c0:0 * HIDDEN + c1].reshape(
            BATCH, SEQ, HEAD_DIM).astype(jnp.bfloat16)
        k_h = qkv[:, 1 * HIDDEN + c0:1 * HIDDEN + c1].reshape(
            BATCH, SEQ, HEAD_DIM).astype(jnp.bfloat16)
        v_h = qkv[:, 2 * HIDDEN + c0:2 * HIDDEN + c1].reshape(
            BATCH, SEQ, HEAD_DIM).astype(jnp.bfloat16)

        s = jnp.einsum('bqd,bkd->bqk', q_h, k_h,
                       preferred_element_type=jnp.float32)            # (B, S, S)
        s = s * scale + add_mask
        s = s - jnp.max(s, axis=-1, keepdims=True)
        p = jnp.exp(s)
        p = p * pl.reciprocal(jnp.sum(p, axis=-1, keepdims=True), approx=True)
        ctx_h = jnp.einsum('bqk,bkd->bqd', p.astype(jnp.bfloat16), v_h,
                           preferred_element_type=jnp.float32)         # (B, S, dh)
        ctx_ref[:, c0:c1] = ctx_h.reshape(BATCH * SEQ, HEAD_DIM)

    # output projection + bias + residual + LayerNorm (fused epilogue)
    attn_out = _mm(ctx_ref[...], wo_ref[...]) + b_o
    h1 = _layernorm(attn_out + x, ln1_g, ln1_b)

    # FFN (GELU) + bias + residual + LayerNorm (fused epilogue)
    ffn = _gelu(_mm(h1, wi_ref[...]) + b_i)                           # (B*S, I)
    ffn_out = _mm(ffn, wf_ref[...]) + b_f
    h_ref[...] = _layernorm(ffn_out + h1, ln2_g, ln2_b)

    # ---- last step: pooler (tanh on [CLS]) + dropout(identity) + classifier ----
    @pl.when(l == pl.num_programs(0) - 1)
    def _():
        misc = misc_ref[...]
        cls = h_ref[pl.ds(0, BATCH, stride=SEQ), :]                   # strided CLS rows
        pooled = jnp.tanh(_mm(cls, poolw_ref[...]) + misc[2:3, :])    # (B, H)
        out_ref[...] = _mm(pooled, clsw_ref[...]) + misc[3:4, :]      # (B, 128)


# ---------------- parameter construction (deterministic) ----------------
def init_params(key):
    def nrm(k, shape):
        return 0.02 * jax.random.normal(k, shape, jnp.float32)

    keys = iter(jax.random.split(key, 64))
    wdt = jnp.bfloat16   # MXU-operand dtype: halves weight DMA bytes, bf16-native MXU

    word_emb = nrm(next(keys), (VOCAB, HIDDEN))
    word_emb_pad = jnp.zeros((VOCAB_PAD, HIDDEN), jnp.float32).at[:VOCAB].set(word_emb)
    pos_emb = nrm(next(keys), (MAX_POS, HIDDEN))
    type_emb = nrm(next(keys), (TYPE_VOCAB, HIDDEN))

    # misc_vec rows: emb_ln_gamma, emb_ln_beta, pooler_bias, classifier_bias (padded)
    misc_vec = jnp.stack([
        jnp.ones((HIDDEN,), jnp.float32),
        jnp.zeros((HIDDEN,), jnp.float32),
        jnp.zeros((HIDDEN,), jnp.float32),
        jnp.zeros((HIDDEN,), jnp.float32),
    ])

    wqkv, wo, wi, wf, lvec = [], [], [], [], []
    for _ in range(LAYERS):
        wq = nrm(next(keys), (HIDDEN, HIDDEN))
        wk = nrm(next(keys), (HIDDEN, HIDDEN))
        wv = nrm(next(keys), (HIDDEN, HIDDEN))
        wqkv.append(jnp.concatenate([wq, wk, wv], axis=1))             # (H, 3H)
        wo.append(nrm(next(keys), (HIDDEN, HIDDEN)))
        wi.append(nrm(next(keys), (HIDDEN, INTERMEDIATE)))
        wf.append(nrm(next(keys), (INTERMEDIATE, HIDDEN)))
        # packed per-layer vectors (rows): bqkv, bo, ln1_g, ln1_b, bi, bf, ln2_g, ln2_b
        v = jnp.zeros((8, INTERMEDIATE), jnp.float32)
        v = v.at[2, :HIDDEN].set(1.0)   # ln1 gamma
        v = v.at[6, :HIDDEN].set(1.0)   # ln2 gamma
        lvec.append(v)

    cls_w = jnp.zeros((HIDDEN, CLS_PAD), jnp.float32)
    cls_w = cls_w.at[:, :NUM_LABELS].set(nrm(next(keys), (HIDDEN, NUM_LABELS)))

    return {
        "word_emb_pad": word_emb_pad.astype(wdt),
        "type_emb": type_emb,
        "pos_slab": jnp.tile(pos_emb[:SEQ], (BATCH, 1)),               # (B*S, H) f32
        "misc_vec": misc_vec,
        "pool_w": nrm(next(keys), (HIDDEN, HIDDEN)).astype(wdt),
        "cls_w_pad": cls_w.astype(wdt),
        "wqkv": jnp.stack(wqkv).astype(wdt),
        "wo": jnp.stack(wo).astype(wdt),
        "wi": jnp.stack(wi).astype(wdt),
        "wf": jnp.stack(wf).astype(wdt),
        "layer_vec": jnp.stack(lvec),
    }


# ---------------- forward pass (BERTClass.forward) ----------------
def bert_class_forward(params, input_ids, attn_mask, token_type_ids):
    B, S = input_ids.shape

    # only metadata-level reshapes remain outside the kernel
    ids2d = input_ids.reshape(B * S, 1).astype(jnp.int32)
    tt2d = token_type_ids.reshape(B * S, 1).astype(jnp.int32)
    mask2d = attn_mask.astype(jnp.int32)

    def const_spec(shape):
        nd = len(shape)
        return pl.BlockSpec(shape, lambda l, _nd=nd: (0,) * _nd)

    def layer_spec(shape):
        return pl.BlockSpec((None,) + shape, lambda l: (l, 0, 0))

    logits_pad = pl.pallas_call(
        _bert_fused_kernel,
        out_shape=jax.ShapeDtypeStruct((B, CLS_PAD), jnp.float32),
        grid=(LAYERS,),
        in_specs=[
            const_spec((B * S, 1)),               # input ids
            const_spec((B * S, 1)),               # token type ids
            const_spec((B, S)),                   # attention mask (int)
            const_spec((VOCAB_PAD, HIDDEN)),      # word embeddings (padded, bf16)
            const_spec((TYPE_VOCAB, HIDDEN)),     # token-type embeddings
            const_spec((B * S, HIDDEN)),          # position-embedding slab
            const_spec((4, HIDDEN)),              # emb_ln_g/b, pool_b, cls_b
            const_spec((HIDDEN, HIDDEN)),         # pooler weight
            const_spec((HIDDEN, CLS_PAD)),        # classifier weight (padded)
            layer_spec((HIDDEN, 3 * HIDDEN)),     # wqkv   (pipelined per layer)
            layer_spec((HIDDEN, HIDDEN)),         # wo
            layer_spec((HIDDEN, INTERMEDIATE)),   # wi
            layer_spec((INTERMEDIATE, HIDDEN)),   # wf
            layer_spec((8, INTERMEDIATE)),        # packed per-layer biases / LN params
        ],
        out_specs=pl.BlockSpec((B, CLS_PAD), lambda l: (0, 0)),
        scratch_shapes=[pltpu.VMEM((B * S, HIDDEN), jnp.float32),   # hidden state carry
                        pltpu.VMEM((B * S, HIDDEN), jnp.float32)],  # attention context
        compiler_params=pltpu.CompilerParams(dimension_semantics=("arbitrary",)),
    )(ids2d, tt2d, mask2d,
      params["word_emb_pad"], params["type_emb"], params["pos_slab"],
      params["misc_vec"], params["pool_w"], params["cls_w_pad"],
      params["wqkv"], params["wo"], params["wi"], params["wf"],
      params["layer_vec"])

    return logits_pad[:, :NUM_LABELS]                                  # (B, num_labels)


if __name__ == "__main__":
    key = jax.random.PRNGKey(0)
    pkey, ikey = jax.random.split(key)
    params = init_params(pkey)

    input_ids = jax.random.randint(ikey, (BATCH, SEQ), 0, VOCAB, dtype=jnp.int32)
    token_type_ids = jnp.zeros((BATCH, SEQ), jnp.int32).at[:, SEQ // 2:].set(1)
    attn_mask = jnp.ones((BATCH, SEQ), jnp.int32).at[1, SEQ - 2:].set(0)  # pad tail of batch 1

    fwd = jax.jit(bert_class_forward)
    logits = fwd(params, input_ids, attn_mask, token_type_ids)
    logits = jax.block_until_ready(logits)
    assert logits.shape == (BATCH, NUM_LABELS)
    assert bool(jnp.all(jnp.isfinite(logits)))
    print("KERNEL_OK")
</pallas_src>

<mosaic_0001>
module attributes {stable_mosaic.version = 11 : i64} {
  func.func @_bert_fused_kernel(%arg0: i32, %arg1: memref<16x1xi32, #tpu.memory_space<vmem>>, %arg2: memref<16x1xi32, #tpu.memory_space<vmem>>, %arg3: memref<2x8xi32, #tpu.memory_space<vmem>>, %arg4: memref<128x128xbf16, #tpu.memory_space<vmem>>, %arg5: memref<2x128xf32, #tpu.memory_space<vmem>>, %arg6: memref<16x128xf32, #tpu.memory_space<vmem>>, %arg7: memref<4x128xf32, #tpu.memory_space<vmem>>, %arg8: memref<128x128xbf16, #tpu.memory_space<vmem>>, %arg9: memref<128x128xbf16, #tpu.memory_space<vmem>>, %arg10: memref<1x128x384xbf16, #tpu.memory_space<vmem>>, %arg11: memref<1x128x128xbf16, #tpu.memory_space<vmem>>, %arg12: memref<1x128x512xbf16, #tpu.memory_space<vmem>>, %arg13: memref<1x512x128xbf16, #tpu.memory_space<vmem>>, %arg14: memref<1x8x512xf32, #tpu.memory_space<vmem>>, %arg15: memref<2x128xf32, #tpu.memory_space<vmem>>, %arg16: memref<16x128xf32, #tpu.memory_space<vmem>>, %arg17: memref<16x128xf32, #tpu.memory_space<vmem>>) attributes {dimension_semantics = [#tpu.dimension_semantics<arbitrary>], iteration_bounds = array<i64: 2>, scalar_prefetch = 0 : i64, scratch_operands = 2 : i64, tpu.core_type = #tpu.core_type<tc>, window_params = [{pipeline_mode = #tpu.pipeline_mode<synchronous>, transform_indices = @transform_0, window_bounds = array<i64: 16, 1>}, {pipeline_mode = #tpu.pipeline_mode<synchronous>, transform_indices = @transform_1, window_bounds = array<i64: 16, 1>}, {pipeline_mode = #tpu.pipeline_mode<synchronous>, transform_indices = @transform_2, window_bounds = array<i64: 2, 8>}, {pipeline_mode = #tpu.pipeline_mode<synchronous>, transform_indices = @transform_3, window_bounds = array<i64: 128, 128>}, {pipeline_mode = #tpu.pipeline_mode<synchronous>, transform_indices = @transform_4, window_bounds = array<i64: 2, 128>}, {pipeline_mode = #tpu.pipeline_mode<synchronous>, transform_indices = @transform_5, window_bounds = array<i64: 16, 128>}, {pipeline_mode = #tpu.pipeline_mode<synchronous>, transform_indices = @transform_6, window_bounds = array<i64: 4, 128>}, {pipeline_mode = #tpu.pipeline_mode<synchronous>, transform_indices = @transform_7, window_bounds = array<i64: 128, 128>}, {pipeline_mode = #tpu.pipeline_mode<synchronous>, transform_indices = @transform_8, window_bounds = array<i64: 128, 128>}, {transform_indices = @transform_9, window_bounds = array<i64: 1, 128, 384>}, {transform_indices = @transform_10, window_bounds = array<i64: 1, 128, 128>}, {transform_indices = @transform_11, window_bounds = array<i64: 1, 128, 512>}, {transform_indices = @transform_12, window_bounds = array<i64: 1, 512, 128>}, {transform_indices = @transform_13, window_bounds = array<i64: 1, 8, 512>}, {pipeline_mode = #tpu.pipeline_mode<synchronous>, transform_indices = @transform_14, window_bounds = array<i64: 2, 128>}]} {
    %c0 = arith.constant 0 : index
    %c0_0 = arith.constant 0 : index
    %0 = vector.load %arg3[%c0, %c0_0] : memref<2x8xi32, #tpu.memory_space<vmem>>, vector<2x8xi32>
    %1 = arith.sitofp %0 : vector<2x8xi32> to vector<2x8xf32>
    %cst = arith.constant 1.000000e+00 : f32
    %2 = vector.broadcast %cst : f32 to vector<2x8xf32>
    %3 = arith.subf %2, %1 : vector<2x8xf32>
    %cst_1 = arith.constant -1.000000e+04 : f32
    %4 = vector.broadcast %cst_1 : f32 to vector<2x8xf32>
    %5 = arith.mulf %3, %4 : vector<2x8xf32>
    %6 = vector.shape_cast %5 : vector<2x8xf32> to vector<2x1x8xf32>
    %c0_i32 = arith.constant 0 : i32
    %7 = arith.cmpi eq, %arg0, %c0_i32 : i32
    %8 = arith.extui %7 : i1 to i32
    %c0_i32_2 = arith.constant 0 : i32
    %9 = arith.cmpi ne, %8, %c0_i32_2 : i32
    scf.if %9 {
      %c0_56 = arith.constant 0 : index
      %c0_57 = arith.constant 0 : index
      %161 = vector.load %arg1[%c0_56, %c0_57] : memref<16x1xi32, #tpu.memory_space<vmem>>, vector<16x1xi32>
      %162 = tpu.iota {dimensions = array<i32: 1>} : vector<16x128xi32>
      %163 = vector.broadcast %161 : vector<16x1xi32> to vector<16x128xi32>
      %164 = arith.cmpi eq, %163, %162 : vector<16x128xi32>
      %cst_58 = arith.constant 1.000000e+00 : f32
      %cst_59 = arith.constant 0.000000e+00 : f32
      %165 = vector.broadcast %cst_58 : f32 to vector<16x128xf32>
      %166 = vector.broadcast %cst_59 : f32 to vector<16x128xf32>
      %167 = arith.select %164, %165, %166 : vector<16x128xi1>, vector<16x128xf32>
      %168 = arith.truncf %167 : vector<16x128xf32> to vector<16x128xbf16>
      %c0_60 = arith.constant 0 : index
      %c0_61 = arith.constant 0 : index
      %169 = vector.load %arg4[%c0_60, %c0_61] : memref<128x128xbf16, #tpu.memory_space<vmem>>, vector<128x128xbf16>
      %cst_62 = arith.constant dense<0.000000e+00> : vector<16x128xf32>
      %170 = tpu.matmul %168, %169, %cst_62 {dimension_numbers = #tpu.dot_dimension_numbers<[1], [0], [0], [1], [0, 0, 1, 1], [], []>} : vector<16x128xbf16>, vector<128x128xbf16>, vector<16x128xf32> -> vector<16x128xf32>
      %c0_63 = arith.constant 0 : index
      %c0_64 = arith.constant 0 : index
      %171 = vector.load %arg2[%c0_63, %c0_64] : memref<16x1xi32, #tpu.memory_space<vmem>>, vector<16x1xi32>
      %c0_65 = arith.constant 0 : index
      %c0_66 = arith.constant 0 : index
      %172 = vector.load %arg5[%c0_65, %c0_66] : memref<2x128xf32, #tpu.memory_space<vmem>>, vector<2x128xf32>
      %c0_i32_67 = arith.constant 0 : i32
      %173 = vector.broadcast %c0_i32_67 : i32 to vector<16x1xi32>
      %174 = arith.cmpi eq, %171, %173 : vector<16x1xi32>
      %175 = vector.extract_strided_slice %172 {offsets = [0, 0], sizes = [1, 128], strides = [1, 1]} : vector<2x128xf32> to vector<1x128xf32>
      %176 = vector.extract_strided_slice %172 {offsets = [1, 0], sizes = [1, 128], strides = [1, 1]} : vector<2x128xf32> to vector<1x128xf32>
      %177 = vector.shape_cast %174 : vector<16x1xi1> to vector<16x1xi1>
      %178 = vector.broadcast %177 : vector<16x1xi1> to vector<16x128xi1>
      %179 = vector.shape_cast %175 : vector<1x128xf32> to vector<1x128xf32>
      %180 = vector.broadcast %179 : vector<1x128xf32> to vector<16x128xf32>
      %181 = vector.shape_cast %176 : vector<1x128xf32> to vector<1x128xf32>
      %182 = vector.broadcast %181 : vector<1x128xf32> to vector<16x128xf32>
      %183 = arith.select %178, %180, %182 : vector<16x128xi1>, vector<16x128xf32>
      %c0_68 = arith.constant 0 : index
      %c0_69 = arith.constant 0 : index
      %184 = vector.load %arg6[%c0_68, %c0_69] : memref<16x128xf32, #tpu.memory_space<vmem>>, vector<16x128xf32>
      %185 = arith.addf %170, %184 : vector<16x128xf32>
      %186 = arith.addf %185, %183 : vector<16x128xf32>
      %c0_70 = arith.constant 0 : index
      %c0_71 = arith.constant 0 : index
      %187 = vector.load %arg7[%c0_70, %c0_71] : memref<4x128xf32, #tpu.memory_space<vmem>>, vector<4x128xf32>
      %188 = vector.extract_strided_slice %187 {offsets = [0, 0], sizes = [1, 128], strides = [1, 1]} : vector<4x128xf32> to vector<1x128xf32>
      %189 = vector.extract_strided_slice %187 {offsets = [1, 0], sizes = [1, 128], strides = [1, 1]} : vector<4x128xf32> to vector<1x128xf32>
      %cst_72 = arith.constant dense<0.000000e+00> : vector<16xf32>
      %190 = vector.multi_reduction <add>, %186, %cst_72 [1] : vector<16x128xf32> to vector<16xf32>
      %191 = vector.shape_cast %190 : vector<16xf32> to vector<16x1xf32>
      %cst_73 = arith.constant 1.280000e+02 : f32
      %192 = vector.broadcast %cst_73 : f32 to vector<16x1xf32>
      %193 = arith.divf %191, %192 : vector<16x1xf32>
      %194 = vector.broadcast %193 : vector<16x1xf32> to vector<16x128xf32>
      %195 = arith.subf %186, %194 : vector<16x128xf32>
      %196 = arith.mulf %195, %195 : vector<16x128xf32>
      %cst_74 = arith.constant dense<0.000000e+00> : vector<16xf32>
      %197 = vector.multi_reduction <add>, %196, %cst_74 [1] : vector<16x128xf32> to vector<16xf32>
      %198 = vector.shape_cast %197 : vector<16xf32> to vector<16x1xf32>
      %cst_75 = arith.constant 1.280000e+02 : f32
      %199 = vector.broadcast %cst_75 : f32 to vector<16x1xf32>
      %200 = arith.divf %198, %199 : vector<16x1xf32>
      %cst_76 = arith.constant 9.99999996E-13 : f32
      %201 = vector.broadcast %cst_76 : f32 to vector<16x1xf32>
      %202 = arith.addf %200, %201 : vector<16x1xf32>
      %203 = math.rsqrt %202 : vector<16x1xf32>
      %204 = vector.broadcast %203 : vector<16x1xf32> to vector<16x128xf32>
      %205 = arith.mulf %195, %204 : vector<16x128xf32>
      %206 = vector.broadcast %188 : vector<1x128xf32> to vector<16x128xf32>
      %207 = arith.mulf %205, %206 : vector<16x128xf32>
      %208 = vector.broadcast %189 : vector<1x128xf32> to vector<16x128xf32>
      %209 = arith.addf %207, %208 : vector<16x128xf32>
      %c0_77 = arith.constant 0 : index
      %c0_78 = arith.constant 0 : index
      %210 = vector.load %arg16[%c0_77, %c0_78] : memref<16x128xf32, #tpu.memory_space<vmem>>, vector<16x128xf32>
      tpu.vector_store %arg16[%c0_77, %c0_78], %209 {strides = array<i32>} : memref<16x128xf32, #tpu.memory_space<vmem>>, vector<16x128xf32>,
    } else {
    }
    %c0_3 = arith.constant 0 : index
    %c0_4 = arith.constant 0 : index
    %10 = vector.load %arg16[%c0_3, %c0_4] : memref<16x128xf32, #tpu.memory_space<vmem>>, vector<16x128xf32>
    %c0_5 = arith.constant 0 : index
    %c0_6 = arith.constant 0 : index
    %c0_7 = arith.constant 0 : index
    %11 = vector.load %arg14[%c0_5, %c0_6, %c0_7] : memref<1x8x512xf32, #tpu.memory_space<vmem>>, vector<1x8x512xf32>
    %12 = vector.shape_cast %11 : vector<1x8x512xf32> to vector<8x512xf32>
    %13 = vector.extract_strided_slice %12 {offsets = [0, 0], sizes = [1, 384], strides = [1, 1]} : vector<8x512xf32> to vector<1x384xf32>
    %14 = vector.extract_strided_slice %12 {offsets = [1, 0], sizes = [1, 128], strides = [1, 1]} : vector<8x512xf32> to vector<1x128xf32>
    %15 = vector.extract_strided_slice %12 {offsets = [2, 0], sizes = [1, 128], strides = [1, 1]} : vector<8x512xf32> to vector<1x128xf32>
    %16 = vector.extract_strided_slice %12 {offsets = [3, 0], sizes = [1, 128], strides = [1, 1]} : vector<8x512xf32> to vector<1x128xf32>
    %17 = vector.extract_strided_slice %12 {offsets = [4, 0], sizes = [1, 512], strides = [1, 1]} : vector<8x512xf32> to vector<1x512xf32>
    %18 = vector.extract_strided_slice %12 {offsets = [5, 0], sizes = [1, 128], strides = [1, 1]} : vector<8x512xf32> to vector<1x128xf32>
    %19 = vector.extract_strided_slice %12 {offsets = [6, 0], sizes = [1, 128], strides = [1, 1]} : vector<8x512xf32> to vector<1x128xf32>
    %20 = vector.extract_strided_slice %12 {offsets = [7, 0], sizes = [1, 128], strides = [1, 1]} : vector<8x512xf32> to vector<1x128xf32>
    %c0_8 = arith.constant 0 : index
    %c0_9 = arith.constant 0 : index
    %c0_10 = arith.constant 0 : index
    %21 = vector.load %arg10[%c0_8, %c0_9, %c0_10] : memref<1x128x384xbf16, #tpu.memory_space<vmem>>, vector<1x128x384xbf16>
    %22 = vector.shape_cast %21 : vector<1x128x384xbf16> to vector<128x384xbf16>
    %23 = arith.truncf %10 : vector<16x128xf32> to vector<16x128xbf16>
    %cst_11 = arith.constant dense<0.000000e+00> : vector<16x384xf32>
    %24 = tpu.matmul %23, %22, %cst_11 {dimension_numbers = #tpu.dot_dimension_numbers<[1], [0], [0], [1], [0, 0, 1, 1], [], []>} : vector<16x128xbf16>, vector<128x384xbf16>, vector<16x384xf32> -> vector<16x384xf32>
    %25 = vector.broadcast %13 : vector<1x384xf32> to vector<16x384xf32>
    %26 = arith.addf %24, %25 : vector<16x384xf32>
    %27 = vector.extract_strided_slice %26 {offsets = [0, 0], sizes = [16, 64], strides = [1, 1]} : vector<16x384xf32> to vector<16x64xf32>
    %28 = vector.shape_cast %27 : vector<16x64xf32> to vector<2x8x64xf32>
    %29 = arith.truncf %28 : vector<2x8x64xf32> to vector<2x8x64xbf16>
    %30 = vector.extract_strided_slice %26 {offsets = [0, 128], sizes = [16, 64], strides = [1, 1]} : vector<16x384xf32> to vector<16x64xf32>
    %31 = vector.shape_cast %30 : vector<16x64xf32> to vector<2x8x64xf32>
    %32 = arith.truncf %31 : vector<2x8x64xf32> to vector<2x8x64xbf16>
    %33 = vector.extract_strided_slice %26 {offsets = [0, 256], sizes = [16, 64], strides = [1, 1]} : vector<16x384xf32> to vector<16x64xf32>
    %34 = vector.shape_cast %33 : vector<16x64xf32> to vector<2x8x64xf32>
    %35 = arith.truncf %34 : vector<2x8x64xf32> to vector<2x8x64xbf16>
    "tpu.trace_start"() <{level = 10 : i32, message = "bqd,bkd->bqk"}> : () -> ()
    %cst_12 = arith.constant dense<0.000000e+00> : vector<2x8x8xf32>
    %36 = tpu.matmul %29, %32, %cst_12 {dimension_numbers = #tpu.dot_dimension_numbers<[2], [2], [1], [1], [0, 0, 0, 1, 1, 1], [0], [0]>} : vector<2x8x64xbf16>, vector<2x8x64xbf16>, vector<2x8x8xf32> -> vector<2x8x8xf32>
    "tpu.trace_stop"() : () -> ()
    %cst_13 = arith.constant 1.250000e-01 : f32
    %37 = vector.broadcast %cst_13 : f32 to vector<2x8x8xf32>
    %38 = arith.mulf %36, %37 : vector<2x8x8xf32>
    %39 = vector.broadcast %6 : vector<2x1x8xf32> to vector<2x8x8xf32>
    %40 = arith.addf %38, %39 : vector<2x8x8xf32>
    %cst_14 = arith.constant dense<0xFF800000> : vector<2x8xf32>
    %41 = vector.multi_reduction <maximumf>, %40, %cst_14 [2] : vector<2x8x8xf32> to vector<2x8xf32>
    %42 = vector.shape_cast %41 : vector<2x8xf32> to vector<2x8x1xf32>
    %43 = vector.broadcast %42 : vector<2x8x1xf32> to vector<2x8x8xf32>
    %44 = arith.subf %40, %43 : vector<2x8x8xf32>
    %45 = math.exp %44 : vector<2x8x8xf32>
    %cst_15 = arith.constant dense<0.000000e+00> : vector<2x8xf32>
    %46 = vector.multi_reduction <add>, %45, %cst_15 [2] : vector<2x8x8xf32> to vector<2x8xf32>
    %47 = vector.shape_cast %46 : vector<2x8xf32> to vector<2x8x1xf32>
    %48 = tpu.reciprocal %47 {approx = true} : vector<2x8x1xf32> -> vector<2x8x1xf32>
    %49 = vector.broadcast %48 : vector<2x8x1xf32> to vector<2x8x8xf32>
    %50 = arith.mulf %45, %49 : vector<2x8x8xf32>
    %51 = arith.truncf %50 : vector<2x8x8xf32> to vector<2x8x8xbf16>
    "tpu.trace_start"() <{level = 10 : i32, message = "bqk,bkd->bqd"}> : () -> ()
    %cst_16 = arith.constant dense<0.000000e+00> : vector<2x8x64xf32>
    %52 = tpu.matmul %51, %35, %cst_16 {dimension_numbers = #tpu.dot_dimension_numbers<[2], [1], [1], [2], [0, 0, 0, 1, 1, 2], [0], [0]>} : vector<2x8x8xbf16>, vector<2x8x64xbf16>, vector<2x8x64xf32> -> vector<2x8x64xf32>
    "tpu.trace_stop"() : () -> ()
    %53 = vector.shape_cast %52 : vector<2x8x64xf32> to vector<16x64xf32>
    %c0_17 = arith.constant 0 : index
    %c0_18 = arith.constant 0 : index
    %54 = vector.load %arg17[%c0_17, %c0_18] : memref<16x128xf32, #tpu.memory_space<vmem>>, vector<16x64xf32>
    tpu.vector_store %arg17[%c0_17, %c0_18], %53 {strides = array<i32>} : memref<16x128xf32, #tpu.memory_space<vmem>>, vector<16x64xf32>,
    %55 = vector.extract_strided_slice %26 {offsets = [0, 64], sizes = [16, 64], strides = [1, 1]} : vector<16x384xf32> to vector<16x64xf32>
    %56 = vector.shape_cast %55 : vector<16x64xf32> to vector<2x8x64xf32>
    %57 = arith.truncf %56 : vector<2x8x64xf32> to vector<2x8x64xbf16>
    %58 = vector.extract_strided_slice %26 {offsets = [0, 192], sizes = [16, 64], strides = [1, 1]} : vector<16x384xf32> to vector<16x64xf32>
    %59 = vector.shape_cast %58 : vector<16x64xf32> to vector<2x8x64xf32>
    %60 = arith.truncf %59 : vector<2x8x64xf32> to vector<2x8x64xbf16>
    %61 = vector.extract_strided_slice %26 {offsets = [0, 320], sizes = [16, 64], strides = [1, 1]} : vector<16x384xf32> to vector<16x64xf32>
    %62 = vector.shape_cast %61 : vector<16x64xf32> to vector<2x8x64xf32>
    %63 = arith.truncf %62 : vector<2x8x64xf32> to vector<2x8x64xbf16>
    "tpu.trace_start"() <{level = 10 : i32, message = "bqd,bkd->bqk"}> : () -> ()
    %cst_19 = arith.constant dense<0.000000e+00> : vector<2x8x8xf32>
    %64 = tpu.matmul %57, %60, %cst_19 {dimension_numbers = #tpu.dot_dimension_numbers<[2], [2], [1], [1], [0, 0, 0, 1, 1, 1], [0], [0]>} : vector<2x8x64xbf16>, vector<2x8x64xbf16>, vector<2x8x8xf32> -> vector<2x8x8xf32>
    "tpu.trace_stop"() : () -> ()
    %cst_20 = arith.constant 1.250000e-01 : f32
    %65 = vector.broadcast %cst_20 : f32 to vector<2x8x8xf32>
    %66 = arith.mulf %64, %65 : vector<2x8x8xf32>
    %67 = vector.broadcast %6 : vector<2x1x8xf32> to vector<2x8x8xf32>
    %68 = arith.addf %66, %67 : vector<2x8x8xf32>
    %cst_21 = arith.constant dense<0xFF800000> : vector<2x8xf32>
    %69 = vector.multi_reduction <maximumf>, %68, %cst_21 [2] : vector<2x8x8xf32> to vector<2x8xf32>
    %70 = vector.shape_cast %69 : vector<2x8xf32> to vector<2x8x1xf32>
    %71 = vector.broadcast %70 : vector<2x8x1xf32> to vector<2x8x8xf32>
    %72 = arith.subf %68, %71 : vector<2x8x8xf32>
    %73 = math.exp %72 : vector<2x8x8xf32>
    %cst_22 = arith.constant dense<0.000000e+00> : vector<2x8xf32>
    %74 = vector.multi_reduction <add>, %73, %cst_22 [2] : vector<2x8x8xf32> to vector<2x8xf32>
    %75 = vector.shape_cast %74 : vector<2x8xf32> to vector<2x8x1xf32>
    %76 = tpu.reciprocal %75 {approx = true} : vector<2x8x1xf32> -> vector<2x8x1xf32>
    %77 = vector.broadcast %76 : vector<2x8x1xf32> to vector<2x8x8xf32>
    %78 = arith.mulf %73, %77 : vector<2x8x8xf32>
    %79 = arith.truncf %78 : vector<2x8x8xf32> to vector<2x8x8xbf16>
    "tpu.trace_start"() <{level = 10 : i32, message = "bqk,bkd->bqd"}> : () -> ()
    %cst_23 = arith.constant dense<0.000000e+00> : vector<2x8x64xf32>
    %80 = tpu.matmul %79, %63, %cst_23 {dimension_numbers = #tpu.dot_dimension_numbers<[2], [1], [1], [2], [0, 0, 0, 1, 1, 2], [0], [0]>} : vector<2x8x8xbf16>, vector<2x8x64xbf16>, vector<2x8x64xf32> -> vector<2x8x64xf32>
    "tpu.trace_stop"() : () -> ()
    %81 = vector.shape_cast %80 : vector<2x8x64xf32> to vector<16x64xf32>
    %c0_24 = arith.constant 0 : index
    %c64 = arith.constant 64 : index
    %82 = vector.load %arg17[%c0_24, %c64] : memref<16x128xf32, #tpu.memory_space<vmem>>, vector<16x64xf32>
    tpu.vector_store %arg17[%c0_24, %c64], %81 {strides = array<i32>} : memref<16x128xf32, #tpu.memory_space<vmem>>, vector<16x64xf32>,
    %c0_25 = arith.constant 0 : index
    %c0_26 = arith.constant 0 : index
    %83 = vector.load %arg17[%c0_25, %c0_26] : memref<16x128xf32, #tpu.memory_space<vmem>>, vector<16x128xf32>
    %c0_27 = arith.constant 0 : index
    %c0_28 = arith.constant 0 : index
    %c0_29 = arith.constant 0 : index
    %84 = vector.load %arg11[%c0_27, %c0_28, %c0_29] : memref<1x128x128xbf16, #tpu.memory_space<vmem>>, vector<1x128x128xbf16>
    %85 = vector.shape_cast %84 : vector<1x128x128xbf16> to vector<128x128xbf16>
    %86 = arith.truncf %83 : vector<16x128xf32> to vector<16x128xbf16>
    %cst_30 = arith.constant dense<0.000000e+00> : vector<16x128xf32>
    %87 = tpu.matmul %86, %85, %cst_30 {dimension_numbers = #tpu.dot_dimension_numbers<[1], [0], [0], [1], [0, 0, 1, 1], [], []>} : vector<16x128xbf16>, vector<128x128xbf16>, vector<16x128xf32> -> vector<16x128xf32>
    %88 = vector.broadcast %14 : vector<1x128xf32> to vector<16x128xf32>
    %89 = arith.addf %87, %88 : vector<16x128xf32>
    %90 = arith.addf %89, %10 : vector<16x128xf32>
    %cst_31 = arith.constant dense<0.000000e+00> : vector<16xf32>
    %91 = vector.multi_reduction <add>, %90, %cst_31 [1] : vector<16x128xf32> to vector<16xf32>
    %92 = vector.shape_cast %91 : vector<16xf32> to vector<16x1xf32>
    %cst_32 = arith.constant 1.280000e+02 : f32
    %93 = vector.broadcast %cst_32 : f32 to vector<16x1xf32>
    %94 = arith.divf %92, %93 : vector<16x1xf32>
    %95 = vector.broadcast %94 : vector<16x1xf32> to vector<16x128xf32>
    %96 = arith.subf %90, %95 : vector<16x128xf32>
    %97 = arith.mulf %96, %96 : vector<16x128xf32>
    %cst_33 = arith.constant dense<0.000000e+00> : vector<16xf32>
    %98 = vector.multi_reduction <add>, %97, %cst_33 [1] : vector<16x128xf32> to vector<16xf32>
    %99 = vector.shape_cast %98 : vector<16xf32> to vector<16x1xf32>
    %cst_34 = arith.constant 1.280000e+02 : f32
    %100 = vector.broadcast %cst_34 : f32 to vector<16x1xf32>
    %101 = arith.divf %99, %100 : vector<16x1xf32>
    %cst_35 = arith.constant 9.99999996E-13 : f32
    %102 = vector.broadcast %cst_35 : f32 to vector<16x1xf32>
    %103 = arith.addf %101, %102 : vector<16x1xf32>
    %104 = math.rsqrt %103 : vector<16x1xf32>
    %105 = vector.broadcast %104 : vector<16x1xf32> to vector<16x128xf32>
    %106 = arith.mulf %96, %105 : vector<16x128xf32>
    %107 = vector.broadcast %15 : vector<1x128xf32> to vector<16x128xf32>
    %108 = arith.mulf %106, %107 : vector<16x128xf32>
    %109 = vector.broadcast %16 : vector<1x128xf32> to vector<16x128xf32>
    %110 = arith.addf %108, %109 : vector<16x128xf32>
    %c0_36 = arith.constant 0 : index
    %c0_37 = arith.constant 0 : index
    %c0_38 = arith.constant 0 : index
    %111 = vector.load %arg12[%c0_36, %c0_37, %c0_38] : memref<1x128x512xbf16, #tpu.memory_space<vmem>>, vector<1x128x512xbf16>
    %112 = vector.shape_cast %111 : vector<1x128x512xbf16> to vector<128x512xbf16>
    %113 = arith.truncf %110 : vector<16x128xf32> to vector<16x128xbf16>
    %cst_39 = arith.constant dense<0.000000e+00> : vector<16x512xf32>
    %114 = tpu.matmul %113, %112, %cst_39 {dimension_numbers = #tpu.dot_dimension_numbers<[1], [0], [0], [1], [0, 0, 1, 1], [], []>} : vector<16x128xbf16>, vector<128x512xbf16>, vector<16x512xf32> -> vector<16x512xf32>
    %115 = vector.broadcast %17 : vector<1x512xf32> to vector<16x512xf32>
    %116 = arith.addf %114, %115 : vector<16x512xf32>
    %cst_40 = arith.constant 5.000000e-01 : f32
    %117 = vector.broadcast %cst_40 : f32 to vector<16x512xf32>
    %118 = arith.mulf %117, %116 : vector<16x512xf32>
    %cst_41 = arith.constant 4.471500e-02 : f32
    %119 = vector.broadcast %cst_41 : f32 to vector<16x512xf32>
    %120 = arith.mulf %119, %116 : vector<16x512xf32>
    %121 = arith.mulf %120, %116 : vector<16x512xf32>
    %122 = arith.mulf %121, %116 : vector<16x512xf32>
    %123 = arith.addf %116, %122 : vector<16x512xf32>
    %cst_42 = arith.constant 0.797884583 : f32
    %124 = vector.broadcast %cst_42 : f32 to vector<16x512xf32>
    %125 = arith.mulf %124, %123 : vector<16x512xf32>
    %126 = math.tanh %125 : vector<16x512xf32>
    %cst_43 = arith.constant 1.000000e+00 : f32
    %127 = vector.broadcast %cst_43 : f32 to vector<16x512xf32>
    %128 = arith.addf %127, %126 : vector<16x512xf32>
    %129 = arith.mulf %118, %128 : vector<16x512xf32>
    %c0_44 = arith.constant 0 : index
    %c0_45 = arith.constant 0 : index
    %c0_46 = arith.constant 0 : index
    %130 = vector.load %arg13[%c0_44, %c0_45, %c0_46] : memref<1x512x128xbf16, #tpu.memory_space<vmem>>, vector<1x512x128xbf16>
    %131 = vector.shape_cast %130 : vector<1x512x128xbf16> to vector<512x128xbf16>
    %132 = arith.truncf %129 : vector<16x512xf32> to vector<16x512xbf16>
    %cst_47 = arith.constant dense<0.000000e+00> : vector<16x128xf32>
    %133 = tpu.matmul %132, %131, %cst_47 {dimension_numbers = #tpu.dot_dimension_numbers<[1], [0], [0], [1], [0, 0, 1, 1], [], []>} : vector<16x512xbf16>, vector<512x128xbf16>, vector<16x128xf32> -> vector<16x128xf32>
    %134 = vector.broadcast %18 : vector<1x128xf32> to vector<16x128xf32>
    %135 = arith.addf %133, %134 : vector<16x128xf32>
    %136 = arith.addf %135, %110 : vector<16x128xf32>
    %cst_48 = arith.constant dense<0.000000e+00> : vector<16xf32>
    %137 = vector.multi_reduction <add>, %136, %cst_48 [1] : vector<16x128xf32> to vector<16xf32>
    %138 = vector.shape_cast %137 : vector<16xf32> to vector<16x1xf32>
    %cst_49 = arith.constant 1.280000e+02 : f32
    %139 = vector.broadcast %cst_49 : f32 to vector<16x1xf32>
    %140 = arith.divf %138, %139 : vector<16x1xf32>
    %141 = vector.broadcast %140 : vector<16x1xf32> to vector<16x128xf32>
    %142 = arith.subf %136, %141 : vector<16x128xf32>
    %143 = arith.mulf %142, %142 : vector<16x128xf32>
    %cst_50 = arith.constant dense<0.000000e+00> : vector<16xf32>
    %144 = vector.multi_reduction <add>, %143, %cst_50 [1] : vector<16x128xf32> to vector<16xf32>
    %145 = vector.shape_cast %144 : vector<16xf32> to vector<16x1xf32>
    %cst_51 = arith.constant 1.280000e+02 : f32
    %146 = vector.broadcast %cst_51 : f32 to vector<16x1xf32>
    %147 = arith.divf %145, %146 : vector<16x1xf32>
    %cst_52 = arith.constant 9.99999996E-13 : f32
    %148 = vector.broadcast %cst_52 : f32 to vector<16x1xf32>
    %149 = arith.addf %147, %148 : vector<16x1xf32>
    %150 = math.rsqrt %149 : vector<16x1xf32>
    %151 = vector.broadcast %150 : vector<16x1xf32> to vector<16x128xf32>
    %152 = arith.mulf %142, %151 : vector<16x128xf32>
    %153 = vector.broadcast %19 : vector<1x128xf32> to vector<16x128xf32>
    %154 = arith.mulf %152, %153 : vector<16x128xf32>
    %155 = vector.broadcast %20 : vector<1x128xf32> to vector<16x128xf32>
    %156 = arith.addf %154, %155 : vector<16x128xf32>
    %c0_53 = arith.constant 0 : index
    %c0_54 = arith.constant 0 : index
    %157 = vector.load %arg16[%c0_53, %c0_54] : memref<16x128xf32, #tpu.memory_space<vmem>>, vector<16x128xf32>
    tpu.vector_store %arg16[%c0_53, %c0_54], %156 {strides = array<i32>} : memref<16x128xf32, #tpu.memory_space<vmem>>, vector<16x128xf32>,
    %c1_i32 = arith.constant 1 : i32
    %158 = arith.cmpi eq, %arg0, %c1_i32 : i32
    %159 = arith.extui %158 : i1 to i32
    %c0_i32_55 = arith.constant 0 : i32
    %160 = arith.cmpi ne, %159, %c0_i32_55 : i32
    scf.if %160 {
      %c0_56 = arith.constant 0 : index
      %c0_57 = arith.constant 0 : index
      %161 = vector.load %arg7[%c0_56, %c0_57] : memref<4x128xf32, #tpu.memory_space<vmem>>, vector<4x128xf32>
      %c0_58 = arith.constant 0 : index
      %c0_59 = arith.constant 0 : index
      %162 = tpu.strided_load %arg16[%c0_58, %c0_59] {strides = array<i32: 8, 1>} : memref<16x128xf32, #tpu.memory_space<vmem>>, vector<2x128xf32>
      %c0_60 = arith.constant 0 : index
      %c0_61 = arith.constant 0 : index
      %163 = vector.load %arg8[%c0_60, %c0_61] : memref<128x128xbf16, #tpu.memory_space<vmem>>, vector<128x128xbf16>
      %164 = arith.truncf %162 : vector<2x128xf32> to vector<2x128xbf16>
      %cst_62 = arith.constant dense<0.000000e+00> : vector<2x128xf32>
      %165 = tpu.matmul %164, %163, %cst_62 {dimension_numbers = #tpu.dot_dimension_numbers<[1], [0], [0], [1], [0, 0, 1, 1], [], []>} : vector<2x128xbf16>, vector<128x128xbf16>, vector<2x128xf32> -> vector<2x128xf32>
      %166 = vector.extract_strided_slice %161 {offsets = [2, 0], sizes = [1, 128], strides = [1, 1]} : vector<4x128xf32> to vector<1x128xf32>
      %167 = vector.broadcast %166 : vector<1x128xf32> to vector<2x128xf32>
      %168 = arith.addf %165, %167 : vector<2x128xf32>
      %169 = math.tanh %168 : vector<2x128xf32>
      %c0_63 = arith.constant 0 : index
      %c0_64 = arith.constant 0 : index
      %170 = vector.load %arg9[%c0_63, %c0_64] : memref<128x128xbf16, #tpu.memory_space<vmem>>, vector<128x128xbf16>
      %171 = arith.truncf %169 : vector<2x128xf32> to vector<2x128xbf16>
      %cst_65 = arith.constant dense<0.000000e+00> : vector<2x128xf32>
      %172 = tpu.matmul %171, %170, %cst_65 {dimension_numbers = #tpu.dot_dimension_numbers<[1], [0], [0], [1], [0, 0, 1, 1], [], []>} : vector<2x128xbf16>, vector<128x128xbf16>, vector<2x128xf32> -> vector<2x128xf32>
      %173 = vector.extract_strided_slice %161 {offsets = [3, 0], sizes = [1, 128], strides = [1, 1]} : vector<4x128xf32> to vector<1x128xf32>
      %174 = vector.broadcast %173 : vector<1x128xf32> to vector<2x128xf32>
      %175 = arith.addf %172, %174 : vector<2x128xf32>
      %c0_66 = arith.constant 0 : index
      %c0_67 = arith.constant 0 : index
      %176 = vector.load %arg15[%c0_66, %c0_67] : memref<2x128xf32, #tpu.memory_space<vmem>>, vector<2x128xf32>
      tpu.vector_store %arg15[%c0_66, %c0_67], %175 {strides = array<i32>} : memref<2x128xf32, #tpu.memory_space<vmem>>, vector<2x128xf32>,
    } else {
    }
    return
  }
  func.func @transform_0(%arg0: i32) -> (i32, i32) {
    %c0_i32 = arith.constant 0 : i32
    %c0_i32_0 = arith.constant 0 : i32
    %c0_i32_1 = arith.constant 0 : i32
    return %c0_i32, %c0_i32_0 : i32, i32
  }
  func.func @transform_1(%arg0: i32) -> (i32, i32) {
    %c0_i32 = arith.constant 0 : i32
    %c0_i32_0 = arith.constant 0 : i32
    %c0_i32_1 = arith.constant 0 : i32
    return %c0_i32, %c0_i32_0 : i32, i32
  }
  func.func @transform_2(%arg0: i32) -> (i32, i32) {
    %c0_i32 = arith.constant 0 : i32
    %c0_i32_0 = arith.constant 0 : i32
    %c0_i32_1 = arith.constant 0 : i32
    return %c0_i32, %c0_i32_0 : i32, i32
  }
  func.func @transform_3(%arg0: i32) -> (i32, i32) {
    %c0_i32 = arith.constant 0 : i32
    %c0_i32_0 = arith.constant 0 : i32
    %c0_i32_1 = arith.constant 0 : i32
    return %c0_i32, %c0_i32_0 : i32, i32
  }
  func.func @transform_4(%arg0: i32) -> (i32, i32) {
    %c0_i32 = arith.constant 0 : i32
    %c0_i32_0 = arith.constant 0 : i32
    %c0_i32_1 = arith.constant 0 : i32
    return %c0_i32, %c0_i32_0 : i32, i32
  }
  func.func @transform_5(%arg0: i32) -> (i32, i32) {
    %c0_i32 = arith.constant 0 : i32
    %c0_i32_0 = arith.constant 0 : i32
    %c0_i32_1 = arith.constant 0 : i32
    return %c0_i32, %c0_i32_0 : i32, i32
  }
  func.func @transform_6(%arg0: i32) -> (i32, i32) {
    %c0_i32 = arith.constant 0 : i32
    %c0_i32_0 = arith.constant 0 : i32
    %c0_i32_1 = arith.constant 0 : i32
    return %c0_i32, %c0_i32_0 : i32, i32
  }
  func.func @transform_7(%arg0: i32) -> (i32, i32) {
    %c0_i32 = arith.constant 0 : i32
    %c0_i32_0 = arith.constant 0 : i32
    %c0_i32_1 = arith.constant 0 : i32
    return %c0_i32, %c0_i32_0 : i32, i32
  }
  func.func @transform_8(%arg0: i32) -> (i32, i32) {
    %c0_i32 = arith.constant 0 : i32
    %c0_i32_0 = arith.constant 0 : i32
    %c0_i32_1 = arith.constant 0 : i32
    return %c0_i32, %c0_i32_0 : i32, i32
  }
  func.func @transform_9(%arg0: i32) -> (i32, i32, i32) {
    %c0_i32 = arith.constant 0 : i32
    %c0_i32_0 = arith.constant 0 : i32
    %c0_i32_1 = arith.constant 0 : i32
    return %arg0, %c0_i32, %c0_i32_0 : i32, i32, i32
  }
  func.func @transform_10(%arg0: i32) -> (i32, i32, i32) {
    %c0_i32 = arith.constant 0 : i32
    %c0_i32_0 = arith.constant 0 : i32
    %c0_i32_1 = arith.constant 0 : i32
    return %arg0, %c0_i32, %c0_i32_0 : i32, i32, i32
  }
  func.func @transform_11(%arg0: i32) -> (i32, i32, i32) {
    %c0_i32 = arith.constant 0 : i32
    %c0_i32_0 = arith.constant 0 : i32
    %c0_i32_1 = arith.constant 0 : i32
    return %arg0, %c0_i32, %c0_i32_0 : i32, i32, i32
  }
  func.func @transform_12(%arg0: i32) -> (i32, i32, i32) {
    %c0_i32 = arith.constant 0 : i32
    %c0_i32_0 = arith.constant 0 : i32
    %c0_i32_1 = arith.constant 0 : i32
    return %arg0, %c0_i32, %c0_i32_0 : i32, i32, i32
  }
  func.func @transform_13(%arg0: i32) -> (i32, i32, i32) {
    %c0_i32 = arith.constant 0 : i32
    %c0_i32_0 = arith.constant 0 : i32
    %c0_i32_1 = arith.constant 0 : i32
    return %arg0, %c0_i32, %c0_i32_0 : i32, i32, i32
  }
  func.func @transform_14(%arg0: i32) -> (i32, i32) {
    %c0_i32 = arith.constant 0 : i32
    %c0_i32_0 = arith.constant 0 : i32
    %c0_i32_1 = arith.constant 0 : i32
    return %c0_i32, %c0_i32_0 : i32, i32
  }
}

</mosaic_0001>

<llo_original>
// kernel: bert_class_forward.1
$region0: #{bert_class_forward.1}
  #allocation0 [shape = 'u32[]', space=smem, size = 0x4, offset = 0x4, fixed_abs, tag = 'smem constant byte address 0x4 - core index']
  #allocation1 [shape = 'u32[144,128]{1,0:T(1,128)}', space=vmem, size = 0x12000, scoped, tag = 'internal scratch']
  #allocation2 [shape = 'f32[16,128]{1,0:T(8,128)}', space=vmem, size = 0x2000, scoped, tag = 'scratch operand']
  #allocation3 [shape = 'f32[16,128]{1,0:T(8,128)}', space=vmem, size = 0x2000, scoped, tag = 'scratch operand']
  %s0 = inlined_call_operand.vmem [shape: s32[16,1], index: 0, kind: input, shape index: {}]
  %s1 = inlined_call_operand.vmem [shape: s32[16,1], index: 1, kind: input, shape index: {}]
  %s2 = inlined_call_operand.vmem [shape: s32[2,8], index: 2, kind: input, shape index: {}]
  %s3 = inlined_call_operand.hbm [shape: bf16[128,128], index: 3, kind: input, shape index: {}]
  %s4 = inlined_call_operand.vmem [shape: f32[2,128], index: 4, kind: input, shape index: {}]
  %s5 = inlined_call_operand.vmem [shape: f32[16,128], index: 5, kind: input, shape index: {}]
  %s6 = inlined_call_operand.vmem [shape: f32[4,128], index: 6, kind: input, shape index: {}]
  %s7 = inlined_call_operand.hbm [shape: bf16[128,128], index: 7, kind: input, shape index: {}]
  %s8 = inlined_call_operand.hbm [shape: bf16[128,128], index: 8, kind: input, shape index: {}]
  %s9 = inlined_call_operand.hbm [shape: bf16[2,128,384], index: 9, kind: input, shape index: {}]
  %s10 = inlined_call_operand.hbm [shape: bf16[2,128,128], index: 10, kind: input, shape index: {}]
  %s11 = inlined_call_operand.hbm [shape: bf16[2,128,512], index: 11, kind: input, shape index: {}]
  %s12 = inlined_call_operand.hbm [shape: bf16[2,512,128], index: 12, kind: input, shape index: {}]
  %s13 = inlined_call_operand.hbm [shape: f32[2,8,512], index: 13, kind: input, shape index: {}]
  %s14 = inlined_call_operand.hbm [shape: f32[2,128], index: 14, kind: output, shape index: {}]
  %s15 = sld [smem:[#allocation0]]
  $region129: #{bert_class_forward.1} parent=0
    _
  %s17 = ssub.s32 1, %s15
  %s18 = scalar_select 0, %s17, %s15
  $region1: #{bert_class_forward.1} parent=0
    #allocation4 [shape = 'u8[32768]{0}', space=vmem, size = 0x8000, scoped, tag = 'input window, operand 3, single buffered']
    #allocation5 [shape = 's32[2]{0}', space=sflag, size = 0x8, scoped, tag = 'scoped memory for bert_class_forward.1']
    #allocation6 [shape = 's32[2]{0}', space=sflag, size = 0x8, scoped, tag = 'scoped memory for bert_class_forward.1']
    #allocation7 [shape = 'u8[32768]{0}', space=vmem, size = 0x8000, scoped, tag = 'input window, operand 7, single buffered']
    #allocation8 [shape = 's32[1]{0}', space=sflag, size = 0x4, scoped, tag = 'scoped memory for bert_class_forward.1']
    #allocation9 [shape = 'u8[32768]{0}', space=vmem, size = 0x8000, scoped, tag = 'input window, operand 8, single buffered']
    #allocation10 [shape = 'u8[196608]{0}', space=vmem, size = 0x30000, scoped, tag = 'input window, operand 9']
    #allocation11 [shape = 's32[2]{0}', space=sflag, size = 0x8, scoped, tag = 'scoped memory for bert_class_forward.1']
    #allocation12 [shape = 'u8[65536]{0}', space=vmem, size = 0x10000, scoped, tag = 'input window, operand 10']
    #allocation13 [shape = 'u8[262144]{0}', space=vmem, size = 0x40000, scoped, tag = 'input window, operand 11']
    #allocation14 [shape = 's32[2]{0}', space=sflag, size = 0x8, scoped, tag = 'scoped memory for bert_class_forward.1']
    #allocation15 [shape = 'u8[262144]{0}', space=vmem, size = 0x40000, scoped, tag = 'input window, operand 12']
    #allocation16 [shape = 'u8[32768]{0}', space=vmem, size = 0x8000, scoped, tag = 'input window, operand 13']
    #allocation17 [shape = 's32[2]{0}', space=sflag, size = 0x8, scoped, tag = 'scoped memory for bert_class_forward.1']
    #allocation18 [shape = 'u8[1024]{0}', space=vmem, size = 0x400, scoped, tag = 'output window, operand 0, single buffered']
    %19 = vsyncpa [#allocation5], 0
    %20 = vsyncpa [#allocation8], 0
    %21 = vsyncpa [#allocation11], 0
    %s22 = scalar_lea.sflag [#allocation11], 1
    %23 = vsyncpa %s22, 0
    %24 = vsyncpa [#allocation14], 0
    %s25 = scalar_lea.sflag [#allocation14], 1
    %26 = vsyncpa %s25, 0
    %27 = vsyncpa [#allocation17], 0
    %s28 = scalar_lea.sflag [#allocation17], 1
    %29 = vsyncpa %s28, 0
    %30 = vsyncpa [#allocation6], 0
    loop: start=0, step=1, limit=4
    $region2: #{bert_class_forward.1} parent=1 // loop_pre_header
      _
    $region3: #{bert_class_forward.1} parent=1 // loop_header
      %s32 = sphi 0, %s36
      %p33 = scmp.ge.s32.totalorder %s32, 4
      %s40 = sphi 0, %s40
      %s42 = sphi 0, %s40
      %s43 = sphi 0, %s42
      %s57 = sphi 0, %s43
      %s61 = sphi 0, %s61
      %s63 = sphi 0, %s61
      %s64 = sphi 0, %s63
      %s78 = sphi 0, %s64
      %s82 = sphi 0, %s82
      %s84 = sphi 0, %s82
      %s85 = sphi 0, %s84
      %s99 = sphi 0, %s85
      %s103 = sphi 0, %s103
      %s105 = sphi 0, %s103
      %s106 = sphi 0, %s105
      %s120 = sphi 0, %s106
      %s124 = sphi 0, %s124
      %s126 = sphi 0, %s124
      %s127 = sphi 0, %s126
      %s141 = sphi 0, %s127
      %s145 = sphi 0, %s145
      %s147 = sphi 0, %s145
      %s148 = sphi 0, %s147
      %s162 = sphi 0, %s148
      %s166 = sphi 0, %s166
      %s168 = sphi 0, %s166
      %s169 = sphi 0, %s168
      %s183 = sphi 0, %s169
      %s187 = sphi 0, %s187
      %s189 = sphi 0, %s187
      %s190 = sphi 0, %s189
      %s204 = sphi 0, %s190
      %s208 = sphi 0, %s208
      %s210 = sphi 0, %s208
      %s211 = sphi 0, %s210
      %s225 = sphi 0, %s211
      %s231 = sphi 0, %s233
      %s234 = sphi 0, %s231
      %s235 = sphi 0, %s234
      %s251 = sphi 0, %s235
      %s257 = sphi 0, %s259
      %s260 = sphi 0, %s257
      %s261 = sphi 0, %s260
      %s277 = sphi 0, %s261
      %s283 = sphi 0, %s285
      %s286 = sphi 0, %s283
      %s287 = sphi 0, %s286
      %s303 = sphi 0, %s287
      %s309 = sphi 0, %s311
      %s312 = sphi 0, %s309
      %s313 = sphi 0, %s312
      %s329 = sphi 0, %s313
      %s335 = sphi 0, %s337
      %s338 = sphi 0, %s335
      %s339 = sphi 0, %s338
      %s355 = sphi 0, %s339
      %s359 = sphi 0, %s359
      %s361 = sphi 0, %s359
      %s362 = sphi 0, %s361
      %s376 = sphi 0, %s362
    $region4: #{bert_class_forward.1} parent=1 // loop_header_branch
      %35 = sbr.rel (%p33) target = $region8
    $region5: #{bert_class_forward.1} parent=1 // loop_body
      %s37 = ssub.s32 %s32, 1
      %s38 = ssub.s32 %s32, 2
      %s39 = sadd.s32 %s32, 1
      %s41 = sadd.s32 %s40, 1
      %p44 = scmp.eq.s32.totalorder %s32, 1
      %p45 = scmp.ne.s32.totalorder %s40, %s42
      %p46 = scmp.eq.s32.totalorder %s32, 0
      %p47 = por %p45, %p46
      %p48 = scmp.ne.s32.totalorder %s40, %s42
      %p49 = scmp.eq.s32.totalorder %s37, 1
      %p50 = por %p48, %p49
      %p51 = scmp.ne.s32.totalorder %s42, %s43
      %p52 = scmp.eq.s32.totalorder %s37, 0
      %p53 = por %p51, %p52
      %p54 = scmp.ne.s32.totalorder %s42, %s43
      %p55 = scmp.eq.s32.totalorder %s38, 1
      %p56 = por %p54, %p55
      %p58 = scmp.ne.s32.totalorder %s43, %s57
      %p59 = scmp.eq.s32.totalorder %s38, 0
      %p60 = por %p58, %p59
      %s62 = sadd.s32 %s61, 1
      %p65 = scmp.eq.s32.totalorder %s32, 1
      %p66 = scmp.ne.s32.totalorder %s61, %s63
      %p67 = scmp.eq.s32.totalorder %s32, 0
      %p68 = por %p66, %p67
      %p69 = scmp.ne.s32.totalorder %s61, %s63
      %p70 = scmp.eq.s32.totalorder %s37, 1
      %p71 = por %p69, %p70
      %p72 = scmp.ne.s32.totalorder %s63, %s64
      %p73 = scmp.eq.s32.totalorder %s37, 0
      %p74 = por %p72, %p73
      %p75 = scmp.ne.s32.totalorder %s63, %s64
      %p76 = scmp.eq.s32.totalorder %s38, 1
      %p77 = por %p75, %p76
      %p79 = scmp.ne.s32.totalorder %s64, %s78
      %p80 = scmp.eq.s32.totalorder %s38, 0
      %p81 = por %p79, %p80
      %s83 = sadd.s32 %s82, 1
      %p86 = scmp.eq.s32.totalorder %s32, 1
      %p87 = scmp.ne.s32.totalorder %s82, %s84
      %p88 = scmp.eq.s32.totalorder %s32, 0
      %p89 = por %p87, %p88
      %p90 = scmp.ne.s32.totalorder %s82, %s84
      %p91 = scmp.eq.s32.totalorder %s37, 1
      %p92 = por %p90, %p91
      %p93 = scmp.ne.s32.totalorder %s84, %s85
      %p94 = scmp.eq.s32.totalorder %s37, 0
      %p95 = por %p93, %p94
      %p96 = scmp.ne.s32.totalorder %s84, %s85
      %p97 = scmp.eq.s32.totalorder %s38, 1
      %p98 = por %p96, %p97
      %p100 = scmp.ne.s32.totalorder %s85, %s99
      %p101 = scmp.eq.s32.totalorder %s38, 0
      %p102 = por %p100, %p101
      %s104 = sadd.s32 %s103, 1
      %p107 = scmp.eq.s32.totalorder %s32, 1
      %p108 = scmp.ne.s32.totalorder %s103, %s105
      %p109 = scmp.eq.s32.totalorder %s32, 0
      %p110 = por %p108, %p109
      %p111 = scmp.ne.s32.totalorder %s103, %s105
      %p112 = scmp.eq.s32.totalorder %s37, 1
      %p113 = por %p111, %p112
      %p114 = scmp.ne.s32.totalorder %s105, %s106
      %p115 = scmp.eq.s32.totalorder %s37, 0
      %p116 = por %p114, %p115
      %p117 = scmp.ne.s32.totalorder %s105, %s106
      %p118 = scmp.eq.s32.totalorder %s38, 1
      %p119 = por %p117, %p118
      %p121 = scmp.ne.s32.totalorder %s106, %s120
      %p122 = scmp.eq.s32.totalorder %s38, 0
      %p123 = por %p121, %p122
      %s125 = sadd.s32 %s124, 1
      %p128 = scmp.eq.s32.totalorder %s32, 1
      %p129 = scmp.ne.s32.totalorder %s124, %s126
      %p130 = scmp.eq.s32.totalorder %s32, 0
      %p131 = por %p129, %p130
      %p132 = scmp.ne.s32.totalorder %s124, %s126
      %p133 = scmp.eq.s32.totalorder %s37, 1
      %p134 = por %p132, %p133
      %p135 = scmp.ne.s32.totalorder %s126, %s127
      %p136 = scmp.eq.s32.totalorder %s37, 0
      %p137 = por %p135, %p136
      %p138 = scmp.ne.s32.totalorder %s126, %s127
      %p139 = scmp.eq.s32.totalorder %s38, 1
      %p140 = por %p138, %p139
      %p142 = scmp.ne.s32.totalorder %s127, %s141
      %p143 = scmp.eq.s32.totalorder %s38, 0
      %p144 = por %p142, %p143
      %s146 = sadd.s32 %s145, 1
      %p149 = scmp.eq.s32.totalorder %s32, 1
      %p150 = scmp.ne.s32.totalorder %s145, %s147
      %p151 = scmp.eq.s32.totalorder %s32, 0
      %p152 = por %p150, %p151
      %p153 = scmp.ne.s32.totalorder %s145, %s147
      %p154 = scmp.eq.s32.totalorder %s37, 1
      %p155 = por %p153, %p154
      %p156 = scmp.ne.s32.totalorder %s147, %s148
      %p157 = scmp.eq.s32.totalorder %s37, 0
      %p158 = por %p156, %p157
      %p159 = scmp.ne.s32.totalorder %s147, %s148
      %p160 = scmp.eq.s32.totalorder %s38, 1
      %p161 = por %p159, %p160
      %p163 = scmp.ne.s32.totalorder %s148, %s162
      %p164 = scmp.eq.s32.totalorder %s38, 0
      %p165 = por %p163, %p164
      %s167 = sadd.s32 %s166, 1
      %p170 = scmp.eq.s32.totalorder %s32, 1
      %p171 = scmp.ne.s32.totalorder %s166, %s168
      %p172 = scmp.eq.s32.totalorder %s32, 0
      %p173 = por %p171, %p172
      %p174 = scmp.ne.s32.totalorder %s166, %s168
      %p175 = scmp.eq.s32.totalorder %s37, 1
      %p176 = por %p174, %p175
      %p177 = scmp.ne.s32.totalorder %s168, %s169
      %p178 = scmp.eq.s32.totalorder %s37, 0
      %p179 = por %p177, %p178
      %p180 = scmp.ne.s32.totalorder %s168, %s169
      %p181 = scmp.eq.s32.totalorder %s38, 1
      %p182 = por %p180, %p181
      %p184 = scmp.ne.s32.totalorder %s169, %s183
      %p185 = scmp.eq.s32.totalorder %s38, 0
      %p186 = por %p184, %p185
      %s188 = sadd.s32 %s187, 1
      %p191 = scmp.eq.s32.totalorder %s32, 1
      %p192 = scmp.ne.s32.totalorder %s187, %s189
      %p193 = scmp.eq.s32.totalorder %s32, 0
      %p194 = por %p192, %p193
      %p195 = scmp.ne.s32.totalorder %s187, %s189
      %p196 = scmp.eq.s32.totalorder %s37, 1
      %p197 = por %p195, %p196
      %p198 = scmp.ne.s32.totalorder %s189, %s190
      %p199 = scmp.eq.s32.totalorder %s37, 0
      %p200 = por %p198, %p199
      %p201 = scmp.ne.s32.totalorder %s189, %s190
      %p202 = scmp.eq.s32.totalorder %s38, 1
      %p203 = por %p201, %p202
      %p205 = scmp.ne.s32.totalorder %s190, %s204
      %p206 = scmp.eq.s32.totalorder %s38, 0
      %p207 = por %p205, %p206
      %s209 = sadd.s32 %s208, 1
      %p212 = scmp.eq.s32.totalorder %s32, 1
      %p213 = scmp.ne.s32.totalorder %s208, %s210
      %p214 = scmp.eq.s32.totalorder %s32, 0
      %p215 = por %p213, %p214
      %p216 = scmp.ne.s32.totalorder %s208, %s210
      %p217 = scmp.eq.s32.totalorder %s37, 1
      %p218 = por %p216, %p217
      %p219 = scmp.ne.s32.totalorder %s210, %s211
      %p220 = scmp.eq.s32.totalorder %s37, 0
      %p221 = por %p219, %p220
      %p222 = scmp.ne.s32.totalorder %s210, %s211
      %p223 = scmp.eq.s32.totalorder %s38, 1
      %p224 = por %p222, %p223
      %p226 = scmp.ne.s32.totalorder %s211, %s225
      %p227 = scmp.eq.s32.totalorder %s38, 0
      %p228 = por %p226, %p227
      %s229 = ssub.s32 %s32, %s39
      %p230 = scmp.eq.s32.totalorder %s229, 0
      %s232 = sadd.s32 %s231, 1
      %s233 = scalar_select %p230, %s231, %s232
      %p236 = pneg %p230
      %p237 = scmp.eq.s32.totalorder %s32, 1
      %p238 = por %p236, %p237
      %p239 = scmp.ne.s32.totalorder %s231, %s234
      %p240 = scmp.eq.s32.totalorder %s32, 0
      %p241 = por %p239, %p240
      %p242 = scmp.ne.s32.totalorder %s231, %s234
      %p243 = scmp.eq.s32.totalorder %s37, 1
      %p244 = por %p242, %p243
      %p245 = scmp.ne.s32.totalorder %s234, %s235
      %p246 = scmp.eq.s32.totalorder %s37, 0
      %p247 = por %p245, %p246
      %p248 = scmp.ne.s32.totalorder %s234, %s235
      %p249 = scmp.eq.s32.totalorder %s38, 1
      %p250 = por %p248, %p249
      %p252 = scmp.ne.s32.totalorder %s235, %s251
      %p253 = scmp.eq.s32.totalorder %s38, 0
      %p254 = por %p252, %p253
      %s255 = ssub.s32 %s32, %s39
      %p256 = scmp.eq.s32.totalorder %s255, 0
      %s258 = sadd.s32 %s257, 1
      %s259 = scalar_select %p256, %s257, %s258
      %p262 = pneg %p256
      %p263 = scmp.eq.s32.totalorder %s32, 1
      %p264 = por %p262, %p263
      %p265 = scmp.ne.s32.totalorder %s257, %s260
      %p266 = scmp.eq.s32.totalorder %s32, 0
      %p267 = por %p265, %p266
      %p268 = scmp.ne.s32.totalorder %s257, %s260
      %p269 = scmp.eq.s32.totalorder %s37, 1
      %p270 = por %p268, %p269
      %p271 = scmp.ne.s32.totalorder %s260, %s261
      %p272 = scmp.eq.s32.totalorder %s37, 0
      %p273 = por %p271, %p272
      %p274 = scmp.ne.s32.totalorder %s260, %s261
      %p275 = scmp.eq.s32.totalorder %s38, 1
      %p276 = por %p274, %p275
      %p278 = scmp.ne.s32.totalorder %s261, %s277
      %p279 = scmp.eq.s32.totalorder %s38, 0
      %p280 = por %p278, %p279
      %s281 = ssub.s32 %s32, %s39
      %p282 = scmp.eq.s32.totalorder %s281, 0
      %s284 = sadd.s32 %s283, 1
      %s285 = scalar_select %p282, %s283, %s284
      %p288 = pneg %p282
      %p289 = scmp.eq.s32.totalorder %s32, 1
      %p290 = por %p288, %p289
      %p291 = scmp.ne.s32.totalorder %s283, %s286
      %p292 = scmp.eq.s32.totalorder %s32, 0
      %p293 = por %p291, %p292
      %p294 = scmp.ne.s32.totalorder %s283, %s286
      %p295 = scmp.eq.s32.totalorder %s37, 1
      %p296 = por %p294, %p295
      %p297 = scmp.ne.s32.totalorder %s286, %s287
      %p298 = scmp.eq.s32.totalorder %s37, 0
      %p299 = por %p297, %p298
      %p300 = scmp.ne.s32.totalorder %s286, %s287
      %p301 = scmp.eq.s32.totalorder %s38, 1
      %p302 = por %p300, %p301
      %p304 = scmp.ne.s32.totalorder %s287, %s303
      %p305 = scmp.eq.s32.totalorder %s38, 0
      %p306 = por %p304, %p305
      %s307 = ssub.s32 %s32, %s39
      %p308 = scmp.eq.s32.totalorder %s307, 0
      %s310 = sadd.s32 %s309, 1
      %s311 = scalar_select %p308, %s309, %s310
      %p314 = pneg %p308
      %p315 = scmp.eq.s32.totalorder %s32, 1
      %p316 = por %p314, %p315
      %p317 = scmp.ne.s32.totalorder %s309, %s312
      %p318 = scmp.eq.s32.totalorder %s32, 0
      %p319 = por %p317, %p318
      %p320 = scmp.ne.s32.totalorder %s309, %s312
      %p321 = scmp.eq.s32.totalorder %s37, 1
      %p322 = por %p320, %p321
      %p323 = scmp.ne.s32.totalorder %s312, %s313
      %p324 = scmp.eq.s32.totalorder %s37, 0
      %p325 = por %p323, %p324
      %p326 = scmp.ne.s32.totalorder %s312, %s313
      %p327 = scmp.eq.s32.totalorder %s38, 1
      %p328 = por %p326, %p327
      %p330 = scmp.ne.s32.totalorder %s313, %s329
      %p331 = scmp.eq.s32.totalorder %s38, 0
      %p332 = por %p330, %p331
      %s333 = ssub.s32 %s32, %s39
      %p334 = scmp.eq.s32.totalorder %s333, 0
      %s336 = sadd.s32 %s335, 1
      %s337 = scalar_select %p334, %s335, %s336
      %p340 = pneg %p334
      %p341 = scmp.eq.s32.totalorder %s32, 1
      %p342 = por %p340, %p341
      %p343 = scmp.ne.s32.totalorder %s335, %s338
      %p344 = scmp.eq.s32.totalorder %s32, 0
      %p345 = por %p343, %p344
      %p346 = scmp.ne.s32.totalorder %s335, %s338
      %p347 = scmp.eq.s32.totalorder %s37, 1
      %p348 = por %p346, %p347
      %p349 = scmp.ne.s32.totalorder %s338, %s339
      %p350 = scmp.eq.s32.totalorder %s37, 0
      %p351 = por %p349, %p350
      %p352 = scmp.ne.s32.totalorder %s338, %s339
      %p353 = scmp.eq.s32.totalorder %s38, 1
      %p354 = por %p352, %p353
      %p356 = scmp.ne.s32.totalorder %s339, %s355
      %p357 = scmp.eq.s32.totalorder %s38, 0
      %p358 = por %p356, %p357
      %s360 = sadd.s32 %s359, 1
      %p363 = scmp.eq.s32.totalorder %s32, 1
      %p364 = scmp.ne.s32.totalorder %s359, %s361
      %p365 = scmp.eq.s32.totalorder %s32, 0
      %p366 = por %p364, %p365
      %p367 = scmp.ne.s32.totalorder %s359, %s361
      %p368 = scmp.eq.s32.totalorder %s37, 1
      %p369 = por %p367, %p368
      %p370 = scmp.ne.s32.totalorder %s361, %s362
      %p371 = scmp.eq.s32.totalorder %s37, 0
      %p372 = por %p370, %p371
      %p373 = scmp.ne.s32.totalorder %s361, %s362
      %p374 = scmp.eq.s32.totalorder %s38, 1
      %p375 = por %p373, %p374
      %p377 = scmp.ne.s32.totalorder %s362, %s376
      %p378 = scmp.eq.s32.totalorder %s38, 0
      %p379 = por %p377, %p378
      %p380 = scmp.le.s32.totalorder 1, %s32
      %p381 = scmp.lt.s32.totalorder %s32, 3
      %p382 = pnand %p380, %p381
      %p383 = pneg %p382
      // Predicated region
      $region9: #{bert_class_forward.1} parent=5 // pred_check
        _
      $region10: #{bert_class_forward.1} parent=5 // pred_check_branch
        %385 = sbr.rel (%p382) target = $region12
      $region11: #{bert_class_forward.1} parent=5 // pred_region
        %s386 = ssub.s32 %s32, 1
        // Predicated region
        $region13: #{bert_class_forward.1} parent=11 // pred_check
          %p387 = pneg %p53
        $region14: #{bert_class_forward.1} parent=11 // pred_check_branch
          %389 = sbr.rel (%p387) target = $region16
        $region15: #{bert_class_forward.1} parent=11 // pred_region
          _
        $region16: #{bert_class_forward.1} parent=11 // pred_fallthru
          _
        // Predicated region
        $region17: #{bert_class_forward.1} parent=11 // pred_check
          %p390 = pneg %p74
        $region18: #{bert_class_forward.1} parent=11 // pred_check_branch
          %392 = sbr.rel (%p390) target = $region20
        $region19: #{bert_class_forward.1} parent=11 // pred_region
          _
        $region20: #{bert_class_forward.1} parent=11 // pred_fallthru
          _
        // Predicated region
        $region21: #{bert_class_forward.1} parent=11 // pred_check
          %p393 = pneg %p95
        $region22: #{bert_class_forward.1} parent=11 // pred_check_branch
          %395 = sbr.rel (%p393) target = $region24
        $region23: #{bert_class_forward.1} parent=11 // pred_region
          _
        $region24: #{bert_class_forward.1} parent=11 // pred_fallthru
          _
        // Predicated region
        $region25: #{bert_class_forward.1} parent=11 // pred_check
          %p396 = pneg %p116
        $region26: #{bert_class_forward.1} parent=11 // pred_check_branch
          %398 = sbr.rel (%p396) target = $region28
        $region27: #{bert_class_forward.1} parent=11 // pred_region
          %s400 = ssub.s32 1024, 1024
          %401 = vsyncadd [#allocation5], %s400
          %s402 = sshll.u32 [#allocation4], 4
          %s403 = int_to_ptr.vmem [resolvable:$true] %s402
          %408 = dma.hbm_to_vmem [thread:$0]  %s3, 1024, %s403, [#allocation5], 64, 64, 4
        $region28: #{bert_class_forward.1} parent=11 // pred_fallthru
          _
        // Predicated region
        $region29: #{bert_class_forward.1} parent=11 // pred_check
          %p409 = pneg %p137
        $region30: #{bert_class_forward.1} parent=11 // pred_check_branch
          %411 = sbr.rel (%p409) target = $region32
        $region31: #{bert_class_forward.1} parent=11 // pred_region
          _
        $region32: #{bert_class_forward.1} parent=11 // pred_fallthru
          _
        // Predicated region
        $region33: #{bert_class_forward.1} parent=11 // pred_check
          %p412 = pneg %p158
        $region34: #{bert_class_forward.1} parent=11 // pred_check_branch
          %414 = sbr.rel (%p412) target = $region36
        $region35: #{bert_class_forward.1} parent=11 // pred_region
          _
        $region36: #{bert_class_forward.1} parent=11 // pred_fallthru
          _
        // Predicated region
        $region37: #{bert_class_forward.1} parent=11 // pred_check
          %p415 = pneg %p179
        $region38: #{bert_class_forward.1} parent=11 // pred_check_branch
          %417 = sbr.rel (%p415) target = $region40
        $region39: #{bert_class_forward.1} parent=11 // pred_region
          _
        $region40: #{bert_class_forward.1} parent=11 // pred_fallthru
          _
        // Predicated region
        $region41: #{bert_class_forward.1} parent=11 // pred_check
          %p418 = pneg %p200
        $region42: #{bert_class_forward.1} parent=11 // pred_check_branch
          %420 = sbr.rel (%p418) target = $region44
        $region43: #{bert_class_forward.1} parent=11 // pred_region
          %s422 = ssub.s32 1024, 1024
          %423 = vsyncadd [#allocation8], %s422
          %s424 = sshll.u32 [#allocation7], 4
          %s425 = int_to_ptr.vmem [resolvable:$true] %s424
          %430 = dma.hbm_to_vmem [thread:$0]  %s7, 1024, %s425, [#allocation8], 64, 64, 4
        $region44: #{bert_class_forward.1} parent=11 // pred_fallthru
          _
        // Predicated region
        $region45: #{bert_class_forward.1} parent=11 // pred_check
          %p431 = pneg %p221
        $region46: #{bert_class_forward.1} parent=11 // pred_check_branch
          %433 = sbr.rel (%p431) target = $region48
        $region47: #{bert_class_forward.1} parent=11 // pred_region
          %s435 = ssub.s32 1024, 1024
          %436 = vsyncadd [#allocation8], %s435
          %s437 = sshll.u32 [#allocation9], 4
          %s438 = int_to_ptr.vmem [resolvable:$true] %s437
          %443 = dma.hbm_to_vmem [thread:$0]  %s8, 1024, %s438, [#allocation8], 64, 64, 4
        $region48: #{bert_class_forward.1} parent=11 // pred_fallthru
          _
      $region12: #{bert_class_forward.1} parent=5 // pred_fallthru
        _
      %p444 = scmp.lt.s32.totalorder %s32, 2
      // Predicated region
      $region49: #{bert_class_forward.1} parent=5 // pred_check
        %p445 = pneg %p444
      $region50: #{bert_class_forward.1} parent=5 // pred_check_branch
        %447 = sbr.rel (%p445) target = $region52
      $region51: #{bert_class_forward.1} parent=5 // pred_region
        // Predicated region
        $region53: #{bert_class_forward.1} parent=51 // pred_check
          %p448 = pneg %p241
        $region54: #{bert_class_forward.1} parent=51 // pred_check_branch
          %450 = sbr.rel (%p448) target = $region56
        $region55: #{bert_class_forward.1} parent=51 // pred_region
          %s451 = sand.u32 %s32, 1
          %s452 = scalar_lea.sflag [#allocation11], %s451
          %s453 = sand.u32 %s231, 1
          %s454 = smul.addr %s453, 192
          %s455 = scalar_lea.vmem [#allocation10], %s454
          %s457 = ssub.s32 3072, 3072
          %458 = vsyncadd %s452, %s457
          %s459 = smul.addr %s32, 48
          %s460 = smul.addr %s459, 64
          %s461 = scalar_lea.hbm %s9, %s460
          %s462 = sshll.u32 %s455, 4
          %s463 = int_to_ptr.vmem [resolvable:$true] %s462
          %468 = dma.hbm_to_vmem [thread:$0]  %s461, 3072, %s463, %s452, 192, 192, 12
        $region56: #{bert_class_forward.1} parent=51 // pred_fallthru
          _
        // Predicated region
        $region57: #{bert_class_forward.1} parent=51 // pred_check
          %p469 = pneg %p267
        $region58: #{bert_class_forward.1} parent=51 // pred_check_branch
          %471 = sbr.rel (%p469) target = $region60
        $region59: #{bert_class_forward.1} parent=51 // pred_region
          %s472 = sand.u32 %s32, 1
          %s473 = scalar_lea.sflag [#allocation11], %s472
          %s474 = sand.u32 %s257, 1
          %s475 = smul.addr %s474, 64
          %s476 = scalar_lea.vmem [#allocation12], %s475
          %s478 = ssub.s32 1024, 1024
          %479 = vsyncadd %s473, %s478
          %s480 = smul.addr %s32, 16
          %s481 = smul.addr %s480, 64
          %s482 = scalar_lea.hbm %s10, %s481
          %s483 = sshll.u32 %s476, 4
          %s484 = int_to_ptr.vmem [resolvable:$true] %s483
          %489 = dma.hbm_to_vmem [thread:$0]  %s482, 1024, %s484, %s473, 64, 64, 4
        $region60: #{bert_class_forward.1} parent=51 // pred_fallthru
          _
        // Predicated region
        $region61: #{bert_class_forward.1} parent=51 // pred_check
          %p490 = pneg %p293
        $region62: #{bert_class_forward.1} parent=51 // pred_check_branch
          %492 = sbr.rel (%p490) target = $region64
        $region63: #{bert_class_forward.1} parent=51 // pred_region
          %s493 = sand.u32 %s32, 1
          %s494 = scalar_lea.sflag [#allocation14], %s493
          %s495 = sand.u32 %s283, 1
          %s496 = smul.addr %s495, 256
          %s497 = scalar_lea.vmem [#allocation13], %s496
          %s499 = ssub.s32 4096, 4096
          %500 = vsyncadd %s494, %s499
          %s501 = smul.addr %s32, 64
          %s502 = smul.addr %s501, 64
          %s503 = scalar_lea.hbm %s11, %s502
          %s504 = sshll.u32 %s497, 4
          %s505 = int_to_ptr.vmem [resolvable:$true] %s504
          %510 = dma.hbm_to_vmem [thread:$0]  %s503, 4096, %s505, %s494, 256, 256, 16
        $region64: #{bert_class_forward.1} parent=51 // pred_fallthru
          _
        // Predicated region
        $region65: #{bert_class_forward.1} parent=51 // pred_check
          %p511 = pneg %p319
        $region66: #{bert_class_forward.1} parent=51 // pred_check_branch
          %513 = sbr.rel (%p511) target = $region68
        $region67: #{bert_class_forward.1} parent=51 // pred_region
          %s514 = sand.u32 %s32, 1
          %s515 = scalar_lea.sflag [#allocation14], %s514
          %s516 = sand.u32 %s309, 1
          %s517 = smul.addr %s516, 256
          %s518 = scalar_lea.vmem [#allocation15], %s517
          %s520 = ssub.s32 4096, 4096
          %521 = vsyncadd %s515, %s520
          %s522 = smul.addr %s32, 64
          %s523 = smul.addr %s522, 64
          %s524 = scalar_lea.hbm %s12, %s523
          %s525 = sshll.u32 %s518, 4
          %s526 = int_to_ptr.vmem [resolvable:$true] %s525
          %531 = dma.hbm_to_vmem [thread:$0]  %s524, 4096, %s526, %s515, 64, 64, 4
        $region68: #{bert_class_forward.1} parent=51 // pred_fallthru
          _
        // Predicated region
        $region69: #{bert_class_forward.1} parent=51 // pred_check
          %p532 = pneg %p345
        $region70: #{bert_class_forward.1} parent=51 // pred_check_branch
          %534 = sbr.rel (%p532) target = $region72
        $region71: #{bert_class_forward.1} parent=51 // pred_region
          %s535 = sand.u32 %s335, 1
          %s536 = scalar_lea.sflag [#allocation17], %s535
          %s537 = sand.u32 %s335, 1
          %s538 = smul.addr %s537, 32
          %s539 = scalar_lea.vmem [#allocation16], %s538
          %s541 = ssub.s32 512, 512
          %542 = vsyncadd %s536, %s541
          %s543 = smul.addr %s32, 4
          %s544 = smul.addr %s543, 128
          %s545 = scalar_lea.hbm %s13, %s544
          %s547 = sshll.u32 %s539, 4
          %s548 = int_to_ptr.vmem [resolvable:$true] %s547
          %550 = dma.hbm_to_vmem [thread:$0]  %s545, 512, %s548, %s536
        $region72: #{bert_class_forward.1} parent=51 // pred_fallthru
          _
      $region52: #{bert_class_forward.1} parent=5 // pred_fallthru
        _
      %p551 = scmp.le.s32.totalorder 1, %s32
      %p552 = scmp.lt.s32.totalorder %s32, 3
      %p553 = pnand %p551, %p552
      %p554 = pneg %p553
      // Predicated region
      $region73: #{bert_class_forward.1} parent=5 // pred_check
        _
      $region74: #{bert_class_forward.1} parent=5 // pred_check_branch
        %556 = sbr.rel (%p553) target = $region76
      $region75: #{bert_class_forward.1} parent=5 // pred_region
        %s557 = ssub.s32 %s32, 1
        // Predicated region
        $region77: #{bert_class_forward.1} parent=75 // pred_check
          %p558 = pneg %p116
        $region78: #{bert_class_forward.1} parent=75 // pred_check_branch
          %560 = sbr.rel (%p558) target = $region80
        $region79: #{bert_class_forward.1} parent=75 // pred_region
          %561 = dma.done [#allocation5], 1024
        $region80: #{bert_class_forward.1} parent=75 // pred_fallthru
          _
        // Predicated region
        $region81: #{bert_class_forward.1} parent=75 // pred_check
          %p562 = pneg %p200
        $region82: #{bert_class_forward.1} parent=75 // pred_check_branch
          %564 = sbr.rel (%p562) target = $region84
        $region83: #{bert_class_forward.1} parent=75 // pred_region
          %565 = dma.done [#allocation8], 1024
        $region84: #{bert_class_forward.1} parent=75 // pred_fallthru
          _
        // Predicated region
        $region85: #{bert_class_forward.1} parent=75 // pred_check
          %p566 = pneg %p221
        $region86: #{bert_class_forward.1} parent=75 // pred_check_branch
          %568 = sbr.rel (%p566) target = $region88
        $region87: #{bert_class_forward.1} parent=75 // pred_region
          %569 = dma.done [#allocation8], 1024
        $region88: #{bert_class_forward.1} parent=75 // pred_fallthru
          _
        %s570 = sand.u32 %s37, 1
        %s571 = scalar_lea.sflag [#allocation11], %s570
        %s572 = sand.u32 %s234, 1
        %s573 = smul.addr %s572, 192
        %s574 = scalar_lea.vmem [#allocation10], %s573
        // Predicated region
        $region89: #{bert_class_forward.1} parent=75 // pred_check
          %p575 = pneg %p247
        $region90: #{bert_class_forward.1} parent=75 // pred_check_branch
          %577 = sbr.rel (%p575) target = $region92
        $region91: #{bert_class_forward.1} parent=75 // pred_region
          %578 = dma.done %s571, 3072
        $region92: #{bert_class_forward.1} parent=75 // pred_fallthru
          _
        %s579 = sand.u32 %s37, 1
        %s580 = scalar_lea.sflag [#allocation11], %s579
        %s581 = sand.u32 %s260, 1
        %s582 = smul.addr %s581, 64
        %s583 = scalar_lea.vmem [#allocation12], %s582
        // Predicated region
        $region93: #{bert_class_forward.1} parent=75 // pred_check
          %p584 = pneg %p273
        $region94: #{bert_class_forward.1} parent=75 // pred_check_branch
          %586 = sbr.rel (%p584) target = $region96
        $region95: #{bert_class_forward.1} parent=75 // pred_region
          %587 = dma.done %s580, 1024
        $region96: #{bert_class_forward.1} parent=75 // pred_fallthru
          _
        %s588 = sand.u32 %s37, 1
        %s589 = scalar_lea.sflag [#allocation14], %s588
        %s590 = sand.u32 %s286, 1
        %s591 = smul.addr %s590, 256
        %s592 = scalar_lea.vmem [#allocation13], %s591
        // Predicated region
        $region97: #{bert_class_forward.1} parent=75 // pred_check
          %p593 = pneg %p299
        $region98: #{bert_class_forward.1} parent=75 // pred_check_branch
          %595 = sbr.rel (%p593) target = $region100
        $region99: #{bert_class_forward.1} parent=75 // pred_region
          %596 = dma.done %s589, 4096
        $region100: #{bert_class_forward.1} parent=75 // pred_fallthru
          _
        %s597 = sand.u32 %s37, 1
        %s598 = scalar_lea.sflag [#allocation14], %s597
        %s599 = sand.u32 %s312, 1
        %s600 = smul.addr %s599, 256
        %s601 = scalar_lea.vmem [#allocation15], %s600
        // Predicated region
        $region101: #{bert_class_forward.1} parent=75 // pred_check
          %p602 = pneg %p325
        $region102: #{bert_class_forward.1} parent=75 // pred_check_branch
          %604 = sbr.rel (%p602) target = $region104
        $region103: #{bert_class_forward.1} parent=75 // pred_region
          %605 = dma.done %s598, 4096
        $region104: #{bert_class_forward.1} parent=75 // pred_fallthru
          _
        %s606 = sand.u32 %s338, 1
        %s607 = scalar_lea.sflag [#allocation17], %s606
        %s608 = sand.u32 %s338, 1
        %s609 = smul.addr %s608, 32
        %s610 = scalar_lea.vmem [#allocation16], %s609
        // Predicated region
        $region105: #{bert_class_forward.1} parent=75 // pred_check
          %p611 = pneg %p351
        $region106: #{bert_class_forward.1} parent=75 // pred_check_branch
          %613 = sbr.rel (%p611) target = $region108
        $region107: #{bert_class_forward.1} parent=75 // pred_region
          %614 = dma.done %s607, 512
        $region108: #{bert_class_forward.1} parent=75 // pred_fallthru
          _
        %p615 = pneg %p53
        %p616 = pneg %p50
        %p617 = pneg %p74
        %p618 = pneg %p71
        %p619 = pneg %p95
        %p620 = pneg %p92
        %p621 = pneg %p116
        %p622 = pneg %p113
        %p623 = pneg %p137
        %p624 = pneg %p134
        %p625 = pneg %p158
        %p626 = pneg %p155
        %p627 = pneg %p179
        %p628 = pneg %p176
        %p629 = pneg %p200
        %p630 = pneg %p197
        %p631 = pneg %p221
        %p632 = pneg %p218
        %s633 = sand.u32 %s37, 1
        %s634 = scalar_lea.sflag [#allocation11], %s633
        %s635 = sand.u32 %s234, 1
        %s636 = smul.addr %s635, 192
        %s637 = scalar_lea.vmem [#allocation10], %s636
        %p638 = pneg %p247
        %p639 = pneg %p244
        %s640 = sand.u32 %s37, 1
        %s641 = scalar_lea.sflag [#allocation11], %s640
        %s642 = sand.u32 %s260, 1
        %s643 = smul.addr %s642, 64
        %s644 = scalar_lea.vmem [#allocation12], %s643
        %p645 = pneg %p273
        %p646 = pneg %p270
        %s647 = sand.u32 %s37, 1
        %s648 = scalar_lea.sflag [#allocation14], %s647
        %s649 = sand.u32 %s286, 1
        %s650 = smul.addr %s649, 256
        %s651 = scalar_lea.vmem [#allocation13], %s650
        %p652 = pneg %p299
        %p653 = pneg %p296
        %s654 = sand.u32 %s37, 1
        %s655 = scalar_lea.sflag [#allocation14], %s654
        %s656 = sand.u32 %s312, 1
        %s657 = smul.addr %s656, 256
        %s658 = scalar_lea.vmem [#allocation15], %s657
        %p659 = pneg %p325
        %p660 = pneg %p322
        %s661 = sand.u32 %s338, 1
        %s662 = scalar_lea.sflag [#allocation17], %s661
        %s663 = sand.u32 %s338, 1
        %s664 = smul.addr %s663, 32
        %s665 = scalar_lea.vmem [#allocation16], %s664
        %p666 = pneg %p351
        %p667 = pneg %p348
        %p668 = pneg %p372
        %p669 = pneg %p369
        %v671 = vld [vmem:[%s2] sm:$0x3]
        %v672 = vcvt.s32.f32 %v671
        %v673 = vsub.f32 1.0, %v672
        %v674 = vmul.f32 %v673, -10000.0
        %v677 = vunpack.c.l.s4 1966171168
        %v678 = vunpack.c.0.s8 %v677
        %v679 = vlaneseq
        %v680 = vshrl.u32 %v679, 7
        %v681 = vsub.s32 %v678, %v680
        %v682 = vrot.slane %v674, %v681
        %v683 = vcombine.high %v682, %v682
        %v685 = vunpack.c.l.s4 1966171168
        %v686 = vunpack.c.0.s8 %v685
        %v687 = vlaneseq
        %v688 = vshrl.u32 %v687, 7
        %v689 = vsub.s32 %v686, %v688
        %v690 = vrot.slane %v682, %v689
        %v692 = vunpack.c.l.s4 1966171168
        %v693 = vunpack.c.0.s8 %v692
        %v694 = vlaneseq
        %v695 = vshrl.u32 %v694, 7
        %v696 = vsub.s32 %v693, %v695
        %v697 = vrot.slane %v683, %v696
        %p698 = scmp.eq.s32.totalorder %s37, 0
        // Predicated region
        $region109: #{bert_class_forward.1} parent=75 // pred_check
          %p699 = pneg %p698
        $region110: #{bert_class_forward.1} parent=75 // pred_check_branch
          %701 = sbr.rel (%p699) target = $region112
        $region111: #{bert_class_forward.1} parent=75 // pred_region
          %v702 = vld [vmem:[%s0] sm:$0xff]
          %v703 = vld [vmem:[%s0 + $0x8] sm:$0xff]
          %v704 = vlaneseq
          %v705 = vand.u32 %v704, 127
          %706 = vset.pattern.permute.xlu0 0
          %707 = vperm.xlu0 %706, %v702
          %v708 = vpop.permute.xlu0 %707
          %709 = vset.pattern.permute.xlu0 0
          %710 = vperm.xlu0 %709, %v703
          %v711 = vpop.permute.xlu0 %710
          %vm712 = vcmp.eq.s32.totalorder %v708, %v705
          %vm713 = vcmp.eq.s32.totalorder %v711, %v705
          %v714 = vsel %vm712, 1.0, 0.0
          %v715 = vsel %vm713, 1.0, 0.0
          %v716 = vpack.c.bf16 %v715, %v714
          %v717 = vld [vmem:[#allocation4] sm:$0xf]
          %v718 = vld [vmem:[#allocation4 + $0x4] sm:$0xf]
          %v719 = vld [vmem:[#allocation4 + $0x8] sm:$0xf]
          %v720 = vld [vmem:[#allocation4 + $0xc] sm:$0xf]
          %v721 = vld [vmem:[#allocation4 + $0x10] sm:$0xf]
          %v722 = vld [vmem:[#allocation4 + $0x14] sm:$0xf]
          %v723 = vld [vmem:[#allocation4 + $0x18] sm:$0xf]
          %v724 = vld [vmem:[#allocation4 + $0x1c] sm:$0xf]
          %v725 = vld [vmem:[#allocation4 + $0x20] sm:$0xf]
          %v726 = vld [vmem:[#allocation4 + $0x24] sm:$0xf]
          %v727 = vld [vmem:[#allocation4 + $0x28] sm:$0xf]
          %v728 = vld [vmem:[#allocation4 + $0x2c] sm:$0xf]
          %v729 = vld [vmem:[#allocation4 + $0x30] sm:$0xf]
          %v730 = vld [vmem:[#allocation4 + $0x34] sm:$0xf]
          %v731 = vld [vmem:[#allocation4 + $0x38] sm:$0xf]
          %v732 = vld [vmem:[#allocation4 + $0x3c] sm:$0xf]
          %v733 = vld [vmem:[%s1] sm:$0xff]
          %v734 = vld [vmem:[%s1 + $0x8] sm:$0xff]
          %v735 = vld [vmem:[%s4] sm:$0x3]
          %vm736 = vcmp.eq.s32.totalorder %v733, 0
          %vm737 = vcmp.eq.s32.totalorder %v734, 0
          %v738 = vsel %vm736, 1, 0
          %v739 = vsel %vm737, 1, 0
          %740 = vset.pattern.permute.xlu0 0
          %741 = vperm.xlu0 %740, %v738
          %v742 = vpop.permute.xlu0 %741
          %743 = vset.pattern.permute.xlu0 0
          %744 = vperm.xlu0 %743, %v739
          %v745 = vpop.permute.xlu0 %744
          %vm746 = vcmp.eq.s32.totalorder %v742, 1
          %vm747 = vcmp.eq.s32.totalorder %v745, 1
          %v748 = vlaneseq
          %v749 = vshrl.u32 %v748, 7
          %v750 = vsub.s32 0, %v749
          %v751 = vrot.slane %v735, %v750
          %v752 = vlaneseq
          %v753 = vshrl.u32 %v752, 7
          %v754 = vsub.s32 1, %v753
          %v755 = vrot.slane %v735, %v754
          %v756 = vsel %vm746, %v751, %v755
          %v757 = vsel %vm747, %v751, %v755
          %v758 = vld [vmem:[%s5] sm:$0xff]
          %v759 = vld [vmem:[%s5 + $0x8] sm:$0xff]
          %v776 = vunpack.c.l.b16 %v717
          %v777 = vunpack.c.l.b16 %v718
          %v778 = vunpack.c.l.b16 %v719
          %v779 = vunpack.c.l.b16 %v720
          %v780 = vunpack.c.l.b16 %v721
          %v781 = vunpack.c.l.b16 %v722
          %v782 = vunpack.c.l.b16 %v723
          %v783 = vunpack.c.l.b16 %v724
          %v784 = vunpack.c.l.b16 %v725
          %v785 = vunpack.c.l.b16 %v726
          %v786 = vunpack.c.l.b16 %v727
          %v787 = vunpack.c.l.b16 %v728
          %v788 = vunpack.c.l.b16 %v729
          %v789 = vunpack.c.l.b16 %v730
          %v790 = vunpack.c.l.b16 %v731
          %v791 = vunpack.c.l.b16 %v732
          %v792 = vpack.c.b16 %v777, %v776
          %v793 = vpack.c.b16 %v779, %v778
          %v794 = vpack.c.b16 %v781, %v780
          %v795 = vpack.c.b16 %v783, %v782
          %v796 = vpack.c.b16 %v785, %v784
          %v797 = vpack.c.b16 %v787, %v786
          %v798 = vpack.c.b16 %v789, %v788
          %v799 = vpack.c.b16 %v791, %v790
          %808 = vmatprep.subr.bf16.mxu0 0
          %809 = vmatpush1.bf16.msra.mxu0 %v799
          %810 = vmatprep.subr.bf16.mxu0 0
          %811 = vmatpush1.bf16.msra.mxu0 %v798
          %812 = vmatprep.subr.bf16.mxu0 0
          %813 = vmatpush1.bf16.msra.mxu0 %v797
          %814 = vmatprep.subr.bf16.mxu0 0
          %815 = vmatpush1.bf16.msra.mxu0 %v796
          %816 = vmatprep.subr.bf16.mxu0 0
          %817 = vmatpush1.bf16.msra.mxu0 %v795
          %818 = vmatprep.subr.bf16.mxu0 0
          %819 = vmatpush1.bf16.msra.mxu0 %v794
          %820 = vmatprep.subr.bf16.mxu0 0
          %821 = vmatpush1.bf16.msra.mxu0 %v793
          %822 = vmatprep.subr.bf16.mxu0 0
          %823 = vmatpush1.bf16.msra.mxu0 %v792
          %824 = vmatprep.subr.bf16.mxu0 0
          %825 = vmatpush2.bf16.msra.mxu0 0
          %826 = vmatprep.subr.bf16.mxu0 0
          %827 = vmatpush2.bf16.msra.mxu0 0
          %828 = vmatprep.subr.bf16.mxu0 0
          %829 = vmatpush2.bf16.msra.mxu0 0
          %830 = vmatprep.subr.bf16.mxu0 0
          %831 = vmatpush2.bf16.msra.mxu0 0
          %832 = vmatprep.subr.bf16.mxu0 0
          %833 = vmatpush2.bf16.msra.mxu0 0
          %834 = vmatprep.subr.bf16.mxu0 0
          %835 = vmatpush2.bf16.msra.mxu0 0
          %836 = vmatprep.subr.bf16.mxu0 0
          %837 = vmatpush2.bf16.msra.mxu0 0
          %838 = vmatprep.subr.bf16.mxu0 0
          %839 = vmatpush2.bf16.msra.mxu0 0
          %840 = vmatprep.mubr.bf16.mxu0 0
          %841 = vmatmul.mubr.bf16.gmra.mxu0 %v716
          %v842 = vpop.f32.mrf.mxu0
          %v843 = vadd.f32 %v758, %v842
          %v844 = vpop.f32.mrf.mxu0
          %v845 = vpop.f32.mrf.mxu0
          %v846 = vadd.f32 %v759, %v845
          %v847 = vpop.f32.mrf.mxu0
          %848 = vdwg.mxu0
          %v849 = vadd.f32 %v843, %v756
          %v850 = vadd.f32 %v846, %v757
          %v851 = vld [vmem:[%s6] sm:$0xf]
          %852 = vadd.xlane.f32.xlu0 %v849
          %v853 = vpop.xlane.xlu0 %852
          %854 = vadd.xlane.f32.xlu0 %v850
          %v855 = vpop.xlane.xlu0 %854
          %v856 = vrcp.pop 128.0
          %v857 = vmul.f32 %v853, %v856
          %v858 = vmul.f32 %v855, %v856
          %v859 = vsub.f32 %v849, %v857
          %v860 = vsub.f32 %v850, %v858
          %v861 = vmul.f32 %v859, %v859
          %v862 = vmul.f32 %v860, %v860
          %863 = vadd.xlane.f32.xlu0 %v861
          %v864 = vpop.xlane.xlu0 %863
          %865 = vadd.xlane.f32.xlu0 %v862
          %v866 = vpop.xlane.xlu0 %865
          %v867 = vmul.f32 %v864, %v856
          %v868 = vmul.f32 %v866, %v856
          %v869 = vadd.f32 %v867, 1e-12
          %v870 = vadd.f32 %v868, 1e-12
          %v871 = vrsqrt.pop %v869
          %v872 = vrsqrt.pop %v870
          %v873 = vmul.f32 %v859, %v871
          %v874 = vmul.f32 %v860, %v872
          %v875 = vlaneseq
          %v876 = vshrl.u32 %v875, 7
          %v877 = vsub.s32 0, %v876
          %v878 = vrot.slane %v851, %v877
          %v879 = vmul.f32 %v873, %v878
          %v880 = vmul.f32 %v874, %v878
          %v881 = vlaneseq
          %v882 = vshrl.u32 %v881, 7
          %v883 = vsub.s32 1, %v882
          %v884 = vrot.slane %v851, %v883
          %v885 = vadd.f32 %v879, %v884
          %v886 = vadd.f32 %v880, %v884
          %887 = vst [vmem:[#allocation2] sm:$0xff] %v885
          %888 = vst [vmem:[#allocation2 + $0x8] sm:$0xff] %v886
        $region112: #{bert_class_forward.1} parent=75 // pred_fallthru
          _
        %v889 = vld [vmem:[#allocation2] sm:$0xff]
        %v890 = vld [vmem:[#allocation2 + $0x8] sm:$0xff]
        %v891 = vld [vmem:[%s610] sm:$0xff]
        %v892 = vld [vmem:[%s610 + $0x8] sm:$0xff]
        %v893 = vld [vmem:[%s610 + $0x10] sm:$0xff]
        %v894 = vld [vmem:[%s610 + $0x18] sm:$0xff]
        %v895 = vld [vmem:[%s574] sm:$0xff]
        %v896 = vld [vmem:[%s574 + $0x8] sm:$0xf]
        %v897 = vld [vmem:[%s574 + $0xc] sm:$0xff]
        %v898 = vld [vmem:[%s574 + $0x14] sm:$0xf]
        %v899 = vld [vmem:[%s574 + $0x18] sm:$0xff]
        %v900 = vld [vmem:[%s574 + $0x20] sm:$0xf]
        %v901 = vld [vmem:[%s574 + $0x24] sm:$0xff]
        %v902 = vld [vmem:[%s574 + $0x2c] sm:$0xf]
        %v903 = vld [vmem:[%s574 + $0x30] sm:$0xff]
        %v904 = vld [vmem:[%s574 + $0x38] sm:$0xf]
        %v905 = vld [vmem:[%s574 + $0x3c] sm:$0xff]
        %v906 = vld [vmem:[%s574 + $0x44] sm:$0xf]
        %v907 = vld [vmem:[%s574 + $0x48] sm:$0xff]
        %v908 = vld [vmem:[%s574 + $0x50] sm:$0xf]
        %v909 = vld [vmem:[%s574 + $0x54] sm:$0xff]
        %v910 = vld [vmem:[%s574 + $0x5c] sm:$0xf]
        %v911 = vld [vmem:[%s574 + $0x60] sm:$0xff]
        %v912 = vld [vmem:[%s574 + $0x68] sm:$0xf]
        %v913 = vld [vmem:[%s574 + $0x6c] sm:$0xff]
        %v914 = vld [vmem:[%s574 + $0x74] sm:$0xf]
        %v915 = vld [vmem:[%s574 + $0x78] sm:$0xff]
        %v916 = vld [vmem:[%s574 + $0x80] sm:$0xf]
        %v917 = vld [vmem:[%s574 + $0x84] sm:$0xff]
        %v918 = vld [vmem:[%s574 + $0x8c] sm:$0xf]
        %v919 = vld [vmem:[%s574 + $0x90] sm:$0xff]
        %v920 = vld [vmem:[%s574 + $0x98] sm:$0xf]
        %v921 = vld [vmem:[%s574 + $0x9c] sm:$0xff]
        %v922 = vld [vmem:[%s574 + $0xa4] sm:$0xf]
        %v923 = vld [vmem:[%s574 + $0xa8] sm:$0xff]
        %v924 = vld [vmem:[%s574 + $0xb0] sm:$0xf]
        %v925 = vld [vmem:[%s574 + $0xb4] sm:$0xff]
        %v926 = vld [vmem:[%s574 + $0xbc] sm:$0xf]
        %v927 = vpack.c.bf16 %v890, %v889
        %v928 = vlaneseq
        %v929 = vshrl.u32 %v928, 7
        %v930 = vsub.s32 0, %v929
        %v931 = vrot.slane %v891, %v930
        %v932 = vlaneseq
        %v933 = vshrl.u32 %v932, 7
        %v934 = vsub.s32 0, %v933
        %v935 = vrot.slane %v892, %v934
        %v936 = vlaneseq
        %v937 = vshrl.u32 %v936, 7
        %v938 = vsub.s32 0, %v937
        %v939 = vrot.slane %v893, %v938
        %v972 = vunpack.c.l.b16 %v895
        %v973 = vunpack.c.h.b16 %v895
        %v974 = vunpack.c.l.b16 %v896
        %v975 = vunpack.c.l.b16 %v897
        %v976 = vunpack.c.h.b16 %v897
        %v977 = vunpack.c.l.b16 %v898
        %v978 = vunpack.c.l.b16 %v899
        %v979 = vunpack.c.h.b16 %v899
        %v980 = vunpack.c.l.b16 %v900
        %v981 = vunpack.c.l.b16 %v901
        %v982 = vunpack.c.h.b16 %v901
        %v983 = vunpack.c.l.b16 %v902
        %v984 = vunpack.c.l.b16 %v903
        %v985 = vunpack.c.h.b16 %v903
        %v986 = vunpack.c.l.b16 %v904
        %v987 = vunpack.c.l.b16 %v905
        %v988 = vunpack.c.h.b16 %v905
        %v989 = vunpack.c.l.b16 %v906
        %v990 = vunpack.c.l.b16 %v907
        %v991 = vunpack.c.h.b16 %v907
        %v992 = vunpack.c.l.b16 %v908
        %v993 = vunpack.c.l.b16 %v909
        %v994 = vunpack.c.h.b16 %v909
        %v995 = vunpack.c.l.b16 %v910
        %v996 = vunpack.c.l.b16 %v911
        %v997 = vunpack.c.h.b16 %v911
        %v998 = vunpack.c.l.b16 %v912
        %v999 = vunpack.c.l.b16 %v913
        %v1000 = vunpack.c.h.b16 %v913
        %v1001 = vunpack.c.l.b16 %v914
        %v1002 = vunpack.c.l.b16 %v915
        %v1003 = vunpack.c.h.b16 %v915
        %v1004 = vunpack.c.l.b16 %v916
        %v1005 = vunpack.c.l.b16 %v917
        %v1006 = vunpack.c.h.b16 %v917
        %v1007 = vunpack.c.l.b16 %v918
        %v1008 = vunpack.c.l.b16 %v919
        %v1009 = vunpack.c.h.b16 %v919
        %v1010 = vunpack.c.l.b16 %v920
        %v1011 = vunpack.c.l.b16 %v921
        %v1012 = vunpack.c.h.b16 %v921
        %v1013 = vunpack.c.l.b16 %v922
        %v1014 = vunpack.c.l.b16 %v923
        %v1015 = vunpack.c.h.b16 %v923
        %v1016 = vunpack.c.l.b16 %v924
        %v1017 = vunpack.c.l.b16 %v925
        %v1018 = vunpack.c.h.b16 %v925
        %v1019 = vunpack.c.l.b16 %v926
        %v1020 = vpack.c.b16 %v975, %v972
        %v1021 = vpack.c.b16 %v976, %v973
        %v1022 = vpack.c.b16 %v977, %v974
        %v1023 = vpack.c.b16 %v981, %v978
        %v1024 = vpack.c.b16 %v982, %v979
        %v1025 = vpack.c.b16 %v983, %v980
        %v1026 = vpack.c.b16 %v987, %v984
        %v1027 = vpack.c.b16 %v988, %v985
        %v1028 = vpack.c.b16 %v989, %v986
        %v1029 = vpack.c.b16 %v993, %v990
        %v1030 = vpack.c.b16 %v994, %v991
        %v1031 = vpack.c.b16 %v995, %v992
        %v1032 = vpack.c.b16 %v999, %v996
        %v1033 = vpack.c.b16 %v1000, %v997
        %v1034 = vpack.c.b16 %v1001, %v998
        %v1035 = vpack.c.b16 %v1005, %v1002
        %v1036 = vpack.c.b16 %v1006, %v1003
        %v1037 = vpack.c.b16 %v1007, %v1004
        %v1038 = vpack.c.b16 %v1011, %v1008
        %v1039 = vpack.c.b16 %v1012, %v1009
        %v1040 = vpack.c.b16 %v1013, %v1010
        %v1041 = vpack.c.b16 %v1017, %v1014
        %v1042 = vpack.c.b16 %v1018, %v1015
        %v1043 = vpack.c.b16 %v1019, %v1016
        %1068 = vmatprep.subr.bf16.mxu0 %v1042
        %1069 = vmatpush1.bf16.msra.mxu0 %v1041
        %1070 = vmatprep.subr.bf16.mxu0 %v1039
        %1071 = vmatpush1.bf16.msra.mxu0 %v1038
        %1072 = vmatprep.subr.bf16.mxu0 %v1036
        %1073 = vmatpush1.bf16.msra.mxu0 %v1035
        %1074 = vmatprep.subr.bf16.mxu0 %v1033
        %1075 = vmatpush1.bf16.msra.mxu0 %v1032
        %1076 = vmatprep.subr.bf16.mxu0 %v1030
        %1077 = vmatpush1.bf16.msra.mxu0 %v1029
        %1078 = vmatprep.subr.bf16.mxu0 %v1027
        %1079 = vmatpush1.bf16.msra.mxu0 %v1026
        %1080 = vmatprep.subr.bf16.mxu0 %v1024
        %1081 = vmatpush1.bf16.msra.mxu0 %v1023
        %1082 = vmatprep.subr.bf16.mxu0 %v1021
        %1083 = vmatpush1.bf16.msra.mxu0 %v1020
        %1084 = vmatprep.subr.bf16.mxu0 0
        %1085 = vmatpush2.bf16.msra.mxu0 0
        %1086 = vmatprep.subr.bf16.mxu0 0
        %1087 = vmatpush2.bf16.msra.mxu0 0
        %1088 = vmatprep.subr.bf16.mxu0 0
        %1089 = vmatpush2.bf16.msra.mxu0 0
        %1090 = vmatprep.subr.bf16.mxu0 0
        %1091 = vmatpush2.bf16.msra.mxu0 0
        %1092 = vmatprep.subr.bf16.mxu0 0
        %1093 = vmatpush2.bf16.msra.mxu0 0
        %1094 = vmatprep.subr.bf16.mxu0 0
        %1095 = vmatpush2.bf16.msra.mxu0 0
        %1096 = vmatprep.subr.bf16.mxu0 0
        %1097 = vmatpush2.bf16.msra.mxu0 0
        %1098 = vmatprep.subr.bf16.mxu0 0
        %1099 = vmatpush2.bf16.msra.mxu0 0
        %1100 = vmatprep.mubr.bf16.mxu0 0
        %1101 = vmatmul.mubr.bf16.gmra.mxu0 %v927
        %v1102 = vpop.f32.mrf.mxu0
        %v1103 = vadd.f32 %v931, %v1102
        %v1104 = vpop.f32.mrf.mxu0
        %v1105 = vadd.f32 %v935, %v1104
        %v1106 = vpop.f32.mrf.mxu0
        %v1107 = vadd.f32 %v931, %v1106
        %v1108 = vpop.f32.mrf.mxu0
        %v1109 = vadd.f32 %v935, %v1108
        %1110 = vdwg.mxu0
        %1111 = vmatprep.subr.bf16.mxu0 0
        %1112 = vmatpush1.bf16.msra.mxu0 %v1043
        %1113 = vmatprep.subr.bf16.mxu0 0
        %1114 = vmatpush1.bf16.msra.mxu0 %v1040
        %1115 = vmatprep.subr.bf16.mxu0 0
        %1116 = vmatpush1.bf16.msra.mxu0 %v1037
        %1117 = vmatprep.subr.bf16.mxu0 0
        %1118 = vmatpush1.bf16.msra.mxu0 %v1034
        %1119 = vmatprep.subr.bf16.mxu0 0
        %1120 = vmatpush1.bf16.msra.mxu0 %v1031
        %1121 = vmatprep.subr.bf16.mxu0 0
        %1122 = vmatpush1.bf16.msra.mxu0 %v1028
        %1123 = vmatprep.subr.bf16.mxu0 0
        %1124 = vmatpush1.bf16.msra.mxu0 %v1025
        %1125 = vmatprep.subr.bf16.mxu0 0
        %1126 = vmatpush1.bf16.msra.mxu0 %v1022
        %1127 = vmatprep.subr.bf16.mxu0 0
        %1128 = vmatpush2.bf16.msra.mxu0 0
        %1129 = vmatprep.subr.bf16.mxu0 0
        %1130 = vmatpush2.bf16.msra.mxu0 0
        %1131 = vmatprep.subr.bf16.mxu0 0
        %1132 = vmatpush2.bf16.msra.mxu0 0
        %1133 = vmatprep.subr.bf16.mxu0 0
        %1134 = vmatpush2.bf16.msra.mxu0 0
        %1135 = vmatprep.subr.bf16.mxu0 0
        %1136 = vmatpush2.bf16.msra.mxu0 0
        %1137 = vmatprep.subr.bf16.mxu0 0
        %1138 = vmatpush2.bf16.msra.mxu0 0
        %1139 = vmatprep.subr.bf16.mxu0 0
        %1140 = vmatpush2.bf16.msra.mxu0 0
        %1141 = vmatprep.subr.bf16.mxu0 0
        %1142 = vmatpush2.bf16.msra.mxu0 0
        %1143 = vmatprep.mubr.bf16.mxu0 0
        %1144 = vmatmul.mubr.bf16.gmra.mxu0 %v927
        %v1145 = vpop.f32.mrf.mxu0
        %v1146 = vadd.f32 %v939, %v1145
        %v1147 = vpop.f32.mrf.mxu0
        %v1148 = vpop.f32.mrf.mxu0
        %v1149 = vadd.f32 %v939, %v1148
        %v1150 = vpop.f32.mrf.mxu0
        %1151 = vdwg.mxu0
        %v1152 = vpack.c.bf16 %v1103, %v1103
        %v1153 = vpack.c.bf16 %v1107, %v1107
        %v1154 = vpack.c.bf16 %v1105, %v1105
        %v1155 = vpack.c.bf16 %v1109, %v1109
        %v1156 = vpack.c.bf16 %v1146, %v1146
        %v1157 = vpack.c.bf16 %v1149, %v1149
        %vm1158 = vcmask 523264
        %v1160 = vsel %vm1158, %v1152, 0
        %v1163 = vsel %vm1158, %v1154, 0
        %1165 = vmatprep.subr.bf16.mxu0 0
        %1166 = vmatpush1.bf16.xpose.msra.mxu0 0
        %1167 = vmatprep.subr.bf16.mxu0 0
        %1168 = vmatpush1.bf16.xpose.msra.mxu0 0
        %1169 = vmatprep.subr.bf16.mxu0 0
        %1170 = vmatpush1.bf16.xpose.msra.mxu0 0
        %1171 = vmatprep.subr.bf16.mxu0 0
        %1172 = vmatpush1.bf16.xpose.msra.mxu0 0
        %1173 = vmatprep.subr.bf16.mxu0 0
        %1174 = vmatpush1.bf16.xpose.msra.mxu0 0
        %1175 = vmatprep.subr.bf16.mxu0 0
        %1176 = vmatpush1.bf16.xpose.msra.mxu0 0
        %1177 = vmatprep.subr.bf16.mxu0 0
        %1178 = vmatpush1.bf16.xpose.msra.mxu0 0
        %1179 = vmatprep.subr.bf16.mxu0 0
        %1180 = vmatpush1.bf16.xpose.msra.mxu0 %v1163
        %1181 = vmatprep.subr.bf16.mxu0 0
        %1182 = vmatpush2.bf16.xpose.msra.mxu0 0
        %1183 = vmatprep.subr.bf16.mxu0 0
        %1184 = vmatpush2.bf16.xpose.msra.mxu0 0
        %1185 = vmatprep.subr.bf16.mxu0 0
        %1186 = vmatpush2.bf16.xpose.msra.mxu0 0
        %1187 = vmatprep.subr.bf16.mxu0 0
        %1188 = vmatpush2.bf16.xpose.msra.mxu0 0
        %1189 = vmatprep.subr.bf16.mxu0 0
        %1190 = vmatpush2.bf16.xpose.msra.mxu0 0
        %1191 = vmatprep.subr.bf16.mxu0 0
        %1192 = vmatpush2.bf16.xpose.msra.mxu0 0
        %1193 = vmatprep.subr.bf16.mxu0 0
        %1194 = vmatpush2.bf16.xpose.msra.mxu0 0
        %1195 = vmatprep.subr.bf16.mxu0 0
        %1196 = vmatpush2.bf16.xpose.msra.mxu0 0
        %1197 = vmatprep.mubr.bf16.mxu0 0
        %1198 = vmatmul.mubr.bf16.gmra.mxu0 %v1160
        %v1199 = vpop.f32.mrf.mxu0
        %v1200 = vadd.f32 0.0, %v1199
        %v1201 = vpop.f32.mrf.mxu0
        %v1202 = vpop.f32.mrf.mxu0
        %v1203 = vpop.f32.mrf.mxu0
        %1204 = vdwg.mxu0
        %v1206 = vsel %vm1158, %v1153, 0
        %v1209 = vsel %vm1158, %v1155, 0
        %1211 = vmatprep.subr.bf16.mxu0 0
        %1212 = vmatpush1.bf16.xpose.msra.mxu0 0
        %1213 = vmatprep.subr.bf16.mxu0 0
        %1214 = vmatpush1.bf16.xpose.msra.mxu0 0
        %1215 = vmatprep.subr.bf16.mxu0 0
        %1216 = vmatpush1.bf16.xpose.msra.mxu0 0
        %1217 = vmatprep.subr.bf16.mxu0 0
        %1218 = vmatpush1.bf16.xpose.msra.mxu0 0
        %1219 = vmatprep.subr.bf16.mxu0 0
        %1220 = vmatpush1.bf16.xpose.msra.mxu0 0
        %1221 = vmatprep.subr.bf16.mxu0 0
        %1222 = vmatpush1.bf16.xpose.msra.mxu0 0
        %1223 = vmatprep.subr.bf16.mxu0 0
        %1224 = vmatpush1.bf16.xpose.msra.mxu0 0
        %1225 = vmatprep.subr.bf16.mxu0 0
        %1226 = vmatpush1.bf16.xpose.msra.mxu0 %v1209
        %1227 = vmatprep.subr.bf16.mxu0 0
        %1228 = vmatpush2.bf16.xpose.msra.mxu0 0
        %1229 = vmatprep.subr.bf16.mxu0 0
        %1230 = vmatpush2.bf16.xpose.msra.mxu0 0
        %1231 = vmatprep.subr.bf16.mxu0 0
        %1232 = vmatpush2.bf16.xpose.msra.mxu0 0
        %1233 = vmatprep.subr.bf16.mxu0 0
        %1234 = vmatpush2.bf16.xpose.msra.mxu0 0
        %1235 = vmatprep.subr.bf16.mxu0 0
        %1236 = vmatpush2.bf16.xpose.msra.mxu0 0
        %1237 = vmatprep.subr.bf16.mxu0 0
        %1238 = vmatpush2.bf16.xpose.msra.mxu0 0
        %1239 = vmatprep.subr.bf16.mxu0 0
        %1240 = vmatpush2.bf16.xpose.msra.mxu0 0
        %1241 = vmatprep.subr.bf16.mxu0 0
        %1242 = vmatpush2.bf16.xpose.msra.mxu0 0
        %1243 = vmatprep.mubr.bf16.mxu0 0
        %1244 = vmatmul.mubr.bf16.gmra.mxu0 %v1206
        %v1245 = vpop.f32.mrf.mxu0
        %v1246 = vadd.f32 0.0, %v1245
        %v1247 = vpop.f32.mrf.mxu0
        %v1248 = vpop.f32.mrf.mxu0
        %v1249 = vpop.f32.mrf.mxu0
        %1250 = vdwg.mxu0
        %v1251 = vmul.f32 %v1200, 0.125
        %v1252 = vmul.f32 %v1246, 0.125
        %v1253 = vlaneseq
        %v1254 = vshrl.u32 %v1253, 7
        %v1255 = vsub.s32 0, %v1254
        %v1256 = vrot.slane %v690, %v1255
        %v1257 = vlaneseq
        %v1258 = vshrl.u32 %v1257, 7
        %v1259 = vsub.s32 0, %v1258
        %v1260 = vrot.slane %v697, %v1259
        %v1263 = vadd.f32 %v1251, %v1256
        %v1264 = vadd.f32 %v1252, %v1260
        %vm1265 = vcmask 64512
        %v1266 = vsel %vm1265, %v1263, -inf
        %1267 = vmax.xlane.f32.xlu0 %v1266
        %v1268 = vpop.xlane.xlu0 %1267
        %v1269 = vsel %vm1265, %v1264, -inf
        %1270 = vmax.xlane.f32.xlu0 %v1269
        %v1271 = vpop.xlane.xlu0 %1270
        %v1272 = vsub.f32 %v1263, %v1268
        %v1273 = vsub.f32 %v1264, %v1271
        %v1274 = vmul.f32 %v1272, 1.442695
        %v1275 = vpow.pop %v1274
        %v1276 = vmul.f32 %v1273, 1.442695
        %v1277 = vpow.pop %v1276
        %v1278 = vsel %vm1265, %v1275, 0.0
        %1279 = vadd.xlane.f32.xlu0 %v1278
        %v1280 = vpop.xlane.xlu0 %1279
        %v1281 = vsel %vm1265, %v1277, 0.0
        %1282 = vadd.xlane.f32.xlu0 %v1281
        %v1283 = vpop.xlane.xlu0 %1282
        %v1284 = vrcp.pop %v1280
        %v1285 = vrcp.pop %v1283
        %v1286 = vmul.f32 %v1275, %v1284
        %v1287 = vmul.f32 %v1277, %v1285
        %v1288 = vpack.c.bf16 %v1286, %v1286
        %v1289 = vpack.c.bf16 %v1287, %v1287
        %v1291 = vsel %vm1265, %v1288, 0
        %vm1293 = vcmask 1043456
        %v1295 = vsel %vm1293, %v1156, 0
        %1297 = vmatprep.subr.bf16.mxu0 0
        %1298 = vmatpush1.bf16.msra.mxu0 0
        %1299 = vmatprep.subr.bf16.mxu0 0
        %1300 = vmatpush1.bf16.msra.mxu0 0
        %1301 = vmatprep.subr.bf16.mxu0 0
        %1302 = vmatpush1.bf16.msra.mxu0 0
        %1303 = vmatprep.subr.bf16.mxu0 0
        %1304 = vmatpush1.bf16.msra.mxu0 0
        %1305 = vmatprep.subr.bf16.mxu0 0
        %1306 = vmatpush1.bf16.msra.mxu0 0
        %1307 = vmatprep.subr.bf16.mxu0 0
        %1308 = vmatpush1.bf16.msra.mxu0 0
        %1309 = vmatprep.subr.bf16.mxu0 0
        %1310 = vmatpush1.bf16.msra.mxu0 0
        %1311 = vmatprep.subr.bf16.mxu0 0
        %1312 = vmatpush1.bf16.msra.mxu0 %v1295
        %1313 = vmatprep.subr.bf16.mxu0 0
        %1314 = vmatpush2.bf16.msra.mxu0 0
        %1315 = vmatprep.subr.bf16.mxu0 0
        %1316 = vmatpush2.bf16.msra.mxu0 0
        %1317 = vmatprep.subr.bf16.mxu0 0
        %1318 = vmatpush2.bf16.msra.mxu0 0
        %1319 = vmatprep.subr.bf16.mxu0 0
        %1320 = vmatpush2.bf16.msra.mxu0 0
        %1321 = vmatprep.subr.bf16.mxu0 0
        %1322 = vmatpush2.bf16.msra.mxu0 0
        %1323 = vmatprep.subr.bf16.mxu0 0
        %1324 = vmatpush2.bf16.msra.mxu0 0
        %1325 = vmatprep.subr.bf16.mxu0 0
        %1326 = vmatpush2.bf16.msra.mxu0 0
        %1327 = vmatprep.subr.bf16.mxu0 0
        %1328 = vmatpush2.bf16.msra.mxu0 0
        %1329 = vmatprep.mubr.bf16.mxu0 0
        %1330 = vmatmul.mubr.bf16.gmra.mxu0 %v1291
        %v1331 = vpop.f32.mrf.mxu0
        %v1332 = vadd.f32 0.0, %v1331
        %v1333 = vpop.f32.mrf.mxu0
        %v1334 = vpop.f32.mrf.mxu0
        %v1335 = vpop.f32.mrf.mxu0
        %1336 = vdwg.mxu0
        %v1338 = vsel %vm1265, %v1289, 0
        %v1341 = vsel %vm1293, %v1157, 0
        %1343 = vmatprep.subr.bf16.mxu0 0
        %1344 = vmatpush1.bf16.msra.mxu0 0
        %1345 = vmatprep.subr.bf16.mxu0 0
        %1346 = vmatpush1.bf16.msra.mxu0 0
        %1347 = vmatprep.subr.bf16.mxu0 0
        %1348 = vmatpush1.bf16.msra.mxu0 0
        %1349 = vmatprep.subr.bf16.mxu0 0
        %1350 = vmatpush1.bf16.msra.mxu0 0
        %1351 = vmatprep.subr.bf16.mxu0 0
        %1352 = vmatpush1.bf16.msra.mxu0 0
        %1353 = vmatprep.subr.bf16.mxu0 0
        %1354 = vmatpush1.bf16.msra.mxu0 0
        %1355 = vmatprep.subr.bf16.mxu0 0
        %1356 = vmatpush1.bf16.msra.mxu0 0
        %1357 = vmatprep.subr.bf16.mxu0 0
        %1358 = vmatpush1.bf16.msra.mxu0 %v1341
        %1359 = vmatprep.subr.bf16.mxu0 0
        %1360 = vmatpush2.bf16.msra.mxu0 0
        %1361 = vmatprep.subr.bf16.mxu0 0
        %1362 = vmatpush2.bf16.msra.mxu0 0
        %1363 = vmatprep.subr.bf16.mxu0 0
        %1364 = vmatpush2.bf16.msra.mxu0 0
        %1365 = vmatprep.subr.bf16.mxu0 0
        %1366 = vmatpush2.bf16.msra.mxu0 0
        %1367 = vmatprep.subr.bf16.mxu0 0
        %1368 = vmatpush2.bf16.msra.mxu0 0
        %1369 = vmatprep.subr.bf16.mxu0 0
        %1370 = vmatpush2.bf16.msra.mxu0 0
        %1371 = vmatprep.subr.bf16.mxu0 0
        %1372 = vmatpush2.bf16.msra.mxu0 0
        %1373 = vmatprep.subr.bf16.mxu0 0
        %1374 = vmatpush2.bf16.msra.mxu0 0
        %1375 = vmatprep.mubr.bf16.mxu0 0
        %1376 = vmatmul.mubr.bf16.gmra.mxu0 %v1338
        %v1377 = vpop.f32.mrf.mxu0
        %v1378 = vadd.f32 0.0, %v1377
        %v1379 = vpop.f32.mrf.mxu0
        %v1380 = vpop.f32.mrf.mxu0
        %v1381 = vpop.f32.mrf.mxu0
        %1382 = vdwg.mxu0
        %1383 = vst.msk [vmem:[#allocation3] sm:$0xff] %vm1158, %v1332
        %1384 = vst.msk [vmem:[#allocation3 + $0x8] sm:$0xff] %vm1158, %v1378
        %1386 = vrot.lane.b32.xlu0 %v1152, 64
        %v1387 = vpop.permute.xlu0 %1386
        %1389 = vrot.lane.b32.xlu0 %v1154, 64
        %v1390 = vpop.permute.xlu0 %1389
        %v1392 = vsel %vm1158, %v1387, 0
        %v1395 = vsel %vm1158, %v1390, 0
        %1397 = vmatprep.subr.bf16.mxu0 0
        %1398 = vmatpush1.bf16.xpose.msra.mxu0 0
        %1399 = vmatprep.subr.bf16.mxu0 0
        %1400 = vmatpush1.bf16.xpose.msra.mxu0 0
        %1401 = vmatprep.subr.bf16.mxu0 0
        %1402 = vmatpush1.bf16.xpose.msra.mxu0 0
        %1403 = vmatprep.subr.bf16.mxu0 0
        %1404 = vmatpush1.bf16.xpose.msra.mxu0 0
        %1405 = vmatprep.subr.bf16.mxu0 0
        %1406 = vmatpush1.bf16.xpose.msra.mxu0 0
        %1407 = vmatprep.subr.bf16.mxu0 0
        %1408 = vmatpush1.bf16.xpose.msra.mxu0 0
        %1409 = vmatprep.subr.bf16.mxu0 0
        %1410 = vmatpush1.bf16.xpose.msra.mxu0 0
        %1411 = vmatprep.subr.bf16.mxu0 0
        %1412 = vmatpush1.bf16.xpose.msra.mxu0 %v1395
        %1413 = vmatprep.subr.bf16.mxu0 0
        %1414 = vmatpush2.bf16.xpose.msra.mxu0 0
        %1415 = vmatprep.subr.bf16.mxu0 0
        %1416 = vmatpush2.bf16.xpose.msra.mxu0 0
        %1417 = vmatprep.subr.bf16.mxu0 0
        %1418 = vmatpush2.bf16.xpose.msra.mxu0 0
        %1419 = vmatprep.subr.bf16.mxu0 0
        %1420 = vmatpush2.bf16.xpose.msra.mxu0 0
        %1421 = vmatprep.subr.bf16.mxu0 0
        %1422 = vmatpush2.bf16.xpose.msra.mxu0 0
        %1423 = vmatprep.subr.bf16.mxu0 0
        %1424 = vmatpush2.bf16.xpose.msra.mxu0 0
        %1425 = vmatprep.subr.bf16.mxu0 0
        %1426 = vmatpush2.bf16.xpose.msra.mxu0 0
        %1427 = vmatprep.subr.bf16.mxu0 0
        %1428 = vmatpush2.bf16.xpose.msra.mxu0 0
        %1429 = vmatprep.mubr.bf16.mxu0 0
        %1430 = vmatmul.mubr.bf16.gmra.mxu0 %v1392
        %v1431 = vpop.f32.mrf.mxu0
        %v1432 = vadd.f32 0.0, %v1431
        %v1433 = vpop.f32.mrf.mxu0
        %v1434 = vpop.f32.mrf.mxu0
        %v1435 = vpop.f32.mrf.mxu0
        %1436 = vdwg.mxu0
        %1438 = vrot.lane.b32.xlu0 %v1153, 64
        %v1439 = vpop.permute.xlu0 %1438
        %1441 = vrot.lane.b32.xlu0 %v1155, 64
        %v1442 = vpop.permute.xlu0 %1441
        %v1444 = vsel %vm1158, %v1439, 0
        %v1447 = vsel %vm1158, %v1442, 0
        %1449 = vmatprep.subr.bf16.mxu0 0
        %1450 = vmatpush1.bf16.xpose.msra.mxu0 0
        %1451 = vmatprep.subr.bf16.mxu0 0
        %1452 = vmatpush1.bf16.xpose.msra.mxu0 0
        %1453 = vmatprep.subr.bf16.mxu0 0
        %1454 = vmatpush1.bf16.xpose.msra.mxu0 0
        %1455 = vmatprep.subr.bf16.mxu0 0
        %1456 = vmatpush1.bf16.xpose.msra.mxu0 0
        %1457 = vmatprep.subr.bf16.mxu0 0
        %1458 = vmatpush1.bf16.xpose.msra.mxu0 0
        %1459 = vmatprep.subr.bf16.mxu0 0
        %1460 = vmatpush1.bf16.xpose.msra.mxu0 0
        %1461 = vmatprep.subr.bf16.mxu0 0
        %1462 = vmatpush1.bf16.xpose.msra.mxu0 0
        %1463 = vmatprep.subr.bf16.mxu0 0
        %1464 = vmatpush1.bf16.xpose.msra.mxu0 %v1447
        %1465 = vmatprep.subr.bf16.mxu0 0
        %1466 = vmatpush2.bf16.xpose.msra.mxu0 0
        %1467 = vmatprep.subr.bf16.mxu0 0
        %1468 = vmatpush2.bf16.xpose.msra.mxu0 0
        %1469 = vmatprep.subr.bf16.mxu0 0
        %1470 = vmatpush2.bf16.xpose.msra.mxu0 0
        %1471 = vmatprep.subr.bf16.mxu0 0
        %1472 = vmatpush2.bf16.xpose.msra.mxu0 0
        %1473 = vmatprep.subr.bf16.mxu0 0
        %1474 = vmatpush2.bf16.xpose.msra.mxu0 0
        %1475 = vmatprep.subr.bf16.mxu0 0
        %1476 = vmatpush2.bf16.xpose.msra.mxu0 0
        %1477 = vmatprep.subr.bf16.mxu0 0
        %1478 = vmatpush2.bf16.xpose.msra.mxu0 0
        %1479 = vmatprep.subr.bf16.mxu0 0
        %1480 = vmatpush2.bf16.xpose.msra.mxu0 0
        %1481 = vmatprep.mubr.bf16.mxu0 0
        %1482 = vmatmul.mubr.bf16.gmra.mxu0 %v1444
        %v1483 = vpop.f32.mrf.mxu0
        %v1484 = vadd.f32 0.0, %v1483
        %v1485 = vpop.f32.mrf.mxu0
        %v1486 = vpop.f32.mrf.mxu0
        %v1487 = vpop.f32.mrf.mxu0
        %1488 = vdwg.mxu0
        %v1489 = vmul.f32 %v1432, 0.125
        %v1490 = vmul.f32 %v1484, 0.125
        %v1491 = vadd.f32 %v1489, %v1256
        %v1492 = vadd.f32 %v1490, %v1260
        %v1493 = vsel %vm1265, %v1491, -inf
        %1494 = vmax.xlane.f32.xlu0 %v1493
        %v1495 = vpop.xlane.xlu0 %1494
        %v1496 = vsel %vm1265, %v1492, -inf
        %1497 = vmax.xlane.f32.xlu0 %v1496
        %v1498 = vpop.xlane.xlu0 %1497
        %v1499 = vsub.f32 %v1491, %v1495
        %v1500 = vsub.f32 %v1492, %v1498
        %v1501 = vmul.f32 %v1499, 1.442695
        %v1502 = vpow.pop %v1501
        %v1503 = vmul.f32 %v1500, 1.442695
        %v1504 = vpow.pop %v1503
        %v1505 = vsel %vm1265, %v1502, 0.0
        %1506 = vadd.xlane.f32.xlu0 %v1505
        %v1507 = vpop.xlane.xlu0 %1506
        %v1508 = vsel %vm1265, %v1504, 0.0
        %1509 = vadd.xlane.f32.xlu0 %v1508
        %v1510 = vpop.xlane.xlu0 %1509
        %v1511 = vrcp.pop %v1507
        %v1512 = vrcp.pop %v1510
        %v1513 = vmul.f32 %v1502, %v1511
        %v1514 = vmul.f32 %v1504, %v1512
        %v1515 = vpack.c.bf16 %v1513, %v1513
        %v1516 = vpack.c.bf16 %v1514, %v1514
        %1518 = vrot.lane.b32.xlu0 %v1156, 64
        %v1519 = vpop.permute.xlu0 %1518
        %v1521 = vsel %vm1265, %v1515, 0
        %v1524 = vsel %vm1293, %v1519, 0
        %1526 = vmatprep.subr.bf16.mxu0 0
        %1527 = vmatpush1.bf16.msra.mxu0 0
        %1528 = vmatprep.subr.bf16.mxu0 0
        %1529 = vmatpush1.bf16.msra.mxu0 0
        %1530 = vmatprep.subr.bf16.mxu0 0
        %1531 = vmatpush1.bf16.msra.mxu0 0
        %1532 = vmatprep.subr.bf16.mxu0 0
        %1533 = vmatpush1.bf16.msra.mxu0 0
        %1534 = vmatprep.subr.bf16.mxu0 0
        %1535 = vmatpush1.bf16.msra.mxu0 0
        %1536 = vmatprep.subr.bf16.mxu0 0
        %1537 = vmatpush1.bf16.msra.mxu0 0
        %1538 = vmatprep.subr.bf16.mxu0 0
        %1539 = vmatpush1.bf16.msra.mxu0 0
        %1540 = vmatprep.subr.bf16.mxu0 0
        %1541 = vmatpush1.bf16.msra.mxu0 %v1524
        %1542 = vmatprep.subr.bf16.mxu0 0
        %1543 = vmatpush2.bf16.msra.mxu0 0
        %1544 = vmatprep.subr.bf16.mxu0 0
        %1545 = vmatpush2.bf16.msra.mxu0 0
        %1546 = vmatprep.subr.bf16.mxu0 0
        %1547 = vmatpush2.bf16.msra.mxu0 0
        %1548 = vmatprep.subr.bf16.mxu0 0
        %1549 = vmatpush2.bf16.msra.mxu0 0
        %1550 = vmatprep.subr.bf16.mxu0 0
        %1551 = vmatpush2.bf16.msra.mxu0 0
        %1552 = vmatprep.subr.bf16.mxu0 0
        %1553 = vmatpush2.bf16.msra.mxu0 0
        %1554 = vmatprep.subr.bf16.mxu0 0
        %1555 = vmatpush2.bf16.msra.mxu0 0
        %1556 = vmatprep.subr.bf16.mxu0 0
        %1557 = vmatpush2.bf16.msra.mxu0 0
        %1558 = vmatprep.mubr.bf16.mxu0 0
        %1559 = vmatmul.mubr.bf16.gmra.mxu0 %v1521
        %v1560 = vpop.f32.mrf.mxu0
        %v1561 = vadd.f32 0.0, %v1560
        %v1562 = vpop.f32.mrf.mxu0
        %v1563 = vpop.f32.mrf.mxu0
        %v1564 = vpop.f32.mrf.mxu0
        %1565 = vdwg.mxu0
        %1567 = vrot.lane.b32.xlu0 %v1157, 64
        %v1568 = vpop.permute.xlu0 %1567
        %v1570 = vsel %vm1265, %v1516, 0
        %v1573 = vsel %vm1293, %v1568, 0
        %1575 = vmatprep.subr.bf16.mxu0 0
        %1576 = vmatpush1.bf16.msra.mxu0 0
        %1577 = vmatprep.subr.bf16.mxu0 0
        %1578 = vmatpush1.bf16.msra.mxu0 0
        %1579 = vmatprep.subr.bf16.mxu0 0
        %1580 = vmatpush1.bf16.msra.mxu0 0
        %1581 = vmatprep.subr.bf16.mxu0 0
        %1582 = vmatpush1.bf16.msra.mxu0 0
        %1583 = vmatprep.subr.bf16.mxu0 0
        %1584 = vmatpush1.bf16.msra.mxu0 0
        %1585 = vmatprep.subr.bf16.mxu0 0
        %1586 = vmatpush1.bf16.msra.mxu0 0
        %1587 = vmatprep.subr.bf16.mxu0 0
        %1588 = vmatpush1.bf16.msra.mxu0 0
        %1589 = vmatprep.subr.bf16.mxu0 0
        %1590 = vmatpush1.bf16.msra.mxu0 %v1573
        %1591 = vmatprep.subr.bf16.mxu0 0
        %1592 = vmatpush2.bf16.msra.mxu0 0
        %1593 = vmatprep.subr.bf16.mxu0 0
        %1594 = vmatpush2.bf16.msra.mxu0 0
        %1595 = vmatprep.subr.bf16.mxu0 0
        %1596 = vmatpush2.bf16.msra.mxu0 0
        %1597 = vmatprep.subr.bf16.mxu0 0
        %1598 = vmatpush2.bf16.msra.mxu0 0
        %1599 = vmatprep.subr.bf16.mxu0 0
        %1600 = vmatpush2.bf16.msra.mxu0 0
        %1601 = vmatprep.subr.bf16.mxu0 0
        %1602 = vmatpush2.bf16.msra.mxu0 0
        %1603 = vmatprep.subr.bf16.mxu0 0
        %1604 = vmatpush2.bf16.msra.mxu0 0
        %1605 = vmatprep.subr.bf16.mxu0 0
        %1606 = vmatpush2.bf16.msra.mxu0 0
        %1607 = vmatprep.mubr.bf16.mxu0 0
        %1608 = vmatmul.mubr.bf16.gmra.mxu0 %v1570
        %v1609 = vpop.f32.mrf.mxu0
        %v1610 = vadd.f32 0.0, %v1609
        %v1611 = vpop.f32.mrf.mxu0
        %v1612 = vpop.f32.mrf.mxu0
        %v1613 = vpop.f32.mrf.mxu0
        %1614 = vdwg.mxu0
        %1617 = vrot.lane.b32.xlu0 %v1561, 64
        %v1618 = vpop.permute.xlu0 %1617
        %1619 = vrot.lane.b32.xlu0 %v1610, 64
        %v1620 = vpop.permute.xlu0 %1619
        %vm1623 = vcmask 1048064
        %1624 = vst.msk [vmem:[#allocation3] sm:$0xff] %vm1623, %v1618
        %1625 = vst.msk [vmem:[#allocation3 + $0x8] sm:$0xff] %vm1623, %v1620
        %v1626 = vld [vmem:[#allocation3] sm:$0xff]
        %v1627 = vld [vmem:[#allocation3 + $0x8] sm:$0xff]
        %v1628 = vld [vmem:[%s583] sm:$0xf]
        %v1629 = vld [vmem:[%s583 + $0x4] sm:$0xf]
        %v1630 = vld [vmem:[%s583 + $0x8] sm:$0xf]
        %v1631 = vld [vmem:[%s583 + $0xc] sm:$0xf]
        %v1632 = vld [vmem:[%s583 + $0x10] sm:$0xf]
        %v1633 = vld [vmem:[%s583 + $0x14] sm:$0xf]
        %v1634 = vld [vmem:[%s583 + $0x18] sm:$0xf]
        %v1635 = vld [vmem:[%s583 + $0x1c] sm:$0xf]
        %v1636 = vld [vmem:[%s583 + $0x20] sm:$0xf]
        %v1637 = vld [vmem:[%s583 + $0x24] sm:$0xf]
        %v1638 = vld [vmem:[%s583 + $0x28] sm:$0xf]
        %v1639 = vld [vmem:[%s583 + $0x2c] sm:$0xf]
        %v1640 = vld [vmem:[%s583 + $0x30] sm:$0xf]
        %v1641 = vld [vmem:[%s583 + $0x34] sm:$0xf]
        %v1642 = vld [vmem:[%s583 + $0x38] sm:$0xf]
        %v1643 = vld [vmem:[%s583 + $0x3c] sm:$0xf]
        %v1644 = vpack.c.bf16 %v1627, %v1626
        %v1645 = vlaneseq
        %v1646 = vshrl.u32 %v1645, 7
        %v1647 = vsub.s32 1, %v1646
        %v1648 = vrot.slane %v891, %v1647
        %v1665 = vunpack.c.l.b16 %v1628
        %v1666 = vunpack.c.l.b16 %v1629
        %v1667 = vunpack.c.l.b16 %v1630
        %v1668 = vunpack.c.l.b16 %v1631
        %v1669 = vunpack.c.l.b16 %v1632
        %v1670 = vunpack.c.l.b16 %v1633
        %v1671 = vunpack.c.l.b16 %v1634
        %v1672 = vunpack.c.l.b16 %v1635
        %v1673 = vunpack.c.l.b16 %v1636
        %v1674 = vunpack.c.l.b16 %v1637
        %v1675 = vunpack.c.l.b16 %v1638
        %v1676 = vunpack.c.l.b16 %v1639
        %v1677 = vunpack.c.l.b16 %v1640
        %v1678 = vunpack.c.l.b16 %v1641
        %v1679 = vunpack.c.l.b16 %v1642
        %v1680 = vunpack.c.l.b16 %v1643
        %v1681 = vpack.c.b16 %v1666, %v1665
        %v1682 = vpack.c.b16 %v1668, %v1667
        %v1683 = vpack.c.b16 %v1670, %v1669
        %v1684 = vpack.c.b16 %v1672, %v1671
        %v1685 = vpack.c.b16 %v1674, %v1673
        %v1686 = vpack.c.b16 %v1676, %v1675
        %v1687 = vpack.c.b16 %v1678, %v1677
        %v1688 = vpack.c.b16 %v1680, %v1679
        %1697 = vmatprep.subr.bf16.mxu0 0
        %1698 = vmatpush1.bf16.msra.mxu0 %v1688
        %1699 = vmatprep.subr.bf16.mxu0 0
        %1700 = vmatpush1.bf16.msra.mxu0 %v1687
        %1701 = vmatprep.subr.bf16.mxu0 0
        %1702 = vmatpush1.bf16.msra.mxu0 %v1686
        %1703 = vmatprep.subr.bf16.mxu0 0
        %1704 = vmatpush1.bf16.msra.mxu0 %v1685
        %1705 = vmatprep.subr.bf16.mxu0 0
        %1706 = vmatpush1.bf16.msra.mxu0 %v1684
        %1707 = vmatprep.subr.bf16.mxu0 0
        %1708 = vmatpush1.bf16.msra.mxu0 %v1683
        %1709 = vmatprep.subr.bf16.mxu0 0
        %1710 = vmatpush1.bf16.msra.mxu0 %v1682
        %1711 = vmatprep.subr.bf16.mxu0 0
        %1712 = vmatpush1.bf16.msra.mxu0 %v1681
        %1713 = vmatprep.subr.bf16.mxu0 0
        %1714 = vmatpush2.bf16.msra.mxu0 0
        %1715 = vmatprep.subr.bf16.mxu0 0
        %1716 = vmatpush2.bf16.msra.mxu0 0
        %1717 = vmatprep.subr.bf16.mxu0 0
        %1718 = vmatpush2.bf16.msra.mxu0 0
        %1719 = vmatprep.subr.bf16.mxu0 0
        %1720 = vmatpush2.bf16.msra.mxu0 0
        %1721 = vmatprep.subr.bf16.mxu0 0
        %1722 = vmatpush2.bf16.msra.mxu0 0
        %1723 = vmatprep.subr.bf16.mxu0 0
        %1724 = vmatpush2.bf16.msra.mxu0 0
        %1725 = vmatprep.subr.bf16.mxu0 0
        %1726 = vmatpush2.bf16.msra.mxu0 0
        %1727 = vmatprep.subr.bf16.mxu0 0
        %1728 = vmatpush2.bf16.msra.mxu0 0
        %1729 = vmatprep.mubr.bf16.mxu0 0
        %1730 = vmatmul.mubr.bf16.gmra.mxu0 %v1644
        %v1731 = vpop.f32.mrf.mxu0
        %v1732 = vadd.f32 %v1648, %v1731
        %v1733 = vpop.f32.mrf.mxu0
        %v1734 = vpop.f32.mrf.mxu0
        %v1735 = vadd.f32 %v1648, %v1734
        %v1736 = vpop.f32.mrf.mxu0
        %1737 = vdwg.mxu0
        %v1738 = vadd.f32 %v1732, %v889
        %v1739 = vadd.f32 %v1735, %v890
        %1740 = vadd.xlane.f32.xlu0 %v1738
        %v1741 = vpop.xlane.xlu0 %1740
        %1742 = vadd.xlane.f32.xlu0 %v1739
        %v1743 = vpop.xlane.xlu0 %1742
        %v1744 = vrcp.pop 128.0
        %v1745 = vmul.f32 %v1741, %v1744
        %v1746 = vmul.f32 %v1743, %v1744
        %v1747 = vsub.f32 %v1738, %v1745
        %v1748 = vsub.f32 %v1739, %v1746
        %v1749 = vmul.f32 %v1747, %v1747
        %v1750 = vmul.f32 %v1748, %v1748
        %1751 = vadd.xlane.f32.xlu0 %v1749
        %v1752 = vpop.xlane.xlu0 %1751
        %1753 = vadd.xlane.f32.xlu0 %v1750
        %v1754 = vpop.xlane.xlu0 %1753
        %v1755 = vmul.f32 %v1752, %v1744
        %v1756 = vmul.f32 %v1754, %v1744
        %v1757 = vadd.f32 %v1755, 1e-12
        %v1758 = vadd.f32 %v1756, 1e-12
        %v1759 = vrsqrt.pop %v1757
        %v1760 = vrsqrt.pop %v1758
        %v1761 = vmul.f32 %v1747, %v1759
        %v1762 = vmul.f32 %v1748, %v1760
        %v1763 = vlaneseq
        %v1764 = vshrl.u32 %v1763, 7
        %v1765 = vsub.s32 2, %v1764
        %v1766 = vrot.slane %v891, %v1765
        %v1767 = vmul.f32 %v1761, %v1766
        %v1768 = vmul.f32 %v1762, %v1766
        %v1769 = vlaneseq
        %v1770 = vshrl.u32 %v1769, 7
        %v1771 = vsub.s32 3, %v1770
        %v1772 = vrot.slane %v891, %v1771
        %v1773 = vadd.f32 %v1767, %v1772
        %v1774 = vadd.f32 %v1768, %v1772
        %v1775 = vld [vmem:[%s592] sm:$0xff]
        %v1776 = vld [vmem:[%s592 + $0x8] sm:$0xff]
        %v1777 = vld [vmem:[%s592 + $0x10] sm:$0xff]
        %v1778 = vld [vmem:[%s592 + $0x18] sm:$0xff]
        %v1779 = vld [vmem:[%s592 + $0x20] sm:$0xff]
        %v1780 = vld [vmem:[%s592 + $0x28] sm:$0xff]
        %v1781 = vld [vmem:[%s592 + $0x30] sm:$0xff]
        %v1782 = vld [vmem:[%s592 + $0x38] sm:$0xff]
        %v1783 = vld [vmem:[%s592 + $0x40] sm:$0xff]
        %v1784 = vld [vmem:[%s592 + $0x48] sm:$0xff]
        %v1785 = vld [vmem:[%s592 + $0x50] sm:$0xff]
        %v1786 = vld [vmem:[%s592 + $0x58] sm:$0xff]
        %v1787 = vld [vmem:[%s592 + $0x60] sm:$0xff]
        %v1788 = vld [vmem:[%s592 + $0x68] sm:$0xff]
        %v1789 = vld [vmem:[%s592 + $0x70] sm:$0xff]
        %v1790 = vld [vmem:[%s592 + $0x78] sm:$0xff]
        %v1791 = vld [vmem:[%s592 + $0x80] sm:$0xff]
        %v1792 = vld [vmem:[%s592 + $0x88] sm:$0xff]
        %v1793 = vld [vmem:[%s592 + $0x90] sm:$0xff]
        %v1794 = vld [vmem:[%s592 + $0x98] sm:$0xff]
        %v1795 = vld [vmem:[%s592 + $0xa0] sm:$0xff]
        %v1796 = vld [vmem:[%s592 + $0xa8] sm:$0xff]
        %v1797 = vld [vmem:[%s592 + $0xb0] sm:$0xff]
        %v1798 = vld [vmem:[%s592 + $0xb8] sm:$0xff]
        %v1799 = vld [vmem:[%s592 + $0xc0] sm:$0xff]
        %v1800 = vld [vmem:[%s592 + $0xc8] sm:$0xff]
        %v1801 = vld [vmem:[%s592 + $0xd0] sm:$0xff]
        %v1802 = vld [vmem:[%s592 + $0xd8] sm:$0xff]
        %v1803 = vld [vmem:[%s592 + $0xe0] sm:$0xff]
        %v1804 = vld [vmem:[%s592 + $0xe8] sm:$0xff]
        %v1805 = vld [vmem:[%s592 + $0xf0] sm:$0xff]
        %v1806 = vld [vmem:[%s592 + $0xf8] sm:$0xff]
        %v1807 = vpack.c.bf16 %v1774, %v1773
        %v1808 = vlaneseq
        %v1809 = vshrl.u32 %v1808, 7
        %v1810 = vsub.s32 4, %v1809
        %v1811 = vrot.slane %v891, %v1810
        %v1812 = vlaneseq
        %v1813 = vshrl.u32 %v1812, 7
        %v1814 = vsub.s32 4, %v1813
        %v1815 = vrot.slane %v892, %v1814
        %v1816 = vlaneseq
        %v1817 = vshrl.u32 %v1816, 7
        %v1818 = vsub.s32 4, %v1817
        %v1819 = vrot.slane %v893, %v1818
        %v1820 = vlaneseq
        %v1821 = vshrl.u32 %v1820, 7
        %v1822 = vsub.s32 4, %v1821
        %v1823 = vrot.slane %v894, %v1822
        %v1856 = vunpack.c.l.b16 %v1775
        %v1857 = vunpack.c.h.b16 %v1775
        %v1858 = vunpack.c.l.b16 %v1776
        %v1859 = vunpack.c.h.b16 %v1776
        %v1860 = vunpack.c.l.b16 %v1777
        %v1861 = vunpack.c.h.b16 %v1777
        %v1862 = vunpack.c.l.b16 %v1778
        %v1863 = vunpack.c.h.b16 %v1778
        %v1864 = vunpack.c.l.b16 %v1779
        %v1865 = vunpack.c.h.b16 %v1779
        %v1866 = vunpack.c.l.b16 %v1780
        %v1867 = vunpack.c.h.b16 %v1780
        %v1868 = vunpack.c.l.b16 %v1781
        %v1869 = vunpack.c.h.b16 %v1781
        %v1870 = vunpack.c.l.b16 %v1782
        %v1871 = vunpack.c.h.b16 %v1782
        %v1872 = vunpack.c.l.b16 %v1783
        %v1873 = vunpack.c.h.b16 %v1783
        %v1874 = vunpack.c.l.b16 %v1784
        %v1875 = vunpack.c.h.b16 %v1784
        %v1876 = vunpack.c.l.b16 %v1785
        %v1877 = vunpack.c.h.b16 %v1785
        %v1878 = vunpack.c.l.b16 %v1786
        %v1879 = vunpack.c.h.b16 %v1786
        %v1880 = vunpack.c.l.b16 %v1787
        %v1881 = vunpack.c.h.b16 %v1787
        %v1882 = vunpack.c.l.b16 %v1788
        %v1883 = vunpack.c.h.b16 %v1788
        %v1884 = vunpack.c.l.b16 %v1789
        %v1885 = vunpack.c.h.b16 %v1789
        %v1886 = vunpack.c.l.b16 %v1790
        %v1887 = vunpack.c.h.b16 %v1790
        %v1888 = vunpack.c.l.b16 %v1791
        %v1889 = vunpack.c.h.b16 %v1791
        %v1890 = vunpack.c.l.b16 %v1792
        %v1891 = vunpack.c.h.b16 %v1792
        %v1892 = vunpack.c.l.b16 %v1793
        %v1893 = vunpack.c.h.b16 %v1793
        %v1894 = vunpack.c.l.b16 %v1794
        %v1895 = vunpack.c.h.b16 %v1794
        %v1896 = vunpack.c.l.b16 %v1795
        %v1897 = vunpack.c.h.b16 %v1795
        %v1898 = vunpack.c.l.b16 %v1796
        %v1899 = vunpack.c.h.b16 %v1796
        %v1900 = vunpack.c.l.b16 %v1797
        %v1901 = vunpack.c.h.b16 %v1797
        %v1902 = vunpack.c.l.b16 %v1798
        %v1903 = vunpack.c.h.b16 %v1798
        %v1904 = vunpack.c.l.b16 %v1799
        %v1905 = vunpack.c.h.b16 %v1799
        %v1906 = vunpack.c.l.b16 %v1800
        %v1907 = vunpack.c.h.b16 %v1800
        %v1908 = vunpack.c.l.b16 %v1801
        %v1909 = vunpack.c.h.b16 %v1801
        %v1910 = vunpack.c.l.b16 %v1802
        %v1911 = vunpack.c.h.b16 %v1802
        %v1912 = vunpack.c.l.b16 %v1803
        %v1913 = vunpack.c.h.b16 %v1803
        %v1914 = vunpack.c.l.b16 %v1804
        %v1915 = vunpack.c.h.b16 %v1804
        %v1916 = vunpack.c.l.b16 %v1805
        %v1917 = vunpack.c.h.b16 %v1805
        %v1918 = vunpack.c.l.b16 %v1806
        %v1919 = vunpack.c.h.b16 %v1806
        %v1920 = vpack.c.b16 %v1860, %v1856
        %v1921 = vpack.c.b16 %v1861, %v1857
        %v1922 = vpack.c.b16 %v1862, %v1858
        %v1923 = vpack.c.b16 %v1863, %v1859
        %v1924 = vpack.c.b16 %v1868, %v1864
        %v1925 = vpack.c.b16 %v1869, %v1865
        %v1926 = vpack.c.b16 %v1870, %v1866
        %v1927 = vpack.c.b16 %v1871, %v1867
        %v1928 = vpack.c.b16 %v1876, %v1872
        %v1929 = vpack.c.b16 %v1877, %v1873
        %v1930 = vpack.c.b16 %v1878, %v1874
        %v1931 = vpack.c.b16 %v1879, %v1875
        %v1932 = vpack.c.b16 %v1884, %v1880
        %v1933 = vpack.c.b16 %v1885, %v1881
        %v1934 = vpack.c.b16 %v1886, %v1882
        %v1935 = vpack.c.b16 %v1887, %v1883
        %v1936 = vpack.c.b16 %v1892, %v1888
        %v1937 = vpack.c.b16 %v1893, %v1889
        %v1938 = vpack.c.b16 %v1894, %v1890
        %v1939 = vpack.c.b16 %v1895, %v1891
        %v1940 = vpack.c.b16 %v1900, %v1896
        %v1941 = vpack.c.b16 %v1901, %v1897
        %v1942 = vpack.c.b16 %v1902, %v1898
        %v1943 = vpack.c.b16 %v1903, %v1899
        %v1944 = vpack.c.b16 %v1908, %v1904
        %v1945 = vpack.c.b16 %v1909, %v1905
        %v1946 = vpack.c.b16 %v1910, %v1906
        %v1947 = vpack.c.b16 %v1911, %v1907
        %v1948 = vpack.c.b16 %v1916, %v1912
        %v1949 = vpack.c.b16 %v1917, %v1913
        %v1950 = vpack.c.b16 %v1918, %v1914
        %v1951 = vpack.c.b16 %v1919, %v1915
        %1984 = vmatprep.subr.bf16.mxu0 %v1949
        %1985 = vmatpush1.bf16.msra.mxu0 %v1948
        %1986 = vmatprep.subr.bf16.mxu0 %v1945
        %1987 = vmatpush1.bf16.msra.mxu0 %v1944
        %1988 = vmatprep.subr.bf16.mxu0 %v1941
        %1989 = vmatpush1.bf16.msra.mxu0 %v1940
        %1990 = vmatprep.subr.bf16.mxu0 %v1937
        %1991 = vmatpush1.bf16.msra.mxu0 %v1936
        %1992 = vmatprep.subr.bf16.mxu0 %v1933
        %1993 = vmatpush1.bf16.msra.mxu0 %v1932
        %1994 = vmatprep.subr.bf16.mxu0 %v1929
        %1995 = vmatpush1.bf16.msra.mxu0 %v1928
        %1996 = vmatprep.subr.bf16.mxu0 %v1925
        %1997 = vmatpush1.bf16.msra.mxu0 %v1924
        %1998 = vmatprep.subr.bf16.mxu0 %v1921
        %1999 = vmatpush1.bf16.msra.mxu0 %v1920
        %2000 = vmatprep.subr.bf16.mxu0 0
        %2001 = vmatpush2.bf16.msra.mxu0 0
        %2002 = vmatprep.subr.bf16.mxu0 0
        %2003 = vmatpush2.bf16.msra.mxu0 0
        %2004 = vmatprep.subr.bf16.mxu0 0
        %2005 = vmatpush2.bf16.msra.mxu0 0
        %2006 = vmatprep.subr.bf16.mxu0 0
        %2007 = vmatpush2.bf16.msra.mxu0 0
        %2008 = vmatprep.subr.bf16.mxu0 0
        %2009 = vmatpush2.bf16.msra.mxu0 0
        %2010 = vmatprep.subr.bf16.mxu0 0
        %2011 = vmatpush2.bf16.msra.mxu0 0
        %2012 = vmatprep.subr.bf16.mxu0 0
        %2013 = vmatpush2.bf16.msra.mxu0 0
        %2014 = vmatprep.subr.bf16.mxu0 0
        %2015 = vmatpush2.bf16.msra.mxu0 0
        %2016 = vmatprep.mubr.bf16.mxu0 0
        %2017 = vmatmul.mubr.bf16.gmra.mxu0 %v1807
        %v2018 = vpop.f32.mrf.mxu0
        %v2019 = vadd.f32 %v1811, %v2018
        %v2020 = vpop.f32.mrf.mxu0
        %v2021 = vadd.f32 %v1815, %v2020
        %v2022 = vpop.f32.mrf.mxu0
        %v2023 = vadd.f32 %v1811, %v2022
        %v2024 = vpop.f32.mrf.mxu0
        %v2025 = vadd.f32 %v1815, %v2024
        %2026 = vdwg.mxu0
        %2027 = vmatprep.subr.bf16.mxu0 %v1951
        %2028 = vmatpush1.bf16.msra.mxu0 %v1950
        %2029 = vmatprep.subr.bf16.mxu0 %v1947
        %2030 = vmatpush1.bf16.msra.mxu0 %v1946
        %2031 = vmatprep.subr.bf16.mxu0 %v1943
        %2032 = vmatpush1.bf16.msra.mxu0 %v1942
        %2033 = vmatprep.subr.bf16.mxu0 %v1939
        %2034 = vmatpush1.bf16.msra.mxu0 %v1938
        %2035 = vmatprep.subr.bf16.mxu0 %v1935
        %2036 = vmatpush1.bf16.msra.mxu0 %v1934
        %2037 = vmatprep.subr.bf16.mxu0 %v1931
        %2038 = vmatpush1.bf16.msra.mxu0 %v1930
        %2039 = vmatprep.subr.bf16.mxu0 %v1927
        %2040 = vmatpush1.bf16.msra.mxu0 %v1926
        %2041 = vmatprep.subr.bf16.mxu0 %v1923
        %2042 = vmatpush1.bf16.msra.mxu0 %v1922
        %2043 = vmatprep.subr.bf16.mxu0 0
        %2044 = vmatpush2.bf16.msra.mxu0 0
        %2045 = vmatprep.subr.bf16.mxu0 0
        %2046 = vmatpush2.bf16.msra.mxu0 0
        %2047 = vmatprep.subr.bf16.mxu0 0
        %2048 = vmatpush2.bf16.msra.mxu0 0
        %2049 = vmatprep.subr.bf16.mxu0 0
        %2050 = vmatpush2.bf16.msra.mxu0 0
        %2051 = vmatprep.subr.bf16.mxu0 0
        %2052 = vmatpush2.bf16.msra.mxu0 0
        %2053 = vmatprep.subr.bf16.mxu0 0
        %2054 = vmatpush2.bf16.msra.mxu0 0
        %2055 = vmatprep.subr.bf16.mxu0 0
        %2056 = vmatpush2.bf16.msra.mxu0 0
        %2057 = vmatprep.subr.bf16.mxu0 0
        %2058 = vmatpush2.bf16.msra.mxu0 0
        %2059 = vmatprep.mubr.bf16.mxu0 0
        %2060 = vmatmul.mubr.bf16.gmra.mxu0 %v1807
        %v2061 = vpop.f32.mrf.mxu0
        %v2062 = vadd.f32 %v1819, %v2061
        %v2063 = vpop.f32.mrf.mxu0
        %v2064 = vadd.f32 %v1823, %v2063
        %v2065 = vpop.f32.mrf.mxu0
        %v2066 = vadd.f32 %v1819, %v2065
        %v2067 = vpop.f32.mrf.mxu0
        %v2068 = vadd.f32 %v1823, %v2067
        %2069 = vdwg.mxu0
        %v2070 = vmul.f32 %v2019, 0.5
        %v2071 = vmul.f32 %v2021, 0.5
        %v2072 = vmul.f32 %v2062, 0.5
        %v2073 = vmul.f32 %v2064, 0.5
        %v2074 = vmul.f32 %v2023, 0.5
        %v2075 = vmul.f32 %v2025, 0.5
        %v2076 = vmul.f32 %v2066, 0.5
        %v2077 = vmul.f32 %v2068, 0.5
        %v2078 = vmul.f32 %v2019, 0.044715
        %v2079 = vmul.f32 %v2021, 0.044715
        %v2080 = vmul.f32 %v2062, 0.044715
        %v2081 = vmul.f32 %v2064, 0.044715
        %v2082 = vmul.f32 %v2023, 0.044715
        %v2083 = vmul.f32 %v2025, 0.044715
        %v2084 = vmul.f32 %v2066, 0.044715
        %v2085 = vmul.f32 %v2068, 0.044715
        %v2086 = vmul.f32 %v2078, %v2019
        %v2087 = vmul.f32 %v2079, %v2021
        %v2088 = vmul.f32 %v2080, %v2062
        %v2089 = vmul.f32 %v2081, %v2064
        %v2090 = vmul.f32 %v2082, %v2023
        %v2091 = vmul.f32 %v2083, %v2025
        %v2092 = vmul.f32 %v2084, %v2066
        %v2093 = vmul.f32 %v2085, %v2068
        %v2094 = vmul.f32 %v2086, %v2019
        %v2095 = vmul.f32 %v2087, %v2021
        %v2096 = vmul.f32 %v2088, %v2062
        %v2097 = vmul.f32 %v2089, %v2064
        %v2098 = vmul.f32 %v2090, %v2023
        %v2099 = vmul.f32 %v2091, %v2025
        %v2100 = vmul.f32 %v2092, %v2066
        %v2101 = vmul.f32 %v2093, %v2068
        %v2102 = vadd.f32 %v2019, %v2094
        %v2103 = vadd.f32 %v2021, %v2095
        %v2104 = vadd.f32 %v2062, %v2096
        %v2105 = vadd.f32 %v2064, %v2097
        %v2106 = vadd.f32 %v2023, %v2098
        %v2107 = vadd.f32 %v2025, %v2099
        %v2108 = vadd.f32 %v2066, %v2100
        %v2109 = vadd.f32 %v2068, %v2101
        %v2110 = vmul.f32 %v2102, 0.7978846
        %v2111 = vmul.f32 %v2103, 0.7978846
        %v2112 = vmul.f32 %v2104, 0.7978846
        %v2113 = vmul.f32 %v2105, 0.7978846
        %v2114 = vmul.f32 %v2106, 0.7978846
        %v2115 = vmul.f32 %v2107, 0.7978846
        %v2116 = vmul.f32 %v2108, 0.7978846
        %v2117 = vmul.f32 %v2109, 0.7978846
        %v2118 = vtanh.pop %v2110
        %v2119 = vtanh.pop %v2111
        %v2120 = vtanh.pop %v2112
        %v2121 = vtanh.pop %v2113
        %v2122 = vtanh.pop %v2114
        %v2123 = vtanh.pop %v2115
        %v2124 = vtanh.pop %v2116
        %v2125 = vtanh.pop %v2117
        %v2126 = vadd.f32 %v2118, 1.0
        %v2127 = vadd.f32 %v2119, 1.0
        %v2128 = vadd.f32 %v2120, 1.0
        %v2129 = vadd.f32 %v2121, 1.0
        %v2130 = vadd.f32 %v2122, 1.0
        %v2131 = vadd.f32 %v2123, 1.0
        %v2132 = vadd.f32 %v2124, 1.0
        %v2133 = vadd.f32 %v2125, 1.0
        %v2134 = vmul.f32 %v2070, %v2126
        %v2135 = vmul.f32 %v2071, %v2127
        %v2136 = vmul.f32 %v2072, %v2128
        %v2137 = vmul.f32 %v2073, %v2129
        %v2138 = vmul.f32 %v2074, %v2130
        %v2139 = vmul.f32 %v2075, %v2131
        %v2140 = vmul.f32 %v2076, %v2132
        %v2141 = vmul.f32 %v2077, %v2133
        %v2142 = vld [vmem:[%s601] sm:$0xf]
        %v2143 = vld [vmem:[%s601 + $0x4] sm:$0xf]
        %v2144 = vld [vmem:[%s601 + $0x8] sm:$0xf]
        %v2145 = vld [vmem:[%s601 + $0xc] sm:$0xf]
        %v2146 = vld [vmem:[%s601 + $0x10] sm:$0xf]
        %v2147 = vld [vmem:[%s601 + $0x14] sm:$0xf]
        %v2148 = vld [vmem:[%s601 + $0x18] sm:$0xf]
        %v2149 = vld [vmem:[%s601 + $0x1c] sm:$0xf]
        %v2150 = vld [vmem:[%s601 + $0x20] sm:$0xf]
        %v2151 = vld [vmem:[%s601 + $0x24] sm:$0xf]
        %v2152 = vld [vmem:[%s601 + $0x28] sm:$0xf]
        %v2153 = vld [vmem:[%s601 + $0x2c] sm:$0xf]
        %v2154 = vld [vmem:[%s601 + $0x30] sm:$0xf]
        %v2155 = vld [vmem:[%s601 + $0x34] sm:$0xf]
        %v2156 = vld [vmem:[%s601 + $0x38] sm:$0xf]
        %v2157 = vld [vmem:[%s601 + $0x3c] sm:$0xf]
        %v2158 = vld [vmem:[%s601 + $0x40] sm:$0xf]
        %v2159 = vld [vmem:[%s601 + $0x44] sm:$0xf]
        %v2160 = vld [vmem:[%s601 + $0x48] sm:$0xf]
        %v2161 = vld [vmem:[%s601 + $0x4c] sm:$0xf]
        %v2162 = vld [vmem:[%s601 + $0x50] sm:$0xf]
        %v2163 = vld [vmem:[%s601 + $0x54] sm:$0xf]
        %v2164 = vld [vmem:[%s601 + $0x58] sm:$0xf]
        %v2165 = vld [vmem:[%s601 + $0x5c] sm:$0xf]
        %v2166 = vld [vmem:[%s601 + $0x60] sm:$0xf]
        %v2167 = vld [vmem:[%s601 + $0x64] sm:$0xf]
        %v2168 = vld [vmem:[%s601 + $0x68] sm:$0xf]
        %v2169 = vld [vmem:[%s601 + $0x6c] sm:$0xf]
        %v2170 = vld [vmem:[%s601 + $0x70] sm:$0xf]
        %v2171 = vld [vmem:[%s601 + $0x74] sm:$0xf]
        %v2172 = vld [vmem:[%s601 + $0x78] sm:$0xf]
        %v2173 = vld [vmem:[%s601 + $0x7c] sm:$0xf]
        %v2174 = vld [vmem:[%s601 + $0x80] sm:$0xf]
        %v2175 = vld [vmem:[%s601 + $0x84] sm:$0xf]
        %v2176 = vld [vmem:[%s601 + $0x88] sm:$0xf]
        %v2177 = vld [vmem:[%s601 + $0x8c] sm:$0xf]
        %v2178 = vld [vmem:[%s601 + $0x90] sm:$0xf]
        %v2179 = vld [vmem:[%s601 + $0x94] sm:$0xf]
        %v2180 = vld [vmem:[%s601 + $0x98] sm:$0xf]
        %v2181 = vld [vmem:[%s601 + $0x9c] sm:$0xf]
        %v2182 = vld [vmem:[%s601 + $0xa0] sm:$0xf]
        %v2183 = vld [vmem:[%s601 + $0xa4] sm:$0xf]
        %v2184 = vld [vmem:[%s601 + $0xa8] sm:$0xf]
        %v2185 = vld [vmem:[%s601 + $0xac] sm:$0xf]
        %v2186 = vld [vmem:[%s601 + $0xb0] sm:$0xf]
        %v2187 = vld [vmem:[%s601 + $0xb4] sm:$0xf]
        %v2188 = vld [vmem:[%s601 + $0xb8] sm:$0xf]
        %v2189 = vld [vmem:[%s601 + $0xbc] sm:$0xf]
        %v2190 = vld [vmem:[%s601 + $0xc0] sm:$0xf]
        %v2191 = vld [vmem:[%s601 + $0xc4] sm:$0xf]
        %v2192 = vld [vmem:[%s601 + $0xc8] sm:$0xf]
        %v2193 = vld [vmem:[%s601 + $0xcc] sm:$0xf]
        %v2194 = vld [vmem:[%s601 + $0xd0] sm:$0xf]
        %v2195 = vld [vmem:[%s601 + $0xd4] sm:$0xf]
        %v2196 = vld [vmem:[%s601 + $0xd8] sm:$0xf]
        %v2197 = vld [vmem:[%s601 + $0xdc] sm:$0xf]
        %v2198 = vld [vmem:[%s601 + $0xe0] sm:$0xf]
        %v2199 = vld [vmem:[%s601 + $0xe4] sm:$0xf]
        %v2200 = vld [vmem:[%s601 + $0xe8] sm:$0xf]
        %v2201 = vld [vmem:[%s601 + $0xec] sm:$0xf]
        %v2202 = vld [vmem:[%s601 + $0xf0] sm:$0xf]
        %v2203 = vld [vmem:[%s601 + $0xf4] sm:$0xf]
        %v2204 = vld [vmem:[%s601 + $0xf8] sm:$0xf]
        %v2205 = vld [vmem:[%s601 + $0xfc] sm:$0xf]
        %v2206 = vpack.c.bf16 %v2138, %v2134
        %v2207 = vpack.c.bf16 %v2139, %v2135
        %v2208 = vpack.c.bf16 %v2140, %v2136
        %v2209 = vpack.c.bf16 %v2141, %v2137
        %v2210 = vlaneseq
        %v2211 = vshrl.u32 %v2210, 7
        %v2212 = vsub.s32 5, %v2211
        %v2213 = vrot.slane %v891, %v2212
        %v2278 = vunpack.c.l.b16 %v2142
        %v2279 = vunpack.c.l.b16 %v2143
        %v2280 = vunpack.c.l.b16 %v2144
        %v2281 = vunpack.c.l.b16 %v2145
        %v2282 = vunpack.c.l.b16 %v2146
        %v2283 = vunpack.c.l.b16 %v2147
        %v2284 = vunpack.c.l.b16 %v2148
        %v2285 = vunpack.c.l.b16 %v2149
        %v2286 = vunpack.c.l.b16 %v2150
        %v2287 = vunpack.c.l.b16 %v2151
        %v2288 = vunpack.c.l.b16 %v2152
        %v2289 = vunpack.c.l.b16 %v2153
        %v2290 = vunpack.c.l.b16 %v2154
        %v2291 = vunpack.c.l.b16 %v2155
        %v2292 = vunpack.c.l.b16 %v2156
        %v2293 = vunpack.c.l.b16 %v2157
        %v2294 = vunpack.c.l.b16 %v2158
        %v2295 = vunpack.c.l.b16 %v2159
        %v2296 = vunpack.c.l.b16 %v2160
        %v2297 = vunpack.c.l.b16 %v2161
        %v2298 = vunpack.c.l.b16 %v2162
        %v2299 = vunpack.c.l.b16 %v2163
        %v2300 = vunpack.c.l.b16 %v2164
        %v2301 = vunpack.c.l.b16 %v2165
        %v2302 = vunpack.c.l.b16 %v2166
        %v2303 = vunpack.c.l.b16 %v2167
        %v2304 = vunpack.c.l.b16 %v2168
        %v2305 = vunpack.c.l.b16 %v2169
        %v2306 = vunpack.c.l.b16 %v2170
        %v2307 = vunpack.c.l.b16 %v2171
        %v2308 = vunpack.c.l.b16 %v2172
        %v2309 = vunpack.c.l.b16 %v2173
        %v2310 = vunpack.c.l.b16 %v2174
        %v2311 = vunpack.c.l.b16 %v2175
        %v2312 = vunpack.c.l.b16 %v2176
        %v2313 = vunpack.c.l.b16 %v2177
        %v2314 = vunpack.c.l.b16 %v2178
        %v2315 = vunpack.c.l.b16 %v2179
        %v2316 = vunpack.c.l.b16 %v2180
        %v2317 = vunpack.c.l.b16 %v2181
        %v2318 = vunpack.c.l.b16 %v2182
        %v2319 = vunpack.c.l.b16 %v2183
        %v2320 = vunpack.c.l.b16 %v2184
        %v2321 = vunpack.c.l.b16 %v2185
        %v2322 = vunpack.c.l.b16 %v2186
        %v2323 = vunpack.c.l.b16 %v2187
        %v2324 = vunpack.c.l.b16 %v2188
        %v2325 = vunpack.c.l.b16 %v2189
        %v2326 = vunpack.c.l.b16 %v2190
        %v2327 = vunpack.c.l.b16 %v2191
        %v2328 = vunpack.c.l.b16 %v2192
        %v2329 = vunpack.c.l.b16 %v2193
        %v2330 = vunpack.c.l.b16 %v2194
        %v2331 = vunpack.c.l.b16 %v2195
        %v2332 = vunpack.c.l.b16 %v2196
        %v2333 = vunpack.c.l.b16 %v2197
        %v2334 = vunpack.c.l.b16 %v2198
        %v2335 = vunpack.c.l.b16 %v2199
        %v2336 = vunpack.c.l.b16 %v2200
        %v2337 = vunpack.c.l.b16 %v2201
        %v2338 = vunpack.c.l.b16 %v2202
        %v2339 = vunpack.c.l.b16 %v2203
        %v2340 = vunpack.c.l.b16 %v2204
        %v2341 = vunpack.c.l.b16 %v2205
        %v2342 = vpack.c.b16 %v2279, %v2278
        %v2343 = vpack.c.b16 %v2281, %v2280
        %v2344 = vpack.c.b16 %v2283, %v2282
        %v2345 = vpack.c.b16 %v2285, %v2284
        %v2346 = vpack.c.b16 %v2287, %v2286
        %v2347 = vpack.c.b16 %v2289, %v2288
        %v2348 = vpack.c.b16 %v2291, %v2290
        %v2349 = vpack.c.b16 %v2293, %v2292
        %v2350 = vpack.c.b16 %v2295, %v2294
        %v2351 = vpack.c.b16 %v2297, %v2296
        %v2352 = vpack.c.b16 %v2299, %v2298
        %v2353 = vpack.c.b16 %v2301, %v2300
        %v2354 = vpack.c.b16 %v2303, %v2302
        %v2355 = vpack.c.b16 %v2305, %v2304
        %v2356 = vpack.c.b16 %v2307, %v2306
        %v2357 = vpack.c.b16 %v2309, %v2308
        %v2358 = vpack.c.b16 %v2311, %v2310
        %v2359 = vpack.c.b16 %v2313, %v2312
        %v2360 = vpack.c.b16 %v2315, %v2314
        %v2361 = vpack.c.b16 %v2317, %v2316
        %v2362 = vpack.c.b16 %v2319, %v2318
        %v2363 = vpack.c.b16 %v2321, %v2320
        %v2364 = vpack.c.b16 %v2323, %v2322
        %v2365 = vpack.c.b16 %v2325, %v2324
        %v2366 = vpack.c.b16 %v2327, %v2326
        %v2367 = vpack.c.b16 %v2329, %v2328
        %v2368 = vpack.c.b16 %v2331, %v2330
        %v2369 = vpack.c.b16 %v2333, %v2332
        %v2370 = vpack.c.b16 %v2335, %v2334
        %v2371 = vpack.c.b16 %v2337, %v2336
        %v2372 = vpack.c.b16 %v2339, %v2338
        %v2373 = vpack.c.b16 %v2341, %v2340
        %2406 = vmatprep.subr.bf16.mxu0 0
        %2407 = vmatpush1.bf16.msra.mxu0 %v2349
        %2408 = vmatprep.subr.bf16.mxu0 0
        %2409 = vmatpush1.bf16.msra.mxu0 %v2348
        %2410 = vmatprep.subr.bf16.mxu0 0
        %2411 = vmatpush1.bf16.msra.mxu0 %v2347
        %2412 = vmatprep.subr.bf16.mxu0 0
        %2413 = vmatpush1.bf16.msra.mxu0 %v2346
        %2414 = vmatprep.subr.bf16.mxu0 0
        %2415 = vmatpush1.bf16.msra.mxu0 %v2345
        %2416 = vmatprep.subr.bf16.mxu0 0
        %2417 = vmatpush1.bf16.msra.mxu0 %v2344
        %2418 = vmatprep.subr.bf16.mxu0 0
        %2419 = vmatpush1.bf16.msra.mxu0 %v2343
        %2420 = vmatprep.subr.bf16.mxu0 0
        %2421 = vmatpush1.bf16.msra.mxu0 %v2342
        %2422 = vmatprep.subr.bf16.mxu0 0
        %2423 = vmatpush2.bf16.msra.mxu0 %v2357
        %2424 = vmatprep.subr.bf16.mxu0 0
        %2425 = vmatpush2.bf16.msra.mxu0 %v2356
        %2426 = vmatprep.subr.bf16.mxu0 0
        %2427 = vmatpush2.bf16.msra.mxu0 %v2355
        %2428 = vmatprep.subr.bf16.mxu0 0
        %2429 = vmatpush2.bf16.msra.mxu0 %v2354
        %2430 = vmatprep.subr.bf16.mxu0 0
        %2431 = vmatpush2.bf16.msra.mxu0 %v2353
        %2432 = vmatprep.subr.bf16.mxu0 0
        %2433 = vmatpush2.bf16.msra.mxu0 %v2352
        %2434 = vmatprep.subr.bf16.mxu0 0
        %2435 = vmatpush2.bf16.msra.mxu0 %v2351
        %2436 = vmatprep.subr.bf16.mxu0 0
        %2437 = vmatpush2.bf16.msra.mxu0 %v2350
        %2438 = vmatprep.mubr.bf16.mxu0 %v2207
        %2439 = vmatmul.mubr.bf16.gmra.mxu0 %v2206
        %v2440 = vpop.f32.mrf.mxu0
        %v2441 = vadd.f32 %v2213, %v2440
        %v2442 = vpop.f32.mrf.mxu0
        %v2443 = vpop.f32.mrf.mxu0
        %v2444 = vadd.f32 %v2213, %v2443
        %v2445 = vpop.f32.mrf.mxu0
        %2446 = vdwg.mxu0
        %2447 = vmatprep.subr.bf16.mxu0 0
        %2448 = vmatpush1.bf16.msra.mxu0 %v2365
        %2449 = vmatprep.subr.bf16.mxu0 0
        %2450 = vmatpush1.bf16.msra.mxu0 %v2364
        %2451 = vmatprep.subr.bf16.mxu0 0
        %2452 = vmatpush1.bf16.msra.mxu0 %v2363
        %2453 = vmatprep.subr.bf16.mxu0 0
        %2454 = vmatpush1.bf16.msra.mxu0 %v2362
        %2455 = vmatprep.subr.bf16.mxu0 0
        %2456 = vmatpush1.bf16.msra.mxu0 %v2361
        %2457 = vmatprep.subr.bf16.mxu0 0
        %2458 = vmatpush1.bf16.msra.mxu0 %v2360
        %2459 = vmatprep.subr.bf16.mxu0 0
        %2460 = vmatpush1.bf16.msra.mxu0 %v2359
        %2461 = vmatprep.subr.bf16.mxu0 0
        %2462 = vmatpush1.bf16.msra.mxu0 %v2358
        %2463 = vmatprep.subr.bf16.mxu0 0
        %2464 = vmatpush2.bf16.msra.mxu0 %v2373
        %2465 = vmatprep.subr.bf16.mxu0 0
        %2466 = vmatpush2.bf16.msra.mxu0 %v2372
        %2467 = vmatprep.subr.bf16.mxu0 0
        %2468 = vmatpush2.bf16.msra.mxu0 %v2371
        %2469 = vmatprep.subr.bf16.mxu0 0
        %2470 = vmatpush2.bf16.msra.mxu0 %v2370
        %2471 = vmatprep.subr.bf16.mxu0 0
        %2472 = vmatpush2.bf16.msra.mxu0 %v2369
        %2473 = vmatprep.subr.bf16.mxu0 0
        %2474 = vmatpush2.bf16.msra.mxu0 %v2368
        %2475 = vmatprep.subr.bf16.mxu0 0
        %2476 = vmatpush2.bf16.msra.mxu0 %v2367
        %2477 = vmatprep.subr.bf16.mxu0 0
        %2478 = vmatpush2.bf16.msra.mxu0 %v2366
        %2479 = vmatprep.mubr.bf16.mxu0 %v2209
        %2480 = vmatmul.mubr.bf16.gmra.mxu0 %v2208
        %v2481 = vpop.f32.mrf.mxu0
        %v2482 = vadd.f32 %v2441, %v2481
        %v2483 = vpop.f32.mrf.mxu0
        %v2484 = vpop.f32.mrf.mxu0
        %v2485 = vadd.f32 %v2444, %v2484
        %v2486 = vpop.f32.mrf.mxu0
        %2487 = vdwg.mxu0
        %v2488 = vadd.f32 %v2482, %v1773
        %v2489 = vadd.f32 %v2485, %v1774
        %2490 = vadd.xlane.f32.xlu0 %v2488
        %v2491 = vpop.xlane.xlu0 %2490
        %2492 = vadd.xlane.f32.xlu0 %v2489
        %v2493 = vpop.xlane.xlu0 %2492
        %v2494 = vmul.f32 %v2491, %v1744
        %v2495 = vmul.f32 %v2493, %v1744
        %v2496 = vsub.f32 %v2488, %v2494
        %v2497 = vsub.f32 %v2489, %v2495
        %v2498 = vmul.f32 %v2496, %v2496
        %v2499 = vmul.f32 %v2497, %v2497
        %2500 = vadd.xlane.f32.xlu0 %v2498
        %v2501 = vpop.xlane.xlu0 %2500
        %2502 = vadd.xlane.f32.xlu0 %v2499
        %v2503 = vpop.xlane.xlu0 %2502
        %v2504 = vmul.f32 %v2501, %v1744
        %v2505 = vmul.f32 %v2503, %v1744
        %v2506 = vadd.f32 %v2504, 1e-12
        %v2507 = vadd.f32 %v2505, 1e-12
        %v2508 = vrsqrt.pop %v2506
        %v2509 = vrsqrt.pop %v2507
        %v2510 = vmul.f32 %v2496, %v2508
        %v2511 = vmul.f32 %v2497, %v2509
        %v2512 = vlaneseq
        %v2513 = vshrl.u32 %v2512, 7
        %v2514 = vsub.s32 6, %v2513
        %v2515 = vrot.slane %v891, %v2514
        %v2516 = vmul.f32 %v2510, %v2515
        %v2517 = vmul.f32 %v2511, %v2515
        %v2518 = vlaneseq
        %v2519 = vshrl.u32 %v2518, 7
        %v2520 = vsub.s32 7, %v2519
        %v2521 = vrot.slane %v891, %v2520
        %v2522 = vadd.f32 %v2516, %v2521
        %v2523 = vadd.f32 %v2517, %v2521
        %2524 = vst [vmem:[#allocation2] sm:$0xff] %v2522
        %2525 = vst [vmem:[#allocation2 + $0x8] sm:$0xff] %v2523
        %p2526 = scmp.eq.s32.totalorder %s37, 1
        // Predicated region
        $region113: #{bert_class_forward.1} parent=75 // pred_check
          %p2527 = pneg %p2526
        $region114: #{bert_class_forward.1} parent=75 // pred_check_branch
          %2529 = sbr.rel (%p2527) target = $region116
        $region115: #{bert_class_forward.1} parent=75 // pred_region
          %v2530 = vld [vmem:[%s6] sm:$0xf]
          %v2531 = vld [vmem:[#allocation2] ss:$8 sm:$0x3]
          %v2532 = vld [vmem:[#allocation7] sm:$0xf]
          %v2533 = vld [vmem:[#allocation7 + $0x4] sm:$0xf]
          %v2534 = vld [vmem:[#allocation7 + $0x8] sm:$0xf]
          %v2535 = vld [vmem:[#allocation7 + $0xc] sm:$0xf]
          %v2536 = vld [vmem:[#allocation7 + $0x10] sm:$0xf]
          %v2537 = vld [vmem:[#allocation7 + $0x14] sm:$0xf]
          %v2538 = vld [vmem:[#allocation7 + $0x18] sm:$0xf]
          %v2539 = vld [vmem:[#allocation7 + $0x1c] sm:$0xf]
          %v2540 = vld [vmem:[#allocation7 + $0x20] sm:$0xf]
          %v2541 = vld [vmem:[#allocation7 + $0x24] sm:$0xf]
          %v2542 = vld [vmem:[#allocation7 + $0x28] sm:$0xf]
          %v2543 = vld [vmem:[#allocation7 + $0x2c] sm:$0xf]
          %v2544 = vld [vmem:[#allocation7 + $0x30] sm:$0xf]
          %v2545 = vld [vmem:[#allocation7 + $0x34] sm:$0xf]
          %v2546 = vld [vmem:[#allocation7 + $0x38] sm:$0xf]
          %v2547 = vld [vmem:[#allocation7 + $0x3c] sm:$0xf]
          %v2548 = vpack.c.bf16 %v2531, %v2531
          %v2549 = vlaneseq
          %v2550 = vshrl.u32 %v2549, 7
          %v2551 = vsub.s32 2, %v2550
          %v2552 = vrot.slane %v2530, %v2551
          %v2569 = vunpack.c.l.b16 %v2532
          %v2570 = vunpack.c.l.b16 %v2533
          %v2571 = vunpack.c.l.b16 %v2534
          %v2572 = vunpack.c.l.b16 %v2535
          %v2573 = vunpack.c.l.b16 %v2536
          %v2574 = vunpack.c.l.b16 %v2537
          %v2575 = vunpack.c.l.b16 %v2538
          %v2576 = vunpack.c.l.b16 %v2539
          %v2577 = vunpack.c.l.b16 %v2540
          %v2578 = vunpack.c.l.b16 %v2541
          %v2579 = vunpack.c.l.b16 %v2542
          %v2580 = vunpack.c.l.b16 %v2543
          %v2581 = vunpack.c.l.b16 %v2544
          %v2582 = vunpack.c.l.b16 %v2545
          %v2583 = vunpack.c.l.b16 %v2546
          %v2584 = vunpack.c.l.b16 %v2547
          %v2585 = vpack.c.b16 %v2570, %v2569
          %v2586 = vpack.c.b16 %v2572, %v2571
          %v2587 = vpack.c.b16 %v2574, %v2573
          %v2588 = vpack.c.b16 %v2576, %v2575
          %v2589 = vpack.c.b16 %v2578, %v2577
          %v2590 = vpack.c.b16 %v2580, %v2579
          %v2591 = vpack.c.b16 %v2582, %v2581
          %v2592 = vpack.c.b16 %v2584, %v2583
          %2601 = vmatprep.subr.bf16.mxu0 0
          %2602 = vmatpush1.bf16.msra.mxu0 %v2592
          %2603 = vmatprep.subr.bf16.mxu0 0
          %2604 = vmatpush1.bf16.msra.mxu0 %v2591
          %2605 = vmatprep.subr.bf16.mxu0 0
          %2606 = vmatpush1.bf16.msra.mxu0 %v2590
          %2607 = vmatprep.subr.bf16.mxu0 0
          %2608 = vmatpush1.bf16.msra.mxu0 %v2589
          %2609 = vmatprep.subr.bf16.mxu0 0
          %2610 = vmatpush1.bf16.msra.mxu0 %v2588
          %2611 = vmatprep.subr.bf16.mxu0 0
          %2612 = vmatpush1.bf16.msra.mxu0 %v2587
          %2613 = vmatprep.subr.bf16.mxu0 0
          %2614 = vmatpush1.bf16.msra.mxu0 %v2586
          %2615 = vmatprep.subr.bf16.mxu0 0
          %2616 = vmatpush1.bf16.msra.mxu0 %v2585
          %2617 = vmatprep.subr.bf16.mxu0 0
          %2618 = vmatpush2.bf16.msra.mxu0 0
          %2619 = vmatprep.subr.bf16.mxu0 0
          %2620 = vmatpush2.bf16.msra.mxu0 0
          %2621 = vmatprep.subr.bf16.mxu0 0
          %2622 = vmatpush2.bf16.msra.mxu0 0
          %2623 = vmatprep.subr.bf16.mxu0 0
          %2624 = vmatpush2.bf16.msra.mxu0 0
          %2625 = vmatprep.subr.bf16.mxu0 0
          %2626 = vmatpush2.bf16.msra.mxu0 0
          %2627 = vmatprep.subr.bf16.mxu0 0
          %2628 = vmatpush2.bf16.msra.mxu0 0
          %2629 = vmatprep.subr.bf16.mxu0 0
          %2630 = vmatpush2.bf16.msra.mxu0 0
          %2631 = vmatprep.subr.bf16.mxu0 0
          %2632 = vmatpush2.bf16.msra.mxu0 0
          %2633 = vmatprep.mubr.bf16.mxu0 0
          %2634 = vmatmul.mubr.bf16.gmra.mxu0 %v2548
          %v2635 = vpop.f32.mrf.mxu0
          %v2636 = vadd.f32 %v2552, %v2635
          %v2637 = vpop.f32.mrf.mxu0
          %v2638 = vpop.f32.mrf.mxu0
          %v2639 = vpop.f32.mrf.mxu0
          %2640 = vdwg.mxu0
          %v2641 = vtanh.pop %v2636
          %v2642 = vld [vmem:[#allocation9] sm:$0xf]
          %v2643 = vld [vmem:[#allocation9 + $0x4] sm:$0xf]
          %v2644 = vld [vmem:[#allocation9 + $0x8] sm:$0xf]
          %v2645 = vld [vmem:[#allocation9 + $0xc] sm:$0xf]
          %v2646 = vld [vmem:[#allocation9 + $0x10] sm:$0xf]
          %v2647 = vld [vmem:[#allocation9 + $0x14] sm:$0xf]
          %v2648 = vld [vmem:[#allocation9 + $0x18] sm:$0xf]
          %v2649 = vld [vmem:[#allocation9 + $0x1c] sm:$0xf]
          %v2650 = vld [vmem:[#allocation9 + $0x20] sm:$0xf]
          %v2651 = vld [vmem:[#allocation9 + $0x24] sm:$0xf]
          %v2652 = vld [vmem:[#allocation9 + $0x28] sm:$0xf]
          %v2653 = vld [vmem:[#allocation9 + $0x2c] sm:$0xf]
          %v2654 = vld [vmem:[#allocation9 + $0x30] sm:$0xf]
          %v2655 = vld [vmem:[#allocation9 + $0x34] sm:$0xf]
          %v2656 = vld [vmem:[#allocation9 + $0x38] sm:$0xf]
          %v2657 = vld [vmem:[#allocation9 + $0x3c] sm:$0xf]
          %v2658 = vpack.c.bf16 %v2641, %v2641
          %v2659 = vlaneseq
          %v2660 = vshrl.u32 %v2659, 7
          %v2661 = vsub.s32 3, %v2660
          %v2662 = vrot.slane %v2530, %v2661
          %v2679 = vunpack.c.l.b16 %v2642
          %v2680 = vunpack.c.l.b16 %v2643
          %v2681 = vunpack.c.l.b16 %v2644
          %v2682 = vunpack.c.l.b16 %v2645
          %v2683 = vunpack.c.l.b16 %v2646
          %v2684 = vunpack.c.l.b16 %v2647
          %v2685 = vunpack.c.l.b16 %v2648
          %v2686 = vunpack.c.l.b16 %v2649
          %v2687 = vunpack.c.l.b16 %v2650
          %v2688 = vunpack.c.l.b16 %v2651
          %v2689 = vunpack.c.l.b16 %v2652
          %v2690 = vunpack.c.l.b16 %v2653
          %v2691 = vunpack.c.l.b16 %v2654
          %v2692 = vunpack.c.l.b16 %v2655
          %v2693 = vunpack.c.l.b16 %v2656
          %v2694 = vunpack.c.l.b16 %v2657
          %v2695 = vpack.c.b16 %v2680, %v2679
          %v2696 = vpack.c.b16 %v2682, %v2681
          %v2697 = vpack.c.b16 %v2684, %v2683
          %v2698 = vpack.c.b16 %v2686, %v2685
          %v2699 = vpack.c.b16 %v2688, %v2687
          %v2700 = vpack.c.b16 %v2690, %v2689
          %v2701 = vpack.c.b16 %v2692, %v2691
          %v2702 = vpack.c.b16 %v2694, %v2693
          %2711 = vmatprep.subr.bf16.mxu0 0
          %2712 = vmatpush1.bf16.msra.mxu0 %v2702
          %2713 = vmatprep.subr.bf16.mxu0 0
          %2714 = vmatpush1.bf16.msra.mxu0 %v2701
          %2715 = vmatprep.subr.bf16.mxu0 0
          %2716 = vmatpush1.bf16.msra.mxu0 %v2700
          %2717 = vmatprep.subr.bf16.mxu0 0
          %2718 = vmatpush1.bf16.msra.mxu0 %v2699
          %2719 = vmatprep.subr.bf16.mxu0 0
          %2720 = vmatpush1.bf16.msra.mxu0 %v2698
          %2721 = vmatprep.subr.bf16.mxu0 0
          %2722 = vmatpush1.bf16.msra.mxu0 %v2697
          %2723 = vmatprep.subr.bf16.mxu0 0
          %2724 = vmatpush1.bf16.msra.mxu0 %v2696
          %2725 = vmatprep.subr.bf16.mxu0 0
          %2726 = vmatpush1.bf16.msra.mxu0 %v2695
          %2727 = vmatprep.subr.bf16.mxu0 0
          %2728 = vmatpush2.bf16.msra.mxu0 0
          %2729 = vmatprep.subr.bf16.mxu0 0
          %2730 = vmatpush2.bf16.msra.mxu0 0
          %2731 = vmatprep.subr.bf16.mxu0 0
          %2732 = vmatpush2.bf16.msra.mxu0 0
          %2733 = vmatprep.subr.bf16.mxu0 0
          %2734 = vmatpush2.bf16.msra.mxu0 0
          %2735 = vmatprep.subr.bf16.mxu0 0
          %2736 = vmatpush2.bf16.msra.mxu0 0
          %2737 = vmatprep.subr.bf16.mxu0 0
          %2738 = vmatpush2.bf16.msra.mxu0 0
          %2739 = vmatprep.subr.bf16.mxu0 0
          %2740 = vmatpush2.bf16.msra.mxu0 0
          %2741 = vmatprep.subr.bf16.mxu0 0
          %2742 = vmatpush2.bf16.msra.mxu0 0
          %2743 = vmatprep.mubr.bf16.mxu0 0
          %2744 = vmatmul.mubr.bf16.gmra.mxu0 %v2658
          %v2745 = vpop.f32.mrf.mxu0
          %v2746 = vadd.f32 %v2662, %v2745
          %v2747 = vpop.f32.mrf.mxu0
          %v2748 = vpop.f32.mrf.mxu0
          %v2749 = vpop.f32.mrf.mxu0
          %2750 = vdwg.mxu0
          %2751 = vst [vmem:[#allocation18] sm:$0x3] %v2746
        $region116: #{bert_class_forward.1} parent=75 // pred_fallthru
          _
        // Predicated region
        $region117: #{bert_class_forward.1} parent=75 // pred_check
          %p2752 = pneg %p369
        $region118: #{bert_class_forward.1} parent=75 // pred_check_branch
          %2754 = sbr.rel (%p2752) target = $region120
        $region119: #{bert_class_forward.1} parent=75 // pred_region
          %s2756 = ssub.s32 32, 32
          %2757 = vsyncadd [#allocation6], %s2756
          %s2759 = sshll.u32 [#allocation18], 4
          %s2760 = int_to_ptr.vmem [resolvable:$true] %s2759
          %2762 = dma.vmem_to_hbm [thread:$0]  %s2760, 32, %s14, [#allocation6]
        $region120: #{bert_class_forward.1} parent=75 // pred_fallthru
          _
        // Predicated region
        $region121: #{bert_class_forward.1} parent=75 // pred_check
          %p2763 = pneg %p369
        $region122: #{bert_class_forward.1} parent=75 // pred_check_branch
          %2765 = sbr.rel (%p2763) target = $region124
        $region123: #{bert_class_forward.1} parent=75 // pred_region
          %2766 = dma.done [#allocation6], 32
        $region124: #{bert_class_forward.1} parent=75 // pred_fallthru
          _
      $region76: #{bert_class_forward.1} parent=5 // pred_fallthru
        _
      %p2767 = scmp.le.s32.totalorder 2, %s32
      // Predicated region
      $region125: #{bert_class_forward.1} parent=5 // pred_check
        %p2768 = pneg %p2767
      $region126: #{bert_class_forward.1} parent=5 // pred_check_branch
        %2770 = sbr.rel (%p2768) target = $region128
      $region127: #{bert_class_forward.1} parent=5 // pred_region
        %s2771 = ssub.s32 %s32, 2
      $region128: #{bert_class_forward.1} parent=5 // pred_fallthru
        _
    $region6: #{bert_class_forward.1} parent=1 // loop_footer
      %s36 = sadd.s32 1, %s32
    $region7: #{bert_class_forward.1} parent=1 // loop_footer_branch
      %31 = sbr.rel target = $region3
    $region8: #{bert_class_forward.1} parent=1 // loop_exit
      _
    %2772 = vsyncpa [#allocation5], 1
    %s2773 = scalar_lea.sflag [#allocation5], 1
    %2774 = vsyncpa %s2773, 1
    %2775 = vsyncpa [#allocation8], 1
    %2776 = vsyncpa [#allocation11], 1
    %s2777 = scalar_lea.sflag [#allocation11], 1
    %2778 = vsyncpa %s2777, 1
    %2779 = vsyncpa [#allocation14], 1
    %s2780 = scalar_lea.sflag [#allocation14], 1
    %2781 = vsyncpa %s2780, 1
    %2782 = vsyncpa [#allocation17], 1
    %s2783 = scalar_lea.sflag [#allocation17], 1
    %2784 = vsyncpa %s2783, 1
    %2785 = vsyncpa [#allocation6], 1
    %s2786 = scalar_lea.sflag [#allocation6], 1
    %2787 = vsyncpa %s2786, 1

</llo_original>
